<compile_context>
chip_gen: v5e
topology: v5e:2x2
jax: 0.10.0
libtpu: 0.0.40
codegen_flags: <defaults>
</compile_context>

<pallas_src>
import collections
import functools

import jax
import jax.numpy as jnp
from jax.experimental import pallas as pl
from jax.experimental.pallas import tpu as pltpu

MultiGraph = collections.namedtuple("Graph", ["node_features", "edge_sets"])
EdgeSet = collections.namedtuple("EdgeSet", ["name", "features", "senders", "receivers"])

LATENT_SIZE = 32     # make_mlp output_size; features are stored at this real width
LN_EPS = 1e-5        # torch.nn.LayerNorm default

MLPParams = collections.namedtuple("MLPParams", ["w1", "w2", "w3", "bias_pack", "raw"])


def _round_up(x, m):
    return ((x + m - 1) // m) * m


def _num_tensorcores():
    """Best-effort TensorCore count per device (2 on v7x, else 1)."""
    try:
        kind = (jax.devices()[0].device_kind or "").lower()
    except Exception:
        return 1
    return 2 if ("v7" in kind or "7x" in kind) else 1


def _pick_row_tile(n_rows, io_dtype, min_grid_steps):
    """Dtype-aware row tile; only split into >=2 grid steps on multi-TC parts."""
    itemsize = jnp.dtype(io_dtype).itemsize
    sub = 16 if itemsize < 4 else 8          # sublane packing for bf16 vs f32
    cap = 2048 if itemsize < 4 else 1024     # large tiles amortize grid overhead
    tile = min(cap, _round_up(n_rows, sub))
    if min_grid_steps > 1:
        # v7x: give both TensorCores a row block via the "parallel" grid axis.
        tile = min(tile, _round_up(pl.cdiv(n_rows, min_grid_steps), sub))
    return max(tile, sub)


# ---------------------------------------------------------------------------
# Pallas kernel: split-w1 Linear -> ReLU -> Linear -> ReLU -> Linear -> LayerNorm
# (optionally + residual).  All arrays are at the real `latent` width (32);
# there is no lane padding, so LayerNorm needs no column mask.
# ---------------------------------------------------------------------------
def _mlp_ln_kernel(*refs, num_segments, latent, residual_segment):
    x_refs = refs[:num_segments]
    w1_ref, w2_ref, w3_ref, bias_ref, o_ref = refs[num_segments:]

    bias = bias_ref[...]                 # (8, latent) f32: b1, b2, b3, gamma, beta
    b1 = bias[0:1, :]
    b2 = bias[1:2, :]
    b3 = bias[2:3, :]
    gamma = bias[3:4, :]
    beta = bias[4:5, :]

    # Layer 1 as a sum of per-segment matmuls (no concatenated input).
    acc = jnp.dot(x_refs[0][...], w1_ref[0:latent, :],
                  preferred_element_type=jnp.float32)
    for s in range(1, num_segments):
        acc += jnp.dot(x_refs[s][...], w1_ref[s * latent:(s + 1) * latent, :],
                       preferred_element_type=jnp.float32)
    h = jnp.maximum(acc + b1, 0.0).astype(w2_ref.dtype)
    h = jnp.maximum(jnp.dot(h, w2_ref[...], preferred_element_type=jnp.float32) + b2,
                    0.0).astype(w3_ref.dtype)
    y = jnp.dot(h, w3_ref[...], preferred_element_type=jnp.float32) + b3

    # LayerNorm over the full (real) latent width -- no padding, no mask.
    mean = jnp.mean(y, axis=-1, keepdims=True)
    diff = y - mean
    var = jnp.mean(diff * diff, axis=-1, keepdims=True)
    out = diff * jax.lax.rsqrt(var + LN_EPS) * gamma + beta

    if residual_segment is not None:
        # GraphNetBlock residual fused in (the residual operand is already an
        # input segment, so this is free).
        out = out + x_refs[residual_segment][...].astype(jnp.float32)

    # Note: rows of a ragged last block beyond n_rows operate on undefined VMEM
    # (may be NaN after rsqrt) but their stores are masked/discarded by Pallas.
    o_ref[...] = out.astype(o_ref.dtype)


def mlp_layernorm(xs, params, *, io_dtype=jnp.float32, residual_segment=None,
                  min_grid_steps=1):
    """3-layer MLP + LayerNorm over row-aligned segment inputs xs (each [N, 32])."""
    num_segments = len(xs)
    n_rows = xs[0].shape[0]
    latent = params.w2.shape[0]
    assert params.w1.shape == (num_segments * latent, latent)

    tile = _pick_row_tile(n_rows, io_dtype, min_grid_steps)
    grid = (pl.cdiv(n_rows, tile),)

    xs = [x.astype(io_dtype) for x in xs]
    w1 = params.w1.astype(io_dtype)
    w2 = params.w2.astype(io_dtype)
    w3 = params.w3.astype(io_dtype)
    # bias/gamma/beta stay f32 (applied on the f32 accumulator).

    x_spec = pl.BlockSpec((tile, latent), lambda i: (i, 0))
    # Weights/biases are grid-invariant; at 32 wide they total ~13 KiB so the
    # default double-buffering is negligible (no pl.Buffered tuning needed).
    in_specs = [x_spec] * num_segments + [
        pl.BlockSpec((num_segments * latent, latent), lambda i: (0, 0)),
        pl.BlockSpec((latent, latent), lambda i: (0, 0)),
        pl.BlockSpec((latent, latent), lambda i: (0, 0)),
        pl.BlockSpec((8, latent), lambda i: (0, 0)),
    ]
    kernel = functools.partial(_mlp_ln_kernel, num_segments=num_segments,
                               latent=latent, residual_segment=residual_segment)
    return pl.pallas_call(
        kernel,
        out_shape=jax.ShapeDtypeStruct((n_rows, latent), io_dtype),
        grid_spec=pltpu.PrefetchScalarGridSpec(
            num_scalar_prefetch=0,
            grid=grid,
            in_specs=in_specs,
            out_specs=pl.BlockSpec((tile, latent), lambda i: (i, 0)),
        ),
        compiler_params=pltpu.CompilerParams(
            dimension_semantics=("parallel",)),
    )(*xs, w1, w2, w3, params.bias_pack)


# ---------------------------------------------------------------------------
# Parameter construction (torch nn.Linear-style init + LayerNorm affine).
# Weights are kept at their real width; no lane padding anywhere.
# ---------------------------------------------------------------------------
def make_mlp_params(key, num_segments, latent=LATENT_SIZE):
    in_real = num_segments * latent
    ks = jax.random.split(key, 6)

    def linear(kw, kb, fan_in, fan_out):
        bound = 1.0 / (fan_in ** 0.5)
        w = jax.random.uniform(kw, (fan_in, fan_out), jnp.float32, -bound, bound)
        b = jax.random.uniform(kb, (1, fan_out), jnp.float32, -bound, bound)
        return w, b

    w1, b1 = linear(ks[0], ks[1], in_real, latent)
    w2, b2 = linear(ks[2], ks[3], latent, latent)
    w3, b3 = linear(ks[4], ks[5], latent, latent)

    bias_pack = jnp.zeros((8, latent), jnp.float32)
    bias_pack = bias_pack.at[0].set(b1[0])
    bias_pack = bias_pack.at[1].set(b2[0])
    bias_pack = bias_pack.at[2].set(b3[0])
    bias_pack = bias_pack.at[3].set(1.0)    # LayerNorm gamma
    # row 4 = LayerNorm beta (0); rows 5-7 pad the pack to an (8, latent) tile.

    raw = (w1, b1, w2, b2, w3, b3)
    return MLPParams(w1, w2, w3, bias_pack, raw)


def _segment_aggregate(data, segment_ids, num_segments, op):
    if op == "sum":
        return jax.ops.segment_sum(data, segment_ids, num_segments=num_segments)
    if op == "mean":
        total = jax.ops.segment_sum(data, segment_ids, num_segments=num_segments)
        count = jax.ops.segment_sum(jnp.ones((data.shape[0], 1), data.dtype),
                                    segment_ids, num_segments=num_segments)
        return total / jnp.maximum(count, 1.0)
    # TODO(synk): max/min aggregators (torch_scatter scatter_max/min) not implemented.
    raise NotImplementedError(f"aggregator {op!r} not supported")


# ---------------------------------------------------------------------------
# Processor = message_passing_steps x GraphNetBlock (Pallas-backed MLPs).
# ---------------------------------------------------------------------------
class Processor:

    def __init__(self, key, latent_size, message_passing_steps, num_edge_sets,
                 message_passing_aggregator="sum", attention=False,
                 stochastic_message_passing_used=False):
        if attention:
            raise NotImplementedError("attention=True path not implemented")
        if stochastic_message_passing_used:
            raise NotImplementedError("stochastic message passing not implemented")
        self.latent_size = latent_size
        self.aggregator = message_passing_aggregator
        self.min_grid_steps = _num_tensorcores()
        self.blocks = []
        keys = jax.random.split(key, 2 * message_passing_steps)
        for step in range(message_passing_steps):
            edge_params = make_mlp_params(keys[2 * step], num_segments=3,
                                          latent=latent_size)
            node_params = make_mlp_params(keys[2 * step + 1],
                                          num_segments=1 + num_edge_sets,
                                          latent=latent_size)
            self.blocks.append((edge_params, node_params))
        self._forward = jax.jit(self._forward_impl, static_argnames=("io_dtype",))

    def _forward_impl(self, node_features, edge_features, senders, receivers,
                      io_dtype):
        num_nodes = node_features.shape[0]
        sizes = [f.shape[0] for f in edge_features]
        offsets = [0]
        for sz in sizes:
            offsets.append(offsets[-1] + sz)

        # All edge sets of a block share the same edge_model -> keep edges
        # row-stacked for the whole processor (one edge pallas_call / block);
        # gather indices are concatenated once, outside the block loop.
        all_snd = jnp.concatenate(senders) if len(senders) > 1 else senders[0]
        all_rcv = jnp.concatenate(receivers) if len(receivers) > 1 else receivers[0]
        edge_all = (jnp.concatenate(edge_features, axis=0)
                    if len(edge_features) > 1 else edge_features[0])

        node_features = node_features.astype(io_dtype)
        edge_all = edge_all.astype(io_dtype)

        for edge_params, node_params in self.blocks:
            # ---- edge update: gathered operands fed as SEPARATE kernel inputs
            #      (no feature-axis concat); w1 is split per segment in-kernel.
            # TODO(synk): fuse this gather into the kernel (node table in VMEM).
            xs = jnp.take(node_features, all_snd, axis=0)
            xr = jnp.take(node_features, all_rcv, axis=0)
            new_edge = mlp_layernorm([xs, xr, edge_all], edge_params,
                                     io_dtype=io_dtype,
                                     min_grid_steps=self.min_grid_steps)

            # ---- node update: node features + one aggregate per edge set as
            #      separate inputs; node residual fused into the kernel.
            node_in = [node_features]
            for i, rcv in enumerate(receivers):
                seg = new_edge[offsets[i]:offsets[i + 1]]
                node_in.append(_segment_aggregate(seg, rcv, num_nodes,
                                                  self.aggregator))
            node_features = mlp_layernorm(node_in, node_params,
                                          io_dtype=io_dtype,
                                          residual_segment=0,
                                          min_grid_steps=self.min_grid_steps)

            # ---- edge residual (the aggregation above must see the
            #      PRE-residual edge features, so this add stays outside).
            edge_all = new_edge + edge_all

        new_edge_features = tuple(edge_all[offsets[i]:offsets[i + 1]]
                                  for i in range(len(edge_features)))
        return node_features, new_edge_features

    def __call__(self, graph, io_dtype=jnp.float32):
        feats = tuple(es.features for es in graph.edge_sets)
        sends = tuple(es.senders for es in graph.edge_sets)
        recvs = tuple(es.receivers for es in graph.edge_sets)
        new_node, new_feats = self._forward(graph.node_features, feats, sends,
                                            recvs, io_dtype=io_dtype)
        new_edge_sets = [es._replace(features=f)
                         for es, f in zip(graph.edge_sets, new_feats)]
        return MultiGraph(new_node, new_edge_sets)


# ---------------------------------------------------------------------------
# Plain-JAX f32 reference for correctness checking.
# ---------------------------------------------------------------------------
def _ref_mlp(x, raw):
    w1, b1, w2, b2, w3, b3 = raw
    hp = jax.lax.Precision.HIGHEST
    h = jnp.maximum(jnp.dot(x, w1, precision=hp) + b1, 0.0)
    h = jnp.maximum(jnp.dot(h, w2, precision=hp) + b2, 0.0)
    y = jnp.dot(h, w3, precision=hp) + b3
    mean = jnp.mean(y, axis=-1, keepdims=True)
    var = jnp.mean(jnp.square(y - mean), axis=-1, keepdims=True)
    return (y - mean) * jax.lax.rsqrt(var + LN_EPS)   # gamma=1, beta=0


def _ref_processor(blocks, node_f, edge_feats, senders, receivers):
    num_nodes = node_f.shape[0]
    for edge_params, node_params in blocks:
        new_ef = []
        for f, s, r in zip(edge_feats, senders, receivers):
            inp = jnp.concatenate([node_f[s], node_f[r], f], axis=-1)
            new_ef.append(_ref_mlp(inp, edge_params.raw))
        feats = [node_f]
        for nef, r in zip(new_ef, receivers):
            feats.append(jax.ops.segment_sum(nef, r, num_segments=num_nodes))
        new_node = _ref_mlp(jnp.concatenate(feats, axis=-1), node_params.raw)
        node_f = new_node + node_f
        edge_feats = [nef + old for nef, old in zip(new_ef, edge_feats)]
    return node_f, edge_feats


if __name__ == "__main__":
    key = jax.random.PRNGKey(0)
    k_proc, k_nodes, k_e0, k_e1, k_idx = jax.random.split(key, 5)

    num_nodes = 128
    latent = LATENT_SIZE
    edge_counts = (256, 192)

    # Latent graph (as produced by an encoder): real width = latent = 32.
    node_lat = jax.random.normal(k_nodes, (num_nodes, latent), jnp.float32)
    edge_lats = [jax.random.normal(k, (n, latent), jnp.float32)
                 for k, n in zip((k_e0, k_e1), edge_counts)]
    idx_keys = jax.random.split(k_idx, 2 * len(edge_counts))
    senders = [jax.random.randint(idx_keys[2 * i], (n,), 0, num_nodes, jnp.int32)
               for i, n in enumerate(edge_counts)]
    receivers = [jax.random.randint(idx_keys[2 * i + 1], (n,), 0, num_nodes, jnp.int32)
                 for i, n in enumerate(edge_counts)]

    edge_sets = [EdgeSet(name=f"edges_{i}", features=edge_lats[i],
                         senders=senders[i], receivers=receivers[i])
                 for i in range(len(edge_counts))]
    graph = MultiGraph(node_lat, edge_sets)

    processor = Processor(k_proc, latent_size=latent, message_passing_steps=2,
                          num_edge_sets=len(edge_counts),
                          message_passing_aggregator="sum")

    # ---- f32 path: correctness check against the plain-JAX reference ----
    out = processor(graph)
    jax.block_until_ready(out.node_features)
    for es in out.edge_sets:
        jax.block_until_ready(es.features)

    ref_node, ref_edges = _ref_processor(processor.blocks, node_lat,
                                         list(edge_lats), senders, receivers)
    assert out.node_features.shape == (num_nodes, latent)
    assert out.node_features.dtype == jnp.float32
    assert bool(jnp.allclose(out.node_features, ref_node, atol=2e-3, rtol=2e-3))
    for es_out, ref_e, n_e in zip(out.edge_sets, ref_edges, edge_counts):
        assert es_out.features.shape == (n_e, latent)
        assert bool(jnp.allclose(es_out.features, ref_e, atol=2e-3, rtol=2e-3))

    # ---- bf16 end-to-end path (v6e/v7x fast path): bf16 features/weights,
    #      f32 MXU accumulation + f32 LayerNorm stats; looser tolerance. ----
    graph_bf16 = MultiGraph(
        node_lat.astype(jnp.bfloat16),
        [es._replace(features=es.features.astype(jnp.bfloat16))
         for es in edge_sets])
    out_bf16 = processor(graph_bf16, io_dtype=jnp.bfloat16)
    jax.block_until_ready(out_bf16.node_features)
    node_bf16 = out_bf16.node_features.astype(jnp.float32)
    assert out_bf16.node_features.dtype == jnp.bfloat16
    assert bool(jnp.all(jnp.isfinite(node_bf16)))
    max_err = float(jnp.max(jnp.abs(node_bf16 - ref_node)))
    assert max_err < 0.5, f"bf16 path deviates too much from f32 ref: {max_err}"

    print("KERNEL_OK")
</pallas_src>

<mosaic_0001>
module attributes {stable_mosaic.version = 11 : i64} {
  func.func @_mlp_ln_kernel(%arg0: i32, %arg1: memref<448x32xf32, #tpu.memory_space<vmem>>, %arg2: memref<448x32xf32, #tpu.memory_space<vmem>>, %arg3: memref<448x32xf32, #tpu.memory_space<vmem>>, %arg4: memref<96x32xf32, #tpu.memory_space<vmem>>, %arg5: memref<32x32xf32, #tpu.memory_space<vmem>>, %arg6: memref<32x32xf32, #tpu.memory_space<vmem>>, %arg7: memref<8x32xf32, #tpu.memory_space<vmem>>, %arg8: memref<448x32xf32, #tpu.memory_space<vmem>>) attributes {dimension_semantics = [#tpu.dimension_semantics<parallel>], iteration_bounds = array<i64: 1>, scalar_prefetch = 0 : i64, scratch_operands = 0 : i64, tpu.core_type = #tpu.core_type<tc>, window_params = [{transform_indices = @transform_0, window_bounds = array<i64: 448, 32>}, {transform_indices = @transform_1, window_bounds = array<i64: 448, 32>}, {transform_indices = @transform_2, window_bounds = array<i64: 448, 32>}, {pipeline_mode = #tpu.pipeline_mode<synchronous>, transform_indices = @transform_3, window_bounds = array<i64: 96, 32>}, {pipeline_mode = #tpu.pipeline_mode<synchronous>, transform_indices = @transform_4, window_bounds = array<i64: 32, 32>}, {pipeline_mode = #tpu.pipeline_mode<synchronous>, transform_indices = @transform_5, window_bounds = array<i64: 32, 32>}, {pipeline_mode = #tpu.pipeline_mode<synchronous>, transform_indices = @transform_6, window_bounds = array<i64: 8, 32>}, {transform_indices = @transform_7, window_bounds = array<i64: 448, 32>}]} {
    %c0 = arith.constant 0 : index
    %c0_0 = arith.constant 0 : index
    %0 = vector.load %arg7[%c0, %c0_0] : memref<8x32xf32, #tpu.memory_space<vmem>>, vector<8x32xf32>
    %1 = vector.extract_strided_slice %0 {offsets = [0, 0], sizes = [1, 32], strides = [1, 1]} : vector<8x32xf32> to vector<1x32xf32>
    %2 = vector.extract_strided_slice %0 {offsets = [1, 0], sizes = [1, 32], strides = [1, 1]} : vector<8x32xf32> to vector<1x32xf32>
    %3 = vector.extract_strided_slice %0 {offsets = [2, 0], sizes = [1, 32], strides = [1, 1]} : vector<8x32xf32> to vector<1x32xf32>
    %4 = vector.extract_strided_slice %0 {offsets = [3, 0], sizes = [1, 32], strides = [1, 1]} : vector<8x32xf32> to vector<1x32xf32>
    %5 = vector.extract_strided_slice %0 {offsets = [4, 0], sizes = [1, 32], strides = [1, 1]} : vector<8x32xf32> to vector<1x32xf32>
    %c0_1 = arith.constant 0 : index
    %c0_2 = arith.constant 0 : index
    %6 = vector.load %arg1[%c0_1, %c0_2] : memref<448x32xf32, #tpu.memory_space<vmem>>, vector<448x32xf32>
    %c0_3 = arith.constant 0 : index
    %c0_4 = arith.constant 0 : index
    %7 = vector.load %arg4[%c0_3, %c0_4] : memref<96x32xf32, #tpu.memory_space<vmem>>, vector<32x32xf32>
    %cst = arith.constant dense<0.000000e+00> : vector<448x32xf32>
    %8 = tpu.matmul %6, %7, %cst {dimension_numbers = #tpu.dot_dimension_numbers<[1], [0], [0], [1], [0, 0, 1, 1], [], []>} : vector<448x32xf32>, vector<32x32xf32>, vector<448x32xf32> -> vector<448x32xf32>
    %c0_5 = arith.constant 0 : index
    %c0_6 = arith.constant 0 : index
    %9 = vector.load %arg2[%c0_5, %c0_6] : memref<448x32xf32, #tpu.memory_space<vmem>>, vector<448x32xf32>
    %c32 = arith.constant 32 : index
    %c0_7 = arith.constant 0 : index
    %10 = vector.load %arg4[%c32, %c0_7] : memref<96x32xf32, #tpu.memory_space<vmem>>, vector<32x32xf32>
    %cst_8 = arith.constant dense<0.000000e+00> : vector<448x32xf32>
    %11 = tpu.matmul %9, %10, %cst_8 {dimension_numbers = #tpu.dot_dimension_numbers<[1], [0], [0], [1], [0, 0, 1, 1], [], []>} : vector<448x32xf32>, vector<32x32xf32>, vector<448x32xf32> -> vector<448x32xf32>
    %12 = arith.addf %8, %11 : vector<448x32xf32>
    %c0_9 = arith.constant 0 : index
    %c0_10 = arith.constant 0 : index
    %13 = vector.load %arg3[%c0_9, %c0_10] : memref<448x32xf32, #tpu.memory_space<vmem>>, vector<448x32xf32>
    %c64 = arith.constant 64 : index
    %c0_11 = arith.constant 0 : index
    %14 = vector.load %arg4[%c64, %c0_11] : memref<96x32xf32, #tpu.memory_space<vmem>>, vector<32x32xf32>
    %cst_12 = arith.constant dense<0.000000e+00> : vector<448x32xf32>
    %15 = tpu.matmul %13, %14, %cst_12 {dimension_numbers = #tpu.dot_dimension_numbers<[1], [0], [0], [1], [0, 0, 1, 1], [], []>} : vector<448x32xf32>, vector<32x32xf32>, vector<448x32xf32> -> vector<448x32xf32>
    %16 = arith.addf %12, %15 : vector<448x32xf32>
    %17 = vector.broadcast %1 : vector<1x32xf32> to vector<448x32xf32>
    %18 = arith.addf %16, %17 : vector<448x32xf32>
    %cst_13 = arith.constant 0.000000e+00 : f32
    %19 = vector.broadcast %cst_13 : f32 to vector<448x32xf32>
    %20 = arith.maximumf %18, %19 : vector<448x32xf32>
    %c0_14 = arith.constant 0 : index
    %c0_15 = arith.constant 0 : index
    %21 = vector.load %arg5[%c0_14, %c0_15] : memref<32x32xf32, #tpu.memory_space<vmem>>, vector<32x32xf32>
    %cst_16 = arith.constant dense<0.000000e+00> : vector<448x32xf32>
    %22 = tpu.matmul %20, %21, %cst_16 {dimension_numbers = #tpu.dot_dimension_numbers<[1], [0], [0], [1], [0, 0, 1, 1], [], []>} : vector<448x32xf32>, vector<32x32xf32>, vector<448x32xf32> -> vector<448x32xf32>
    %23 = vector.broadcast %2 : vector<1x32xf32> to vector<448x32xf32>
    %24 = arith.addf %22, %23 : vector<448x32xf32>
    %cst_17 = arith.constant 0.000000e+00 : f32
    %25 = vector.broadcast %cst_17 : f32 to vector<448x32xf32>
    %26 = arith.maximumf %24, %25 : vector<448x32xf32>
    %c0_18 = arith.constant 0 : index
    %c0_19 = arith.constant 0 : index
    %27 = vector.load %arg6[%c0_18, %c0_19] : memref<32x32xf32, #tpu.memory_space<vmem>>, vector<32x32xf32>
    %cst_20 = arith.constant dense<0.000000e+00> : vector<448x32xf32>
    %28 = tpu.matmul %26, %27, %cst_20 {dimension_numbers = #tpu.dot_dimension_numbers<[1], [0], [0], [1], [0, 0, 1, 1], [], []>} : vector<448x32xf32>, vector<32x32xf32>, vector<448x32xf32> -> vector<448x32xf32>
    %29 = vector.broadcast %3 : vector<1x32xf32> to vector<448x32xf32>
    %30 = arith.addf %28, %29 : vector<448x32xf32>
    %cst_21 = arith.constant dense<0.000000e+00> : vector<448xf32>
    %31 = vector.multi_reduction <add>, %30, %cst_21 [1] : vector<448x32xf32> to vector<448xf32>
    %32 = vector.shape_cast %31 : vector<448xf32> to vector<448x1xf32>
    %cst_22 = arith.constant 3.200000e+01 : f32
    %33 = vector.broadcast %cst_22 : f32 to vector<448x1xf32>
    %34 = arith.divf %32, %33 : vector<448x1xf32>
    %35 = vector.broadcast %34 : vector<448x1xf32> to vector<448x32xf32>
    %36 = arith.subf %30, %35 : vector<448x32xf32>
    %37 = arith.mulf %36, %36 : vector<448x32xf32>
    %cst_23 = arith.constant dense<0.000000e+00> : vector<448xf32>
    %38 = vector.multi_reduction <add>, %37, %cst_23 [1] : vector<448x32xf32> to vector<448xf32>
    %39 = vector.shape_cast %38 : vector<448xf32> to vector<448x1xf32>
    %cst_24 = arith.constant 3.200000e+01 : f32
    %40 = vector.broadcast %cst_24 : f32 to vector<448x1xf32>
    %41 = arith.divf %39, %40 : vector<448x1xf32>
    %cst_25 = arith.constant 9.99999974E-6 : f32
    %42 = vector.broadcast %cst_25 : f32 to vector<448x1xf32>
    %43 = arith.addf %41, %42 : vector<448x1xf32>
    %44 = math.rsqrt %43 : vector<448x1xf32>
    %45 = vector.broadcast %44 : vector<448x1xf32> to vector<448x32xf32>
    %46 = arith.mulf %36, %45 : vector<448x32xf32>
    %47 = vector.broadcast %4 : vector<1x32xf32> to vector<448x32xf32>
    %48 = arith.mulf %46, %47 : vector<448x32xf32>
    %49 = vector.broadcast %5 : vector<1x32xf32> to vector<448x32xf32>
    %50 = arith.addf %48, %49 : vector<448x32xf32>
    %c0_26 = arith.constant 0 : index
    %c0_27 = arith.constant 0 : index
    %51 = vector.load %arg8[%c0_26, %c0_27] : memref<448x32xf32, #tpu.memory_space<vmem>>, vector<448x32xf32>
    tpu.vector_store %arg8[%c0_26, %c0_27], %50 {strides = array<i32>} : memref<448x32xf32, #tpu.memory_space<vmem>>, vector<448x32xf32>,
    return
  }
  func.func @transform_0(%arg0: i32) -> (i32, i32) {
    %c0_i32 = arith.constant 0 : i32
    %c0_i32_0 = arith.constant 0 : i32
    return %arg0, %c0_i32 : i32, i32
  }
  func.func @transform_1(%arg0: i32) -> (i32, i32) {
    %c0_i32 = arith.constant 0 : i32
    %c0_i32_0 = arith.constant 0 : i32
    return %arg0, %c0_i32 : i32, i32
  }
  func.func @transform_2(%arg0: i32) -> (i32, i32) {
    %c0_i32 = arith.constant 0 : i32
    %c0_i32_0 = arith.constant 0 : i32
    return %arg0, %c0_i32 : i32, i32
  }
  func.func @transform_3(%arg0: i32) -> (i32, i32) {
    %c0_i32 = arith.constant 0 : i32
    %c0_i32_0 = arith.constant 0 : i32
    %c0_i32_1 = arith.constant 0 : i32
    return %c0_i32, %c0_i32_0 : i32, i32
  }
  func.func @transform_4(%arg0: i32) -> (i32, i32) {
    %c0_i32 = arith.constant 0 : i32
    %c0_i32_0 = arith.constant 0 : i32
    %c0_i32_1 = arith.constant 0 : i32
    return %c0_i32, %c0_i32_0 : i32, i32
  }
  func.func @transform_5(%arg0: i32) -> (i32, i32) {
    %c0_i32 = arith.constant 0 : i32
    %c0_i32_0 = arith.constant 0 : i32
    %c0_i32_1 = arith.constant 0 : i32
    return %c0_i32, %c0_i32_0 : i32, i32
  }
  func.func @transform_6(%arg0: i32) -> (i32, i32) {
    %c0_i32 = arith.constant 0 : i32
    %c0_i32_0 = arith.constant 0 : i32
    %c0_i32_1 = arith.constant 0 : i32
    return %c0_i32, %c0_i32_0 : i32, i32
  }
  func.func @transform_7(%arg0: i32) -> (i32, i32) {
    %c0_i32 = arith.constant 0 : i32
    %c0_i32_0 = arith.constant 0 : i32
    return %arg0, %c0_i32 : i32, i32
  }
}

module attributes {stable_mosaic.version = 11 : i64} {
  func.func @_mlp_ln_kernel(%arg0: i32, %arg1: memref<128x32xf32, #tpu.memory_space<vmem>>, %arg2: memref<128x32xf32, #tpu.memory_space<vmem>>, %arg3: memref<128x32xf32, #tpu.memory_space<vmem>>, %arg4: memref<96x32xf32, #tpu.memory_space<vmem>>, %arg5: memref<32x32xf32, #tpu.memory_space<vmem>>, %arg6: memref<32x32xf32, #tpu.memory_space<vmem>>, %arg7: memref<8x32xf32, #tpu.memory_space<vmem>>, %arg8: memref<128x32xf32, #tpu.memory_space<vmem>>) attributes {dimension_semantics = [#tpu.dimension_semantics<parallel>], iteration_bounds = array<i64: 1>, scalar_prefetch = 0 : i64, scratch_operands = 0 : i64, tpu.core_type = #tpu.core_type<tc>, window_params = [{transform_indices = @transform_0, window_bounds = array<i64: 128, 32>}, {transform_indices = @transform_1, window_bounds = array<i64: 128, 32>}, {transform_indices = @transform_2, window_bounds = array<i64: 128, 32>}, {pipeline_mode = #tpu.pipeline_mode<synchronous>, transform_indices = @transform_3, window_bounds = array<i64: 96, 32>}, {pipeline_mode = #tpu.pipeline_mode<synchronous>, transform_indices = @transform_4, window_bounds = array<i64: 32, 32>}, {pipeline_mode = #tpu.pipeline_mode<synchronous>, transform_indices = @transform_5, window_bounds = array<i64: 32, 32>}, {pipeline_mode = #tpu.pipeline_mode<synchronous>, transform_indices = @transform_6, window_bounds = array<i64: 8, 32>}, {transform_indices = @transform_7, window_bounds = array<i64: 128, 32>}]} {
    %c0 = arith.constant 0 : index
    %c0_0 = arith.constant 0 : index
    %0 = vector.load %arg7[%c0, %c0_0] : memref<8x32xf32, #tpu.memory_space<vmem>>, vector<8x32xf32>
    %1 = vector.extract_strided_slice %0 {offsets = [0, 0], sizes = [1, 32], strides = [1, 1]} : vector<8x32xf32> to vector<1x32xf32>
    %2 = vector.extract_strided_slice %0 {offsets = [1, 0], sizes = [1, 32], strides = [1, 1]} : vector<8x32xf32> to vector<1x32xf32>
    %3 = vector.extract_strided_slice %0 {offsets = [2, 0], sizes = [1, 32], strides = [1, 1]} : vector<8x32xf32> to vector<1x32xf32>
    %4 = vector.extract_strided_slice %0 {offsets = [3, 0], sizes = [1, 32], strides = [1, 1]} : vector<8x32xf32> to vector<1x32xf32>
    %5 = vector.extract_strided_slice %0 {offsets = [4, 0], sizes = [1, 32], strides = [1, 1]} : vector<8x32xf32> to vector<1x32xf32>
    %c0_1 = arith.constant 0 : index
    %c0_2 = arith.constant 0 : index
    %6 = vector.load %arg1[%c0_1, %c0_2] : memref<128x32xf32, #tpu.memory_space<vmem>>, vector<128x32xf32>
    %c0_3 = arith.constant 0 : index
    %c0_4 = arith.constant 0 : index
    %7 = vector.load %arg4[%c0_3, %c0_4] : memref<96x32xf32, #tpu.memory_space<vmem>>, vector<32x32xf32>
    %cst = arith.constant dense<0.000000e+00> : vector<128x32xf32>
    %8 = tpu.matmul %6, %7, %cst {dimension_numbers = #tpu.dot_dimension_numbers<[1], [0], [0], [1], [0, 0, 1, 1], [], []>} : vector<128x32xf32>, vector<32x32xf32>, vector<128x32xf32> -> vector<128x32xf32>
    %c0_5 = arith.constant 0 : index
    %c0_6 = arith.constant 0 : index
    %9 = vector.load %arg2[%c0_5, %c0_6] : memref<128x32xf32, #tpu.memory_space<vmem>>, vector<128x32xf32>
    %c32 = arith.constant 32 : index
    %c0_7 = arith.constant 0 : index
    %10 = vector.load %arg4[%c32, %c0_7] : memref<96x32xf32, #tpu.memory_space<vmem>>, vector<32x32xf32>
    %cst_8 = arith.constant dense<0.000000e+00> : vector<128x32xf32>
    %11 = tpu.matmul %9, %10, %cst_8 {dimension_numbers = #tpu.dot_dimension_numbers<[1], [0], [0], [1], [0, 0, 1, 1], [], []>} : vector<128x32xf32>, vector<32x32xf32>, vector<128x32xf32> -> vector<128x32xf32>
    %12 = arith.addf %8, %11 : vector<128x32xf32>
    %c0_9 = arith.constant 0 : index
    %c0_10 = arith.constant 0 : index
    %13 = vector.load %arg3[%c0_9, %c0_10] : memref<128x32xf32, #tpu.memory_space<vmem>>, vector<128x32xf32>
    %c64 = arith.constant 64 : index
    %c0_11 = arith.constant 0 : index
    %14 = vector.load %arg4[%c64, %c0_11] : memref<96x32xf32, #tpu.memory_space<vmem>>, vector<32x32xf32>
    %cst_12 = arith.constant dense<0.000000e+00> : vector<128x32xf32>
    %15 = tpu.matmul %13, %14, %cst_12 {dimension_numbers = #tpu.dot_dimension_numbers<[1], [0], [0], [1], [0, 0, 1, 1], [], []>} : vector<128x32xf32>, vector<32x32xf32>, vector<128x32xf32> -> vector<128x32xf32>
    %16 = arith.addf %12, %15 : vector<128x32xf32>
    %17 = vector.broadcast %1 : vector<1x32xf32> to vector<128x32xf32>
    %18 = arith.addf %16, %17 : vector<128x32xf32>
    %cst_13 = arith.constant 0.000000e+00 : f32
    %19 = vector.broadcast %cst_13 : f32 to vector<128x32xf32>
    %20 = arith.maximumf %18, %19 : vector<128x32xf32>
    %c0_14 = arith.constant 0 : index
    %c0_15 = arith.constant 0 : index
    %21 = vector.load %arg5[%c0_14, %c0_15] : memref<32x32xf32, #tpu.memory_space<vmem>>, vector<32x32xf32>
    %cst_16 = arith.constant dense<0.000000e+00> : vector<128x32xf32>
    %22 = tpu.matmul %20, %21, %cst_16 {dimension_numbers = #tpu.dot_dimension_numbers<[1], [0], [0], [1], [0, 0, 1, 1], [], []>} : vector<128x32xf32>, vector<32x32xf32>, vector<128x32xf32> -> vector<128x32xf32>
    %23 = vector.broadcast %2 : vector<1x32xf32> to vector<128x32xf32>
    %24 = arith.addf %22, %23 : vector<128x32xf32>
    %cst_17 = arith.constant 0.000000e+00 : f32
    %25 = vector.broadcast %cst_17 : f32 to vector<128x32xf32>
    %26 = arith.maximumf %24, %25 : vector<128x32xf32>
    %c0_18 = arith.constant 0 : index
    %c0_19 = arith.constant 0 : index
    %27 = vector.load %arg6[%c0_18, %c0_19] : memref<32x32xf32, #tpu.memory_space<vmem>>, vector<32x32xf32>
    %cst_20 = arith.constant dense<0.000000e+00> : vector<128x32xf32>
    %28 = tpu.matmul %26, %27, %cst_20 {dimension_numbers = #tpu.dot_dimension_numbers<[1], [0], [0], [1], [0, 0, 1, 1], [], []>} : vector<128x32xf32>, vector<32x32xf32>, vector<128x32xf32> -> vector<128x32xf32>
    %29 = vector.broadcast %3 : vector<1x32xf32> to vector<128x32xf32>
    %30 = arith.addf %28, %29 : vector<128x32xf32>
    %cst_21 = arith.constant dense<0.000000e+00> : vector<128xf32>
    %31 = vector.multi_reduction <add>, %30, %cst_21 [1] : vector<128x32xf32> to vector<128xf32>
    %32 = vector.shape_cast %31 : vector<128xf32> to vector<128x1xf32>
    %cst_22 = arith.constant 3.200000e+01 : f32
    %33 = vector.broadcast %cst_22 : f32 to vector<128x1xf32>
    %34 = arith.divf %32, %33 : vector<128x1xf32>
    %35 = vector.broadcast %34 : vector<128x1xf32> to vector<128x32xf32>
    %36 = arith.subf %30, %35 : vector<128x32xf32>
    %37 = arith.mulf %36, %36 : vector<128x32xf32>
    %cst_23 = arith.constant dense<0.000000e+00> : vector<128xf32>
    %38 = vector.multi_reduction <add>, %37, %cst_23 [1] : vector<128x32xf32> to vector<128xf32>
    %39 = vector.shape_cast %38 : vector<128xf32> to vector<128x1xf32>
    %cst_24 = arith.constant 3.200000e+01 : f32
    %40 = vector.broadcast %cst_24 : f32 to vector<128x1xf32>
    %41 = arith.divf %39, %40 : vector<128x1xf32>
    %cst_25 = arith.constant 9.99999974E-6 : f32
    %42 = vector.broadcast %cst_25 : f32 to vector<128x1xf32>
    %43 = arith.addf %41, %42 : vector<128x1xf32>
    %44 = math.rsqrt %43 : vector<128x1xf32>
    %45 = vector.broadcast %44 : vector<128x1xf32> to vector<128x32xf32>
    %46 = arith.mulf %36, %45 : vector<128x32xf32>
    %47 = vector.broadcast %4 : vector<1x32xf32> to vector<128x32xf32>
    %48 = arith.mulf %46, %47 : vector<128x32xf32>
    %49 = vector.broadcast %5 : vector<1x32xf32> to vector<128x32xf32>
    %50 = arith.addf %48, %49 : vector<128x32xf32>
    %c0_26 = arith.constant 0 : index
    %c0_27 = arith.constant 0 : index
    %51 = vector.load %arg1[%c0_26, %c0_27] : memref<128x32xf32, #tpu.memory_space<vmem>>, vector<128x32xf32>
    %52 = arith.addf %50, %51 : vector<128x32xf32>
    %c0_28 = arith.constant 0 : index
    %c0_29 = arith.constant 0 : index
    %53 = vector.load %arg8[%c0_28, %c0_29] : memref<128x32xf32, #tpu.memory_space<vmem>>, vector<128x32xf32>
    tpu.vector_store %arg8[%c0_28, %c0_29], %52 {strides = array<i32>} : memref<128x32xf32, #tpu.memory_space<vmem>>, vector<128x32xf32>,
    return
  }
  func.func @transform_0(%arg0: i32) -> (i32, i32) {
    %c0_i32 = arith.constant 0 : i32
    %c0_i32_0 = arith.constant 0 : i32
    return %arg0, %c0_i32 : i32, i32
  }
  func.func @transform_1(%arg0: i32) -> (i32, i32) {
    %c0_i32 = arith.constant 0 : i32
    %c0_i32_0 = arith.constant 0 : i32
    return %arg0, %c0_i32 : i32, i32
  }
  func.func @transform_2(%arg0: i32) -> (i32, i32) {
    %c0_i32 = arith.constant 0 : i32
    %c0_i32_0 = arith.constant 0 : i32
    return %arg0, %c0_i32 : i32, i32
  }
  func.func @transform_3(%arg0: i32) -> (i32, i32) {
    %c0_i32 = arith.constant 0 : i32
    %c0_i32_0 = arith.constant 0 : i32
    %c0_i32_1 = arith.constant 0 : i32
    return %c0_i32, %c0_i32_0 : i32, i32
  }
  func.func @transform_4(%arg0: i32) -> (i32, i32) {
    %c0_i32 = arith.constant 0 : i32
    %c0_i32_0 = arith.constant 0 : i32
    %c0_i32_1 = arith.constant 0 : i32
    return %c0_i32, %c0_i32_0 : i32, i32
  }
  func.func @transform_5(%arg0: i32) -> (i32, i32) {
    %c0_i32 = arith.constant 0 : i32
    %c0_i32_0 = arith.constant 0 : i32
    %c0_i32_1 = arith.constant 0 : i32
    return %c0_i32, %c0_i32_0 : i32, i32
  }
  func.func @transform_6(%arg0: i32) -> (i32, i32) {
    %c0_i32 = arith.constant 0 : i32
    %c0_i32_0 = arith.constant 0 : i32
    %c0_i32_1 = arith.constant 0 : i32
    return %c0_i32, %c0_i32_0 : i32, i32
  }
  func.func @transform_7(%arg0: i32) -> (i32, i32) {
    %c0_i32 = arith.constant 0 : i32
    %c0_i32_0 = arith.constant 0 : i32
    return %arg0, %c0_i32 : i32, i32
  }
}

</mosaic_0001>

<llo_original>
// kernel: custom-call.1
$region0: #{custom-call.1}
  %s0 = inlined_call_operand.vmem [shape: s32[448], index: 0, kind: output, shape index: {}]

// kernel: _forward_impl.5
$region0: #{_forward_impl.5}
  #allocation0 [shape = 'u32[]', space=smem, size = 0x4, offset = 0x4, fixed_abs, tag = 'smem constant byte address 0x4 - core index']
  #allocation1 [shape = 'u32[72,128]{1,0:T(1,128)}', space=vmem, size = 0x9000, scoped, tag = 'internal scratch']
  %s0 = inlined_call_operand.vmem [shape: f32[128,32], index: 0, kind: input, shape index: {}]
  %s1 = inlined_call_operand.vmem [shape: f32[128,32], index: 1, kind: input, shape index: {}]
  %s2 = inlined_call_operand.vmem [shape: f32[128,32], index: 2, kind: input, shape index: {}]
  %s3 = inlined_call_operand.vmem [shape: f32[96,32], index: 3, kind: input, shape index: {}]
  %s4 = inlined_call_operand.vmem [shape: f32[32,32], index: 4, kind: input, shape index: {}]
  %s5 = inlined_call_operand.vmem [shape: f32[32,32], index: 5, kind: input, shape index: {}]
  %s6 = inlined_call_operand.vmem [shape: f32[8,32], index: 6, kind: input, shape index: {}]
  %s7 = inlined_call_operand.vmem [shape: f32[128,32], index: 7, kind: output, shape index: {}]
  %s8 = sld [smem:[#allocation0]]
  $region38: #{_forward_impl.5} parent=0
    _
  %s10 = ssub.s32 1, %s8
  %s11 = scalar_select 0, %s10, %s8
  // Predicated region
  $region2: #{_forward_impl.5} parent=0 // pred_check
    _
  $region3: #{_forward_impl.5} parent=0 // pred_check_branch
    %13 = sbr.rel (0) target = $region5
  $region4: #{_forward_impl.5} parent=0 // pred_region
    _
  $region5: #{_forward_impl.5} parent=0 // pred_fallthru
    _
  // Predicated region
  $region6: #{_forward_impl.5} parent=0 // pred_check
    _
  $region7: #{_forward_impl.5} parent=0 // pred_check_branch
    %15 = sbr.rel (0) target = $region9
  $region8: #{_forward_impl.5} parent=0 // pred_region
    _
  $region9: #{_forward_impl.5} parent=0 // pred_fallthru
    _
  // Predicated region
  $region10: #{_forward_impl.5} parent=0 // pred_check
    _
  $region11: #{_forward_impl.5} parent=0 // pred_check_branch
    %17 = sbr.rel (0) target = $region13
  $region12: #{_forward_impl.5} parent=0 // pred_region
    _
  $region13: #{_forward_impl.5} parent=0 // pred_fallthru
    _
  // Predicated region
  $region14: #{_forward_impl.5} parent=0 // pred_check
    _
  $region15: #{_forward_impl.5} parent=0 // pred_check_branch
    %19 = sbr.rel (0) target = $region17
  $region16: #{_forward_impl.5} parent=0 // pred_region
    _
  $region17: #{_forward_impl.5} parent=0 // pred_fallthru
    _
  // Predicated region
  $region18: #{_forward_impl.5} parent=0 // pred_check
    _
  $region19: #{_forward_impl.5} parent=0 // pred_check_branch
    %21 = sbr.rel (0) target = $region21
  $region20: #{_forward_impl.5} parent=0 // pred_region
    _
  $region21: #{_forward_impl.5} parent=0 // pred_fallthru
    _
  // Predicated region
  $region22: #{_forward_impl.5} parent=0 // pred_check
    _
  $region23: #{_forward_impl.5} parent=0 // pred_check_branch
    %23 = sbr.rel (0) target = $region25
  $region24: #{_forward_impl.5} parent=0 // pred_region
    _
  $region25: #{_forward_impl.5} parent=0 // pred_fallthru
    _
  // Predicated region
  $region26: #{_forward_impl.5} parent=0 // pred_check
    _
  $region27: #{_forward_impl.5} parent=0 // pred_check_branch
    %25 = sbr.rel (0) target = $region29
  $region28: #{_forward_impl.5} parent=0 // pred_region
    _
  $region29: #{_forward_impl.5} parent=0 // pred_fallthru
    _
  %v26 = vld [vmem:[%s6] sm:$0xff]
  %v27 = vld [vmem:[%s0] sm:$0xff]
  %v28 = vld [vmem:[%s0 + $0x8] sm:$0xff]
  %v29 = vld [vmem:[%s0 + $0x10] sm:$0xff]
  %v30 = vld [vmem:[%s0 + $0x18] sm:$0xff]
  %v31 = vld [vmem:[%s0 + $0x20] sm:$0xff]
  %v32 = vld [vmem:[%s0 + $0x28] sm:$0xff]
  %v33 = vld [vmem:[%s0 + $0x30] sm:$0xff]
  %v34 = vld [vmem:[%s0 + $0x38] sm:$0xff]
  %v35 = vld [vmem:[%s0 + $0x40] sm:$0xff]
  %v36 = vld [vmem:[%s0 + $0x48] sm:$0xff]
  %v37 = vld [vmem:[%s0 + $0x50] sm:$0xff]
  %v38 = vld [vmem:[%s0 + $0x58] sm:$0xff]
  %v39 = vld [vmem:[%s0 + $0x60] sm:$0xff]
  %v40 = vld [vmem:[%s0 + $0x68] sm:$0xff]
  %v41 = vld [vmem:[%s0 + $0x70] sm:$0xff]
  %v42 = vld [vmem:[%s0 + $0x78] sm:$0xff]
  %v43 = vld [vmem:[%s3] sm:$0xff]
  %v44 = vld [vmem:[%s3 + $0x8] sm:$0xff]
  %v45 = vld [vmem:[%s3 + $0x10] sm:$0xff]
  %v46 = vld [vmem:[%s3 + $0x18] sm:$0xff]
  %v47 = vld [vmem:[%s1] sm:$0xff]
  %v48 = vld [vmem:[%s1 + $0x8] sm:$0xff]
  %v49 = vld [vmem:[%s1 + $0x10] sm:$0xff]
  %v50 = vld [vmem:[%s1 + $0x18] sm:$0xff]
  %v51 = vld [vmem:[%s1 + $0x20] sm:$0xff]
  %v52 = vld [vmem:[%s1 + $0x28] sm:$0xff]
  %v53 = vld [vmem:[%s1 + $0x30] sm:$0xff]
  %v54 = vld [vmem:[%s1 + $0x38] sm:$0xff]
  %v55 = vld [vmem:[%s1 + $0x40] sm:$0xff]
  %v56 = vld [vmem:[%s1 + $0x48] sm:$0xff]
  %v57 = vld [vmem:[%s1 + $0x50] sm:$0xff]
  %v58 = vld [vmem:[%s1 + $0x58] sm:$0xff]
  %v59 = vld [vmem:[%s1 + $0x60] sm:$0xff]
  %v60 = vld [vmem:[%s1 + $0x68] sm:$0xff]
  %v61 = vld [vmem:[%s1 + $0x70] sm:$0xff]
  %v62 = vld [vmem:[%s1 + $0x78] sm:$0xff]
  %v63 = vld [vmem:[%s3 + $0x20] sm:$0xff]
  %v64 = vld [vmem:[%s3 + $0x28] sm:$0xff]
  %v65 = vld [vmem:[%s3 + $0x30] sm:$0xff]
  %v66 = vld [vmem:[%s3 + $0x38] sm:$0xff]
  %vm67 = vcmask 261120
  %v69 = vsel %vm67, %v47, 0
  %v72 = vsel %vm67, %v48, 0
  %v75 = vsel %vm67, %v49, 0
  %v78 = vsel %vm67, %v50, 0
  %v81 = vsel %vm67, %v51, 0
  %v84 = vsel %vm67, %v52, 0
  %v87 = vsel %vm67, %v53, 0
  %v90 = vsel %vm67, %v54, 0
  %v93 = vsel %vm67, %v55, 0
  %v96 = vsel %vm67, %v56, 0
  %v99 = vsel %vm67, %v57, 0
  %v102 = vsel %vm67, %v58, 0
  %v105 = vsel %vm67, %v59, 0
  %v108 = vsel %vm67, %v60, 0
  %v111 = vsel %vm67, %v61, 0
  %v114 = vsel %vm67, %v62, 0
  %116 = vmatpush.msra.mxu0 0.0
  %117 = vmatpush.msra.mxu0 0.0
  %118 = vmatpush.msra.mxu0 0.0
  %119 = vmatpush.msra.mxu0 0.0
  %120 = vmatpush.msra.mxu0 0.0
  %121 = vmatpush.msra.mxu0 0.0
  %122 = vmatpush.msra.mxu0 0.0
  %123 = vmatpush.msra.mxu0 0.0
  %124 = vmatpush.msra.mxu0 0.0
  %125 = vmatpush.msra.mxu0 0.0
  %126 = vmatpush.msra.mxu0 0.0
  %127 = vmatpush.msra.mxu0 0.0
  %128 = vmatpush.msra.mxu0 %v66
  %129 = vmatpush.msra.mxu0 %v65
  %130 = vmatpush.msra.mxu0 %v64
  %131 = vmatpush.msra.mxu0 %v63
  %132 = vmatmul.f32.gmra.mxu0 %v69
  %v133 = vpop.f32.mrf.mxu0
  %v134 = vadd.f32 0.0, %v133
  %135 = vmatmul.f32.gmra.mxu0 %v72
  %v136 = vpop.f32.mrf.mxu0
  %v137 = vadd.f32 0.0, %v136
  %138 = vmatmul.f32.gmra.mxu0 %v75
  %v139 = vpop.f32.mrf.mxu0
  %v140 = vadd.f32 0.0, %v139
  %141 = vmatmul.f32.gmra.mxu0 %v78
  %v142 = vpop.f32.mrf.mxu0
  %v143 = vadd.f32 0.0, %v142
  %144 = vmatmul.f32.gmra.mxu0 %v81
  %v145 = vpop.f32.mrf.mxu0
  %v146 = vadd.f32 0.0, %v145
  %147 = vmatmul.f32.gmra.mxu0 %v84
  %v148 = vpop.f32.mrf.mxu0
  %v149 = vadd.f32 0.0, %v148
  %150 = vmatmul.f32.gmra.mxu0 %v87
  %v151 = vpop.f32.mrf.mxu0
  %v152 = vadd.f32 0.0, %v151
  %153 = vmatmul.f32.gmra.mxu0 %v90
  %v154 = vpop.f32.mrf.mxu0
  %v155 = vadd.f32 0.0, %v154
  %156 = vmatmul.f32.gmra.mxu0 %v93
  %v157 = vpop.f32.mrf.mxu0
  %v158 = vadd.f32 0.0, %v157
  %159 = vmatmul.f32.gmra.mxu0 %v96
  %v160 = vpop.f32.mrf.mxu0
  %v161 = vadd.f32 0.0, %v160
  %162 = vmatmul.f32.gmra.mxu0 %v99
  %v163 = vpop.f32.mrf.mxu0
  %v164 = vadd.f32 0.0, %v163
  %165 = vmatmul.f32.gmra.mxu0 %v102
  %v166 = vpop.f32.mrf.mxu0
  %v167 = vadd.f32 0.0, %v166
  %168 = vmatmul.f32.gmra.mxu0 %v105
  %v169 = vpop.f32.mrf.mxu0
  %v170 = vadd.f32 0.0, %v169
  %171 = vmatmul.f32.gmra.mxu0 %v108
  %v172 = vpop.f32.mrf.mxu0
  %v173 = vadd.f32 0.0, %v172
  %174 = vmatmul.f32.gmra.mxu0 %v111
  %v175 = vpop.f32.mrf.mxu0
  %v176 = vadd.f32 0.0, %v175
  %177 = vmatmul.f32.gmra.mxu0 %v114
  %v178 = vpop.f32.mrf.mxu0
  %v179 = vadd.f32 0.0, %v178
  %180 = vdwg.mxu0
  %v182 = vsel %vm67, %v27, 0
  %v185 = vsel %vm67, %v28, 0
  %v188 = vsel %vm67, %v29, 0
  %v191 = vsel %vm67, %v30, 0
  %v194 = vsel %vm67, %v31, 0
  %v197 = vsel %vm67, %v32, 0
  %v200 = vsel %vm67, %v33, 0
  %v203 = vsel %vm67, %v34, 0
  %v206 = vsel %vm67, %v35, 0
  %v209 = vsel %vm67, %v36, 0
  %v212 = vsel %vm67, %v37, 0
  %v215 = vsel %vm67, %v38, 0
  %v218 = vsel %vm67, %v39, 0
  %v221 = vsel %vm67, %v40, 0
  %v224 = vsel %vm67, %v41, 0
  %v227 = vsel %vm67, %v42, 0
  %229 = vmatpush.msra.mxu0 0.0
  %230 = vmatpush.msra.mxu0 0.0
  %231 = vmatpush.msra.mxu0 0.0
  %232 = vmatpush.msra.mxu0 0.0
  %233 = vmatpush.msra.mxu0 0.0
  %234 = vmatpush.msra.mxu0 0.0
  %235 = vmatpush.msra.mxu0 0.0
  %236 = vmatpush.msra.mxu0 0.0
  %237 = vmatpush.msra.mxu0 0.0
  %238 = vmatpush.msra.mxu0 0.0
  %239 = vmatpush.msra.mxu0 0.0
  %240 = vmatpush.msra.mxu0 0.0
  %241 = vmatpush.msra.mxu0 %v46
  %242 = vmatpush.msra.mxu0 %v45
  %243 = vmatpush.msra.mxu0 %v44
  %244 = vmatpush.msra.mxu0 %v43
  %245 = vmatmul.f32.gmra.mxu0 %v182
  %v246 = vpop.f32.mrf.mxu0
  %v247 = vadd.f32 %v134, %v246
  %248 = vmatmul.f32.gmra.mxu0 %v185
  %v249 = vpop.f32.mrf.mxu0
  %v250 = vadd.f32 %v137, %v249
  %251 = vmatmul.f32.gmra.mxu0 %v188
  %v252 = vpop.f32.mrf.mxu0
  %v253 = vadd.f32 %v140, %v252
  %254 = vmatmul.f32.gmra.mxu0 %v191
  %v255 = vpop.f32.mrf.mxu0
  %v256 = vadd.f32 %v143, %v255
  %257 = vmatmul.f32.gmra.mxu0 %v194
  %v258 = vpop.f32.mrf.mxu0
  %v259 = vadd.f32 %v146, %v258
  %260 = vmatmul.f32.gmra.mxu0 %v197
  %v261 = vpop.f32.mrf.mxu0
  %v262 = vadd.f32 %v149, %v261
  %263 = vmatmul.f32.gmra.mxu0 %v200
  %v264 = vpop.f32.mrf.mxu0
  %v265 = vadd.f32 %v152, %v264
  %266 = vmatmul.f32.gmra.mxu0 %v203
  %v267 = vpop.f32.mrf.mxu0
  %v268 = vadd.f32 %v155, %v267
  %269 = vmatmul.f32.gmra.mxu0 %v206
  %v270 = vpop.f32.mrf.mxu0
  %v271 = vadd.f32 %v158, %v270
  %272 = vmatmul.f32.gmra.mxu0 %v209
  %v273 = vpop.f32.mrf.mxu0
  %v274 = vadd.f32 %v161, %v273
  %275 = vmatmul.f32.gmra.mxu0 %v212
  %v276 = vpop.f32.mrf.mxu0
  %v277 = vadd.f32 %v164, %v276
  %278 = vmatmul.f32.gmra.mxu0 %v215
  %v279 = vpop.f32.mrf.mxu0
  %v280 = vadd.f32 %v167, %v279
  %281 = vmatmul.f32.gmra.mxu0 %v218
  %v282 = vpop.f32.mrf.mxu0
  %v283 = vadd.f32 %v170, %v282
  %284 = vmatmul.f32.gmra.mxu0 %v221
  %v285 = vpop.f32.mrf.mxu0
  %v286 = vadd.f32 %v173, %v285
  %287 = vmatmul.f32.gmra.mxu0 %v224
  %v288 = vpop.f32.mrf.mxu0
  %v289 = vadd.f32 %v176, %v288
  %290 = vmatmul.f32.gmra.mxu0 %v227
  %v291 = vpop.f32.mrf.mxu0
  %v292 = vadd.f32 %v179, %v291
  %293 = vdwg.mxu0
  %v294 = vld [vmem:[%s2] sm:$0xff]
  %v295 = vld [vmem:[%s2 + $0x8] sm:$0xff]
  %v296 = vld [vmem:[%s2 + $0x10] sm:$0xff]
  %v297 = vld [vmem:[%s2 + $0x18] sm:$0xff]
  %v298 = vld [vmem:[%s2 + $0x20] sm:$0xff]
  %v299 = vld [vmem:[%s2 + $0x28] sm:$0xff]
  %v300 = vld [vmem:[%s2 + $0x30] sm:$0xff]
  %v301 = vld [vmem:[%s2 + $0x38] sm:$0xff]
  %v302 = vld [vmem:[%s2 + $0x40] sm:$0xff]
  %v303 = vld [vmem:[%s2 + $0x48] sm:$0xff]
  %v304 = vld [vmem:[%s2 + $0x50] sm:$0xff]
  %v305 = vld [vmem:[%s2 + $0x58] sm:$0xff]
  %v306 = vld [vmem:[%s2 + $0x60] sm:$0xff]
  %v307 = vld [vmem:[%s2 + $0x68] sm:$0xff]
  %v308 = vld [vmem:[%s2 + $0x70] sm:$0xff]
  %v309 = vld [vmem:[%s2 + $0x78] sm:$0xff]
  %v310 = vld [vmem:[%s3 + $0x40] sm:$0xff]
  %v311 = vld [vmem:[%s3 + $0x48] sm:$0xff]
  %v312 = vld [vmem:[%s3 + $0x50] sm:$0xff]
  %v313 = vld [vmem:[%s3 + $0x58] sm:$0xff]
  %v315 = vsel %vm67, %v294, 0
  %v318 = vsel %vm67, %v295, 0
  %v321 = vsel %vm67, %v296, 0
  %v324 = vsel %vm67, %v297, 0
  %v327 = vsel %vm67, %v298, 0
  %v330 = vsel %vm67, %v299, 0
  %v333 = vsel %vm67, %v300, 0
  %v336 = vsel %vm67, %v301, 0
  %v339 = vsel %vm67, %v302, 0
  %v342 = vsel %vm67, %v303, 0
  %v345 = vsel %vm67, %v304, 0
  %v348 = vsel %vm67, %v305, 0
  %v351 = vsel %vm67, %v306, 0
  %v354 = vsel %vm67, %v307, 0
  %v357 = vsel %vm67, %v308, 0
  %v360 = vsel %vm67, %v309, 0
  %362 = vmatpush.msra.mxu0 0.0
  %363 = vmatpush.msra.mxu0 0.0
  %364 = vmatpush.msra.mxu0 0.0
  %365 = vmatpush.msra.mxu0 0.0
  %366 = vmatpush.msra.mxu0 0.0
  %367 = vmatpush.msra.mxu0 0.0
  %368 = vmatpush.msra.mxu0 0.0
  %369 = vmatpush.msra.mxu0 0.0
  %370 = vmatpush.msra.mxu0 0.0
  %371 = vmatpush.msra.mxu0 0.0
  %372 = vmatpush.msra.mxu0 0.0
  %373 = vmatpush.msra.mxu0 0.0
  %374 = vmatpush.msra.mxu0 %v313
  %375 = vmatpush.msra.mxu0 %v312
  %376 = vmatpush.msra.mxu0 %v311
  %377 = vmatpush.msra.mxu0 %v310
  %378 = vmatmul.f32.gmra.mxu0 %v315
  %v379 = vpop.f32.mrf.mxu0
  %v380 = vadd.f32 0.0, %v379
  %381 = vmatmul.f32.gmra.mxu0 %v318
  %v382 = vpop.f32.mrf.mxu0
  %v383 = vadd.f32 0.0, %v382
  %384 = vmatmul.f32.gmra.mxu0 %v321
  %v385 = vpop.f32.mrf.mxu0
  %v386 = vadd.f32 0.0, %v385
  %387 = vmatmul.f32.gmra.mxu0 %v324
  %v388 = vpop.f32.mrf.mxu0
  %v389 = vadd.f32 0.0, %v388
  %390 = vmatmul.f32.gmra.mxu0 %v327
  %v391 = vpop.f32.mrf.mxu0
  %v392 = vadd.f32 0.0, %v391
  %393 = vmatmul.f32.gmra.mxu0 %v330
  %v394 = vpop.f32.mrf.mxu0
  %v395 = vadd.f32 0.0, %v394
  %396 = vmatmul.f32.gmra.mxu0 %v333
  %v397 = vpop.f32.mrf.mxu0
  %v398 = vadd.f32 0.0, %v397
  %399 = vmatmul.f32.gmra.mxu0 %v336
  %v400 = vpop.f32.mrf.mxu0
  %v401 = vadd.f32 0.0, %v400
  %402 = vmatmul.f32.gmra.mxu0 %v339
  %v403 = vpop.f32.mrf.mxu0
  %v404 = vadd.f32 0.0, %v403
  %405 = vmatmul.f32.gmra.mxu0 %v342
  %v406 = vpop.f32.mrf.mxu0
  %v407 = vadd.f32 0.0, %v406
  %408 = vmatmul.f32.gmra.mxu0 %v345
  %v409 = vpop.f32.mrf.mxu0
  %v410 = vadd.f32 0.0, %v409
  %411 = vmatmul.f32.gmra.mxu0 %v348
  %v412 = vpop.f32.mrf.mxu0
  %v413 = vadd.f32 0.0, %v412
  %414 = vmatmul.f32.gmra.mxu0 %v351
  %v415 = vpop.f32.mrf.mxu0
  %v416 = vadd.f32 0.0, %v415
  %417 = vmatmul.f32.gmra.mxu0 %v354
  %v418 = vpop.f32.mrf.mxu0
  %v419 = vadd.f32 0.0, %v418
  %420 = vmatmul.f32.gmra.mxu0 %v357
  %v421 = vpop.f32.mrf.mxu0
  %v422 = vadd.f32 0.0, %v421
  %423 = vmatmul.f32.gmra.mxu0 %v360
  %v424 = vpop.f32.mrf.mxu0
  %v425 = vadd.f32 0.0, %v424
  %426 = vdwg.mxu0
  %v427 = vadd.f32 %v247, %v380
  %v428 = vadd.f32 %v250, %v383
  %v429 = vadd.f32 %v253, %v386
  %v430 = vadd.f32 %v256, %v389
  %v431 = vadd.f32 %v259, %v392
  %v432 = vadd.f32 %v262, %v395
  %v433 = vadd.f32 %v265, %v398
  %v434 = vadd.f32 %v268, %v401
  %v435 = vadd.f32 %v271, %v404
  %v436 = vadd.f32 %v274, %v407
  %v437 = vadd.f32 %v277, %v410
  %v438 = vadd.f32 %v280, %v413
  %v439 = vadd.f32 %v283, %v416
  %v440 = vadd.f32 %v286, %v419
  %v441 = vadd.f32 %v289, %v422
  %v442 = vadd.f32 %v292, %v425
  %v443 = vperm.slane %v26, 0
  %v444 = vadd.f32 %v427, %v443
  %v445 = vadd.f32 %v428, %v443
  %v446 = vadd.f32 %v429, %v443
  %v447 = vadd.f32 %v430, %v443
  %v448 = vadd.f32 %v431, %v443
  %v449 = vadd.f32 %v432, %v443
  %v450 = vadd.f32 %v433, %v443
  %v451 = vadd.f32 %v434, %v443
  %v452 = vadd.f32 %v435, %v443
  %v453 = vadd.f32 %v436, %v443
  %v454 = vadd.f32 %v437, %v443
  %v455 = vadd.f32 %v438, %v443
  %v456 = vadd.f32 %v439, %v443
  %v457 = vadd.f32 %v440, %v443
  %v458 = vadd.f32 %v441, %v443
  %v459 = vadd.f32 %v442, %v443
  %v460 = vmax.f32 %v444, 0.0
  %v461 = vmax.f32 %v445, 0.0
  %v462 = vmax.f32 %v446, 0.0
  %v463 = vmax.f32 %v447, 0.0
  %v464 = vmax.f32 %v448, 0.0
  %v465 = vmax.f32 %v449, 0.0
  %v466 = vmax.f32 %v450, 0.0
  %v467 = vmax.f32 %v451, 0.0
  %v468 = vmax.f32 %v452, 0.0
  %v469 = vmax.f32 %v453, 0.0
  %v470 = vmax.f32 %v454, 0.0
  %v471 = vmax.f32 %v455, 0.0
  %v472 = vmax.f32 %v456, 0.0
  %v473 = vmax.f32 %v457, 0.0
  %v474 = vmax.f32 %v458, 0.0
  %v475 = vmax.f32 %v459, 0.0
  %v476 = vld [vmem:[%s4] sm:$0xff]
  %v477 = vld [vmem:[%s4 + $0x8] sm:$0xff]
  %v478 = vld [vmem:[%s4 + $0x10] sm:$0xff]
  %v479 = vld [vmem:[%s4 + $0x18] sm:$0xff]
  %v480 = vperm.slane %v26, 1
  %v482 = vsel %vm67, %v460, 0
  %v485 = vsel %vm67, %v461, 0
  %v488 = vsel %vm67, %v462, 0
  %v491 = vsel %vm67, %v463, 0
  %v494 = vsel %vm67, %v464, 0
  %v497 = vsel %vm67, %v465, 0
  %v500 = vsel %vm67, %v466, 0
  %v503 = vsel %vm67, %v467, 0
  %v506 = vsel %vm67, %v468, 0
  %v509 = vsel %vm67, %v469, 0
  %v512 = vsel %vm67, %v470, 0
  %v515 = vsel %vm67, %v471, 0
  %v518 = vsel %vm67, %v472, 0
  %v521 = vsel %vm67, %v473, 0
  %v524 = vsel %vm67, %v474, 0
  %v527 = vsel %vm67, %v475, 0
  %529 = vmatpush.msra.mxu0 0.0
  %530 = vmatpush.msra.mxu0 0.0
  %531 = vmatpush.msra.mxu0 0.0
  %532 = vmatpush.msra.mxu0 0.0
  %533 = vmatpush.msra.mxu0 0.0
  %534 = vmatpush.msra.mxu0 0.0
  %535 = vmatpush.msra.mxu0 0.0
  %536 = vmatpush.msra.mxu0 0.0
  %537 = vmatpush.msra.mxu0 0.0
  %538 = vmatpush.msra.mxu0 0.0
  %539 = vmatpush.msra.mxu0 0.0
  %540 = vmatpush.msra.mxu0 0.0
  %541 = vmatpush.msra.mxu0 %v479
  %542 = vmatpush.msra.mxu0 %v478
  %543 = vmatpush.msra.mxu0 %v477
  %544 = vmatpush.msra.mxu0 %v476
  %545 = vmatmul.f32.gmra.mxu0 %v482
  %v546 = vpop.f32.mrf.mxu0
  %v547 = vadd.f32 %v480, %v546
  %548 = vmatmul.f32.gmra.mxu0 %v485
  %v549 = vpop.f32.mrf.mxu0
  %v550 = vadd.f32 %v480, %v549
  %551 = vmatmul.f32.gmra.mxu0 %v488
  %v552 = vpop.f32.mrf.mxu0
  %v553 = vadd.f32 %v480, %v552
  %554 = vmatmul.f32.gmra.mxu0 %v491
  %v555 = vpop.f32.mrf.mxu0
  %v556 = vadd.f32 %v480, %v555
  %557 = vmatmul.f32.gmra.mxu0 %v494
  %v558 = vpop.f32.mrf.mxu0
  %v559 = vadd.f32 %v480, %v558
  %560 = vmatmul.f32.gmra.mxu0 %v497
  %v561 = vpop.f32.mrf.mxu0
  %v562 = vadd.f32 %v480, %v561
  %563 = vmatmul.f32.gmra.mxu0 %v500
  %v564 = vpop.f32.mrf.mxu0
  %v565 = vadd.f32 %v480, %v564
  %566 = vmatmul.f32.gmra.mxu0 %v503
  %v567 = vpop.f32.mrf.mxu0
  %v568 = vadd.f32 %v480, %v567
  %569 = vmatmul.f32.gmra.mxu0 %v506
  %v570 = vpop.f32.mrf.mxu0
  %v571 = vadd.f32 %v480, %v570
  %572 = vmatmul.f32.gmra.mxu0 %v509
  %v573 = vpop.f32.mrf.mxu0
  %v574 = vadd.f32 %v480, %v573
  %575 = vmatmul.f32.gmra.mxu0 %v512
  %v576 = vpop.f32.mrf.mxu0
  %v577 = vadd.f32 %v480, %v576
  %578 = vmatmul.f32.gmra.mxu0 %v515
  %v579 = vpop.f32.mrf.mxu0
  %v580 = vadd.f32 %v480, %v579
  %581 = vmatmul.f32.gmra.mxu0 %v518
  %v582 = vpop.f32.mrf.mxu0
  %v583 = vadd.f32 %v480, %v582
  %584 = vmatmul.f32.gmra.mxu0 %v521
  %v585 = vpop.f32.mrf.mxu0
  %v586 = vadd.f32 %v480, %v585
  %587 = vmatmul.f32.gmra.mxu0 %v524
  %v588 = vpop.f32.mrf.mxu0
  %v589 = vadd.f32 %v480, %v588
  %590 = vmatmul.f32.gmra.mxu0 %v527
  %v591 = vpop.f32.mrf.mxu0
  %v592 = vadd.f32 %v480, %v591
  %593 = vdwg.mxu0
  %v594 = vmax.f32 %v547, 0.0
  %v595 = vmax.f32 %v550, 0.0
  %v596 = vmax.f32 %v553, 0.0
  %v597 = vmax.f32 %v556, 0.0
  %v598 = vmax.f32 %v559, 0.0
  %v599 = vmax.f32 %v562, 0.0
  %v600 = vmax.f32 %v565, 0.0
  %v601 = vmax.f32 %v568, 0.0
  %v602 = vmax.f32 %v571, 0.0
  %v603 = vmax.f32 %v574, 0.0
  %v604 = vmax.f32 %v577, 0.0
  %v605 = vmax.f32 %v580, 0.0
  %v606 = vmax.f32 %v583, 0.0
  %v607 = vmax.f32 %v586, 0.0
  %v608 = vmax.f32 %v589, 0.0
  %v609 = vmax.f32 %v592, 0.0
  %v610 = vld [vmem:[%s5] sm:$0xff]
  %v611 = vld [vmem:[%s5 + $0x8] sm:$0xff]
  %v612 = vld [vmem:[%s5 + $0x10] sm:$0xff]
  %v613 = vld [vmem:[%s5 + $0x18] sm:$0xff]
  %v614 = vperm.slane %v26, 2
  %v616 = vsel %vm67, %v594, 0
  %v619 = vsel %vm67, %v595, 0
  %v622 = vsel %vm67, %v596, 0
  %v625 = vsel %vm67, %v597, 0
  %v628 = vsel %vm67, %v598, 0
  %v631 = vsel %vm67, %v599, 0
  %v634 = vsel %vm67, %v600, 0
  %v637 = vsel %vm67, %v601, 0
  %v640 = vsel %vm67, %v602, 0
  %v643 = vsel %vm67, %v603, 0
  %v646 = vsel %vm67, %v604, 0
  %v649 = vsel %vm67, %v605, 0
  %v652 = vsel %vm67, %v606, 0
  %v655 = vsel %vm67, %v607, 0
  %v658 = vsel %vm67, %v608, 0
  %v661 = vsel %vm67, %v609, 0
  %663 = vmatpush.msra.mxu0 0.0
  %664 = vmatpush.msra.mxu0 0.0
  %665 = vmatpush.msra.mxu0 0.0
  %666 = vmatpush.msra.mxu0 0.0
  %667 = vmatpush.msra.mxu0 0.0
  %668 = vmatpush.msra.mxu0 0.0
  %669 = vmatpush.msra.mxu0 0.0
  %670 = vmatpush.msra.mxu0 0.0
  %671 = vmatpush.msra.mxu0 0.0
  %672 = vmatpush.msra.mxu0 0.0
  %673 = vmatpush.msra.mxu0 0.0
  %674 = vmatpush.msra.mxu0 0.0
  %675 = vmatpush.msra.mxu0 %v613
  %676 = vmatpush.msra.mxu0 %v612
  %677 = vmatpush.msra.mxu0 %v611
  %678 = vmatpush.msra.mxu0 %v610
  %679 = vmatmul.f32.gmra.mxu0 %v616
  %v680 = vpop.f32.mrf.mxu0
  %v681 = vadd.f32 %v614, %v680
  %682 = vmatmul.f32.gmra.mxu0 %v619
  %v683 = vpop.f32.mrf.mxu0
  %v684 = vadd.f32 %v614, %v683
  %685 = vmatmul.f32.gmra.mxu0 %v622
  %v686 = vpop.f32.mrf.mxu0
  %v687 = vadd.f32 %v614, %v686
  %688 = vmatmul.f32.gmra.mxu0 %v625
  %v689 = vpop.f32.mrf.mxu0
  %v690 = vadd.f32 %v614, %v689
  %691 = vmatmul.f32.gmra.mxu0 %v628
  %v692 = vpop.f32.mrf.mxu0
  %v693 = vadd.f32 %v614, %v692
  %694 = vmatmul.f32.gmra.mxu0 %v631
  %v695 = vpop.f32.mrf.mxu0
  %v696 = vadd.f32 %v614, %v695
  %697 = vmatmul.f32.gmra.mxu0 %v634
  %v698 = vpop.f32.mrf.mxu0
  %v699 = vadd.f32 %v614, %v698
  %700 = vmatmul.f32.gmra.mxu0 %v637
  %v701 = vpop.f32.mrf.mxu0
  %v702 = vadd.f32 %v614, %v701
  %703 = vmatmul.f32.gmra.mxu0 %v640
  %v704 = vpop.f32.mrf.mxu0
  %v705 = vadd.f32 %v614, %v704
  %706 = vmatmul.f32.gmra.mxu0 %v643
  %v707 = vpop.f32.mrf.mxu0
  %v708 = vadd.f32 %v614, %v707
  %709 = vmatmul.f32.gmra.mxu0 %v646
  %v710 = vpop.f32.mrf.mxu0
  %v711 = vadd.f32 %v614, %v710
  %712 = vmatmul.f32.gmra.mxu0 %v649
  %v713 = vpop.f32.mrf.mxu0
  %v714 = vadd.f32 %v614, %v713
  %715 = vmatmul.f32.gmra.mxu0 %v652
  %v716 = vpop.f32.mrf.mxu0
  %v717 = vadd.f32 %v614, %v716
  %718 = vmatmul.f32.gmra.mxu0 %v655
  %v719 = vpop.f32.mrf.mxu0
  %v720 = vadd.f32 %v614, %v719
  %721 = vmatmul.f32.gmra.mxu0 %v658
  %v722 = vpop.f32.mrf.mxu0
  %v723 = vadd.f32 %v614, %v722
  %724 = vmatmul.f32.gmra.mxu0 %v661
  %v725 = vpop.f32.mrf.mxu0
  %v726 = vadd.f32 %v614, %v725
  %727 = vdwg.mxu0
  %v728 = vsel %vm67, %v681, 0.0
  %729 = vadd.xlane.f32.xlu0 %v728
  %v730 = vpop.xlane.xlu0 %729
  %v731 = vsel %vm67, %v684, 0.0
  %732 = vadd.xlane.f32.xlu0 %v731
  %v733 = vpop.xlane.xlu0 %732
  %v734 = vsel %vm67, %v687, 0.0
  %735 = vadd.xlane.f32.xlu0 %v734
  %v736 = vpop.xlane.xlu0 %735
  %v737 = vsel %vm67, %v690, 0.0
  %738 = vadd.xlane.f32.xlu0 %v737
  %v739 = vpop.xlane.xlu0 %738
  %v740 = vsel %vm67, %v693, 0.0
  %741 = vadd.xlane.f32.xlu0 %v740
  %v742 = vpop.xlane.xlu0 %741
  %v743 = vsel %vm67, %v696, 0.0
  %744 = vadd.xlane.f32.xlu0 %v743
  %v745 = vpop.xlane.xlu0 %744
  %v746 = vsel %vm67, %v699, 0.0
  %747 = vadd.xlane.f32.xlu0 %v746
  %v748 = vpop.xlane.xlu0 %747
  %v749 = vsel %vm67, %v702, 0.0
  %750 = vadd.xlane.f32.xlu0 %v749
  %v751 = vpop.xlane.xlu0 %750
  %v752 = vsel %vm67, %v705, 0.0
  %753 = vadd.xlane.f32.xlu0 %v752
  %v754 = vpop.xlane.xlu0 %753
  %v755 = vsel %vm67, %v708, 0.0
  %756 = vadd.xlane.f32.xlu0 %v755
  %v757 = vpop.xlane.xlu0 %756
  %v758 = vsel %vm67, %v711, 0.0
  %759 = vadd.xlane.f32.xlu0 %v758
  %v760 = vpop.xlane.xlu0 %759
  %v761 = vsel %vm67, %v714, 0.0
  %762 = vadd.xlane.f32.xlu0 %v761
  %v763 = vpop.xlane.xlu0 %762
  %v764 = vsel %vm67, %v717, 0.0
  %765 = vadd.xlane.f32.xlu0 %v764
  %v766 = vpop.xlane.xlu0 %765
  %v767 = vsel %vm67, %v720, 0.0
  %768 = vadd.xlane.f32.xlu0 %v767
  %v769 = vpop.xlane.xlu0 %768
  %v770 = vsel %vm67, %v723, 0.0
  %771 = vadd.xlane.f32.xlu0 %v770
  %v772 = vpop.xlane.xlu0 %771
  %v773 = vsel %vm67, %v726, 0.0
  %774 = vadd.xlane.f32.xlu0 %v773
  %v775 = vpop.xlane.xlu0 %774
  %v776 = vrcp.pop 32.0
  %v777 = vmul.f32 32.0, %v776
  %v778 = vsub.f32 1.0, %v777
  %v779 = vmul.f32 %v776, %v778
  %v780 = vadd.f32 %v776, %v779
  %vm781 = vweird.f32 %v776
  %v782 = vsel %vm781, %v776, %v780
  %v783 = vmul.f32 %v730, %v782
  %v784 = vmul.f32 %v733, %v782
  %v785 = vmul.f32 %v736, %v782
  %v786 = vmul.f32 %v739, %v782
  %v787 = vmul.f32 %v742, %v782
  %v788 = vmul.f32 %v745, %v782
  %v789 = vmul.f32 %v748, %v782
  %v790 = vmul.f32 %v751, %v782
  %v791 = vmul.f32 %v754, %v782
  %v792 = vmul.f32 %v757, %v782
  %v793 = vmul.f32 %v760, %v782
  %v794 = vmul.f32 %v763, %v782
  %v795 = vmul.f32 %v766, %v782
  %v796 = vmul.f32 %v769, %v782
  %v797 = vmul.f32 %v772, %v782
  %v798 = vmul.f32 %v775, %v782
  %v799 = vsub.f32 %v681, %v783
  %v800 = vsub.f32 %v684, %v784
  %v801 = vsub.f32 %v687, %v785
  %v802 = vsub.f32 %v690, %v786
  %v803 = vsub.f32 %v693, %v787
  %v804 = vsub.f32 %v696, %v788
  %v805 = vsub.f32 %v699, %v789
  %v806 = vsub.f32 %v702, %v790
  %v807 = vsub.f32 %v705, %v791
  %v808 = vsub.f32 %v708, %v792
  %v809 = vsub.f32 %v711, %v793
  %v810 = vsub.f32 %v714, %v794
  %v811 = vsub.f32 %v717, %v795
  %v812 = vsub.f32 %v720, %v796
  %v813 = vsub.f32 %v723, %v797
  %v814 = vsub.f32 %v726, %v798
  %v815 = vmul.f32 %v799, %v799
  %v816 = vmul.f32 %v800, %v800
  %v817 = vmul.f32 %v801, %v801
  %v818 = vmul.f32 %v802, %v802
  %v819 = vmul.f32 %v803, %v803
  %v820 = vmul.f32 %v804, %v804
  %v821 = vmul.f32 %v805, %v805
  %v822 = vmul.f32 %v806, %v806
  %v823 = vmul.f32 %v807, %v807
  %v824 = vmul.f32 %v808, %v808
  %v825 = vmul.f32 %v809, %v809
  %v826 = vmul.f32 %v810, %v810
  %v827 = vmul.f32 %v811, %v811
  %v828 = vmul.f32 %v812, %v812
  %v829 = vmul.f32 %v813, %v813
  %v830 = vmul.f32 %v814, %v814
  %v831 = vsel %vm67, %v815, 0.0
  %832 = vadd.xlane.f32.xlu0 %v831
  %v833 = vpop.xlane.xlu0 %832
  %v834 = vsel %vm67, %v816, 0.0
  %835 = vadd.xlane.f32.xlu0 %v834
  %v836 = vpop.xlane.xlu0 %835
  %v837 = vsel %vm67, %v817, 0.0
  %838 = vadd.xlane.f32.xlu0 %v837
  %v839 = vpop.xlane.xlu0 %838
  %v840 = vsel %vm67, %v818, 0.0
  %841 = vadd.xlane.f32.xlu0 %v840
  %v842 = vpop.xlane.xlu0 %841
  %v843 = vsel %vm67, %v819, 0.0
  %844 = vadd.xlane.f32.xlu0 %v843
  %v845 = vpop.xlane.xlu0 %844
  %v846 = vsel %vm67, %v820, 0.0
  %847 = vadd.xlane.f32.xlu0 %v846
  %v848 = vpop.xlane.xlu0 %847
  %v849 = vsel %vm67, %v821, 0.0
  %850 = vadd.xlane.f32.xlu0 %v849
  %v851 = vpop.xlane.xlu0 %850
  %v852 = vsel %vm67, %v822, 0.0
  %853 = vadd.xlane.f32.xlu0 %v852
  %v854 = vpop.xlane.xlu0 %853
  %v855 = vsel %vm67, %v823, 0.0
  %856 = vadd.xlane.f32.xlu0 %v855
  %v857 = vpop.xlane.xlu0 %856
  %v858 = vsel %vm67, %v824, 0.0
  %859 = vadd.xlane.f32.xlu0 %v858
  %v860 = vpop.xlane.xlu0 %859
  %v861 = vsel %vm67, %v825, 0.0
  %862 = vadd.xlane.f32.xlu0 %v861
  %v863 = vpop.xlane.xlu0 %862
  %v864 = vsel %vm67, %v826, 0.0
  %865 = vadd.xlane.f32.xlu0 %v864
  %v866 = vpop.xlane.xlu0 %865
  %v867 = vsel %vm67, %v827, 0.0
  %868 = vadd.xlane.f32.xlu0 %v867
  %v869 = vpop.xlane.xlu0 %868
  %v870 = vsel %vm67, %v828, 0.0
  %871 = vadd.xlane.f32.xlu0 %v870
  %v872 = vpop.xlane.xlu0 %871
  %v873 = vsel %vm67, %v829, 0.0
  %874 = vadd.xlane.f32.xlu0 %v873
  %v875 = vpop.xlane.xlu0 %874
  %v876 = vsel %vm67, %v830, 0.0
  %877 = vadd.xlane.f32.xlu0 %v876
  %v878 = vpop.xlane.xlu0 %877
  %v879 = vmul.f32 %v833, %v782
  %v880 = vmul.f32 %v836, %v782
  %v881 = vmul.f32 %v839, %v782
  %v882 = vmul.f32 %v842, %v782
  %v883 = vmul.f32 %v845, %v782
  %v884 = vmul.f32 %v848, %v782
  %v885 = vmul.f32 %v851, %v782
  %v886 = vmul.f32 %v854, %v782
  %v887 = vmul.f32 %v857, %v782
  %v888 = vmul.f32 %v860, %v782
  %v889 = vmul.f32 %v863, %v782
  %v890 = vmul.f32 %v866, %v782
  %v891 = vmul.f32 %v869, %v782
  %v892 = vmul.f32 %v872, %v782
  %v893 = vmul.f32 %v875, %v782
  %v894 = vmul.f32 %v878, %v782
  %v895 = vadd.f32 %v879, 1e-05
  %v896 = vadd.f32 %v880, 1e-05
  %v897 = vadd.f32 %v881, 1e-05
  %v898 = vadd.f32 %v882, 1e-05
  %v899 = vadd.f32 %v883, 1e-05
  %v900 = vadd.f32 %v884, 1e-05
  %v901 = vadd.f32 %v885, 1e-05
  %v902 = vadd.f32 %v886, 1e-05
  %v903 = vadd.f32 %v887, 1e-05
  %v904 = vadd.f32 %v888, 1e-05
  %v905 = vadd.f32 %v889, 1e-05
  %v906 = vadd.f32 %v890, 1e-05
  %v907 = vadd.f32 %v891, 1e-05
  %v908 = vadd.f32 %v892, 1e-05
  %v909 = vadd.f32 %v893, 1e-05
  %v910 = vadd.f32 %v894, 1e-05
  %v911 = vrsqrt.pop %v895
  %v912 = vmul.f32 %v911, %v895
  %v913 = vmul.f32 %v912, %v911
  %v914 = vmul.f32 0.5, %v913
  %v915 = vsub.f32 1.5, %v914
  %v916 = vmul.f32 %v911, %v915
  %vm917 = vweird.f32 %v895
  %vm918 = vweird.f32 %v911
  %vm919 = vmor %vm917, %vm918
  %v920 = vsel %vm919, %v911, %v916
  %v921 = vrsqrt.pop %v896
  %v922 = vmul.f32 %v921, %v896
  %v923 = vmul.f32 %v922, %v921
  %v924 = vmul.f32 0.5, %v923
  %v925 = vsub.f32 1.5, %v924
  %v926 = vmul.f32 %v921, %v925
  %vm927 = vweird.f32 %v896
  %vm928 = vweird.f32 %v921
  %vm929 = vmor %vm927, %vm928
  %v930 = vsel %vm929, %v921, %v926
  %v931 = vrsqrt.pop %v897
  %v932 = vmul.f32 %v931, %v897
  %v933 = vmul.f32 %v932, %v931
  %v934 = vmul.f32 0.5, %v933
  %v935 = vsub.f32 1.5, %v934
  %v936 = vmul.f32 %v931, %v935
  %vm937 = vweird.f32 %v897
  %vm938 = vweird.f32 %v931
  %vm939 = vmor %vm937, %vm938
  %v940 = vsel %vm939, %v931, %v936
  %v941 = vrsqrt.pop %v898
  %v942 = vmul.f32 %v941, %v898
  %v943 = vmul.f32 %v942, %v941
  %v944 = vmul.f32 0.5, %v943
  %v945 = vsub.f32 1.5, %v944
  %v946 = vmul.f32 %v941, %v945
  %vm947 = vweird.f32 %v898
  %vm948 = vweird.f32 %v941
  %vm949 = vmor %vm947, %vm948
  %v950 = vsel %vm949, %v941, %v946
  %v951 = vrsqrt.pop %v899
  %v952 = vmul.f32 %v951, %v899
  %v953 = vmul.f32 %v952, %v951
  %v954 = vmul.f32 0.5, %v953
  %v955 = vsub.f32 1.5, %v954
  %v956 = vmul.f32 %v951, %v955
  %vm957 = vweird.f32 %v899
  %vm958 = vweird.f32 %v951
  %vm959 = vmor %vm957, %vm958
  %v960 = vsel %vm959, %v951, %v956
  %v961 = vrsqrt.pop %v900
  %v962 = vmul.f32 %v961, %v900
  %v963 = vmul.f32 %v962, %v961
  %v964 = vmul.f32 0.5, %v963
  %v965 = vsub.f32 1.5, %v964
  %v966 = vmul.f32 %v961, %v965
  %vm967 = vweird.f32 %v900
  %vm968 = vweird.f32 %v961
  %vm969 = vmor %vm967, %vm968
  %v970 = vsel %vm969, %v961, %v966
  %v971 = vrsqrt.pop %v901
  %v972 = vmul.f32 %v971, %v901
  %v973 = vmul.f32 %v972, %v971
  %v974 = vmul.f32 0.5, %v973
  %v975 = vsub.f32 1.5, %v974
  %v976 = vmul.f32 %v971, %v975
  %vm977 = vweird.f32 %v901
  %vm978 = vweird.f32 %v971
  %vm979 = vmor %vm977, %vm978
  %v980 = vsel %vm979, %v971, %v976
  %v981 = vrsqrt.pop %v902
  %v982 = vmul.f32 %v981, %v902
  %v983 = vmul.f32 %v982, %v981
  %v984 = vmul.f32 0.5, %v983
  %v985 = vsub.f32 1.5, %v984
  %v986 = vmul.f32 %v981, %v985
  %vm987 = vweird.f32 %v902
  %vm988 = vweird.f32 %v981
  %vm989 = vmor %vm987, %vm988
  %v990 = vsel %vm989, %v981, %v986
  %v991 = vrsqrt.pop %v903
  %v992 = vmul.f32 %v991, %v903
  %v993 = vmul.f32 %v992, %v991
  %v994 = vmul.f32 0.5, %v993
  %v995 = vsub.f32 1.5, %v994
  %v996 = vmul.f32 %v991, %v995
  %vm997 = vweird.f32 %v903
  %vm998 = vweird.f32 %v991
  %vm999 = vmor %vm997, %vm998
  %v1000 = vsel %vm999, %v991, %v996
  %v1001 = vrsqrt.pop %v904
  %v1002 = vmul.f32 %v1001, %v904
  %v1003 = vmul.f32 %v1002, %v1001
  %v1004 = vmul.f32 0.5, %v1003
  %v1005 = vsub.f32 1.5, %v1004
  %v1006 = vmul.f32 %v1001, %v1005
  %vm1007 = vweird.f32 %v904
  %vm1008 = vweird.f32 %v1001
  %vm1009 = vmor %vm1007, %vm1008
  %v1010 = vsel %vm1009, %v1001, %v1006
  %v1011 = vrsqrt.pop %v905
  %v1012 = vmul.f32 %v1011, %v905
  %v1013 = vmul.f32 %v1012, %v1011
  %v1014 = vmul.f32 0.5, %v1013
  %v1015 = vsub.f32 1.5, %v1014
  %v1016 = vmul.f32 %v1011, %v1015
  %vm1017 = vweird.f32 %v905
  %vm1018 = vweird.f32 %v1011
  %vm1019 = vmor %vm1017, %vm1018
  %v1020 = vsel %vm1019, %v1011, %v1016
  %v1021 = vrsqrt.pop %v906
  %v1022 = vmul.f32 %v1021, %v906
  %v1023 = vmul.f32 %v1022, %v1021
  %v1024 = vmul.f32 0.5, %v1023
  %v1025 = vsub.f32 1.5, %v1024
  %v1026 = vmul.f32 %v1021, %v1025
  %vm1027 = vweird.f32 %v906
  %vm1028 = vweird.f32 %v1021
  %vm1029 = vmor %vm1027, %vm1028
  %v1030 = vsel %vm1029, %v1021, %v1026
  %v1031 = vrsqrt.pop %v907
  %v1032 = vmul.f32 %v1031, %v907
  %v1033 = vmul.f32 %v1032, %v1031
  %v1034 = vmul.f32 0.5, %v1033
  %v1035 = vsub.f32 1.5, %v1034
  %v1036 = vmul.f32 %v1031, %v1035
  %vm1037 = vweird.f32 %v907
  %vm1038 = vweird.f32 %v1031
  %vm1039 = vmor %vm1037, %vm1038
  %v1040 = vsel %vm1039, %v1031, %v1036
  %v1041 = vrsqrt.pop %v908
  %v1042 = vmul.f32 %v1041, %v908
  %v1043 = vmul.f32 %v1042, %v1041
  %v1044 = vmul.f32 0.5, %v1043
  %v1045 = vsub.f32 1.5, %v1044
  %v1046 = vmul.f32 %v1041, %v1045
  %vm1047 = vweird.f32 %v908
  %vm1048 = vweird.f32 %v1041
  %vm1049 = vmor %vm1047, %vm1048
  %v1050 = vsel %vm1049, %v1041, %v1046
  %v1051 = vrsqrt.pop %v909
  %v1052 = vmul.f32 %v1051, %v909
  %v1053 = vmul.f32 %v1052, %v1051
  %v1054 = vmul.f32 0.5, %v1053
  %v1055 = vsub.f32 1.5, %v1054
  %v1056 = vmul.f32 %v1051, %v1055
  %vm1057 = vweird.f32 %v909
  %vm1058 = vweird.f32 %v1051
  %vm1059 = vmor %vm1057, %vm1058
  %v1060 = vsel %vm1059, %v1051, %v1056
  %v1061 = vrsqrt.pop %v910
  %v1062 = vmul.f32 %v1061, %v910
  %v1063 = vmul.f32 %v1062, %v1061
  %v1064 = vmul.f32 0.5, %v1063
  %v1065 = vsub.f32 1.5, %v1064
  %v1066 = vmul.f32 %v1061, %v1065
  %vm1067 = vweird.f32 %v910
  %vm1068 = vweird.f32 %v1061
  %vm1069 = vmor %vm1067, %vm1068
  %v1070 = vsel %vm1069, %v1061, %v1066
  %v1071 = vmul.f32 %v799, %v920
  %v1072 = vmul.f32 %v800, %v930
  %v1073 = vmul.f32 %v801, %v940
  %v1074 = vmul.f32 %v802, %v950
  %v1075 = vmul.f32 %v803, %v960
  %v1076 = vmul.f32 %v804, %v970
  %v1077 = vmul.f32 %v805, %v980
  %v1078 = vmul.f32 %v806, %v990
  %v1079 = vmul.f32 %v807, %v1000
  %v1080 = vmul.f32 %v808, %v1010
  %v1081 = vmul.f32 %v809, %v1020
  %v1082 = vmul.f32 %v810, %v1030
  %v1083 = vmul.f32 %v811, %v1040
  %v1084 = vmul.f32 %v812, %v1050
  %v1085 = vmul.f32 %v813, %v1060
  %v1086 = vmul.f32 %v814, %v1070
  %v1087 = vperm.slane %v26, 3
  %v1088 = vmul.f32 %v1071, %v1087
  %v1089 = vmul.f32 %v1072, %v1087
  %v1090 = vmul.f32 %v1073, %v1087
  %v1091 = vmul.f32 %v1074, %v1087
  %v1092 = vmul.f32 %v1075, %v1087
  %v1093 = vmul.f32 %v1076, %v1087
  %v1094 = vmul.f32 %v1077, %v1087
  %v1095 = vmul.f32 %v1078, %v1087
  %v1096 = vmul.f32 %v1079, %v1087
  %v1097 = vmul.f32 %v1080, %v1087
  %v1098 = vmul.f32 %v1081, %v1087
  %v1099 = vmul.f32 %v1082, %v1087
  %v1100 = vmul.f32 %v1083, %v1087
  %v1101 = vmul.f32 %v1084, %v1087
  %v1102 = vmul.f32 %v1085, %v1087
  %v1103 = vmul.f32 %v1086, %v1087
  %v1104 = vperm.slane %v26, 4
  %v1105 = vadd.f32 %v1088, %v1104
  %v1106 = vadd.f32 %v1089, %v1104
  %v1107 = vadd.f32 %v1090, %v1104
  %v1108 = vadd.f32 %v1091, %v1104
  %v1109 = vadd.f32 %v1092, %v1104
  %v1110 = vadd.f32 %v1093, %v1104
  %v1111 = vadd.f32 %v1094, %v1104
  %v1112 = vadd.f32 %v1095, %v1104
  %v1113 = vadd.f32 %v1096, %v1104
  %v1114 = vadd.f32 %v1097, %v1104
  %v1115 = vadd.f32 %v1098, %v1104
  %v1116 = vadd.f32 %v1099, %v1104
  %v1117 = vadd.f32 %v1100, %v1104
  %v1118 = vadd.f32 %v1101, %v1104
  %v1119 = vadd.f32 %v1102, %v1104
  %v1120 = vadd.f32 %v1103, %v1104
  %v1121 = vadd.f32 %v1105, %v27
  %v1122 = vadd.f32 %v1106, %v28
  %v1123 = vadd.f32 %v1107, %v29
  %v1124 = vadd.f32 %v1108, %v30
  %v1125 = vadd.f32 %v1109, %v31
  %v1126 = vadd.f32 %v1110, %v32
  %v1127 = vadd.f32 %v1111, %v33
  %v1128 = vadd.f32 %v1112, %v34
  %v1129 = vadd.f32 %v1113, %v35
  %v1130 = vadd.f32 %v1114, %v36
  %v1131 = vadd.f32 %v1115, %v37
  %v1132 = vadd.f32 %v1116, %v38
  %v1133 = vadd.f32 %v1117, %v39
  %v1134 = vadd.f32 %v1118, %v40
  %v1135 = vadd.f32 %v1119, %v41
  %v1136 = vadd.f32 %v1120, %v42
  %1137 = vst.msk [vmem:[%s7] sm:$0xff] %vm67, %v1121
  %1138 = vst.msk [vmem:[%s7 + $0x8] sm:$0xff] %vm67, %v1122
  %1139 = vst.msk [vmem:[%s7 + $0x10] sm:$0xff] %vm67, %v1123
  %1140 = vst.msk [vmem:[%s7 + $0x18] sm:$0xff] %vm67, %v1124
  %1141 = vst.msk [vmem:[%s7 + $0x20] sm:$0xff] %vm67, %v1125
  %1142 = vst.msk [vmem:[%s7 + $0x28] sm:$0xff] %vm67, %v1126
  %1143 = vst.msk [vmem:[%s7 + $0x30] sm:$0xff] %vm67, %v1127
  %1144 = vst.msk [vmem:[%s7 + $0x38] sm:$0xff] %vm67, %v1128
  %1145 = vst.msk [vmem:[%s7 + $0x40] sm:$0xff] %vm67, %v1129
  %1146 = vst.msk [vmem:[%s7 + $0x48] sm:$0xff] %vm67, %v1130
  %1147 = vst.msk [vmem:[%s7 + $0x50] sm:$0xff] %vm67, %v1131
  %1148 = vst.msk [vmem:[%s7 + $0x58] sm:$0xff] %vm67, %v1132
  %1149 = vst.msk [vmem:[%s7 + $0x60] sm:$0xff] %vm67, %v1133
  %1150 = vst.msk [vmem:[%s7 + $0x68] sm:$0xff] %vm67, %v1134
  %1151 = vst.msk [vmem:[%s7 + $0x70] sm:$0xff] %vm67, %v1135
  %1152 = vst.msk [vmem:[%s7 + $0x78] sm:$0xff] %vm67, %v1136
  // Predicated region
  $region30: #{_forward_impl.5} parent=0 // pred_check
    _
  $region31: #{_forward_impl.5} parent=0 // pred_check_branch
    %1154 = sbr.rel (0) target = $region33
  $region32: #{_forward_impl.5} parent=0 // pred_region
    _
  $region33: #{_forward_impl.5} parent=0 // pred_fallthru
    _
  // Predicated region
  $region34: #{_forward_impl.5} parent=0 // pred_check
    _
  $region35: #{_forward_impl.5} parent=0 // pred_check_branch
    %1156 = sbr.rel (0) target = $region37
  $region36: #{_forward_impl.5} parent=0 // pred_region
    _
  $region37: #{_forward_impl.5} parent=0 // pred_fallthru
    _

// kernel: _forward_impl.4
$region0: #{_forward_impl.4}
  #allocation0 [shape = 'u32[]', space=smem, size = 0x4, offset = 0x4, fixed_abs, tag = 'smem constant byte address 0x4 - core index']
  #allocation1 [shape = 'u32[72,128]{1,0:T(1,128)}', space=vmem, size = 0x9000, scoped, tag = 'internal scratch']
  %s0 = inlined_call_operand.vmem [shape: f32[448,32], index: 0, kind: input, shape index: {}]
  %s1 = inlined_call_operand.vmem [shape: f32[448,32], index: 1, kind: input, shape index: {}]
  %s2 = inlined_call_operand.vmem [shape: f32[448,32], index: 2, kind: input, shape index: {}]
  %s3 = inlined_call_operand.vmem [shape: f32[96,32], index: 3, kind: input, shape index: {}]
  %s4 = inlined_call_operand.vmem [shape: f32[32,32], index: 4, kind: input, shape index: {}]
  %s5 = inlined_call_operand.vmem [shape: f32[32,32], index: 5, kind: input, shape index: {}]
  %s6 = inlined_call_operand.vmem [shape: f32[8,32], index: 6, kind: input, shape index: {}]
  %s7 = inlined_call_operand.vmem [shape: f32[448,32], index: 7, kind: output, shape index: {}]
  %s8 = sld [smem:[#allocation0]]
  $region38: #{_forward_impl.4} parent=0
    _
  %s10 = ssub.s32 1, %s8
  %s11 = scalar_select 0, %s10, %s8
  // Predicated region
  $region2: #{_forward_impl.4} parent=0 // pred_check
    _
  $region3: #{_forward_impl.4} parent=0 // pred_check_branch
    %13 = sbr.rel (0) target = $region5
  $region4: #{_forward_impl.4} parent=0 // pred_region
    _
  $region5: #{_forward_impl.4} parent=0 // pred_fallthru
    _
  // Predicated region
  $region6: #{_forward_impl.4} parent=0 // pred_check
    _
  $region7: #{_forward_impl.4} parent=0 // pred_check_branch
    %15 = sbr.rel (0) target = $region9
  $region8: #{_forward_impl.4} parent=0 // pred_region
    _
  $region9: #{_forward_impl.4} parent=0 // pred_fallthru
    _
  // Predicated region
  $region10: #{_forward_impl.4} parent=0 // pred_check
    _
  $region11: #{_forward_impl.4} parent=0 // pred_check_branch
    %17 = sbr.rel (0) target = $region13
  $region12: #{_forward_impl.4} parent=0 // pred_region
    _
  $region13: #{_forward_impl.4} parent=0 // pred_fallthru
    _
  // Predicated region
  $region14: #{_forward_impl.4} parent=0 // pred_check
    _
  $region15: #{_forward_impl.4} parent=0 // pred_check_branch
    %19 = sbr.rel (0) target = $region17
  $region16: #{_forward_impl.4} parent=0 // pred_region
    _
  $region17: #{_forward_impl.4} parent=0 // pred_fallthru
    _
  // Predicated region
  $region18: #{_forward_impl.4} parent=0 // pred_check
    _
  $region19: #{_forward_impl.4} parent=0 // pred_check_branch
    %21 = sbr.rel (0) target = $region21
  $region20: #{_forward_impl.4} parent=0 // pred_region
    _
  $region21: #{_forward_impl.4} parent=0 // pred_fallthru
    _
  // Predicated region
  $region22: #{_forward_impl.4} parent=0 // pred_check
    _
  $region23: #{_forward_impl.4} parent=0 // pred_check_branch
    %23 = sbr.rel (0) target = $region25
  $region24: #{_forward_impl.4} parent=0 // pred_region
    _
  $region25: #{_forward_impl.4} parent=0 // pred_fallthru
    _
  // Predicated region
  $region26: #{_forward_impl.4} parent=0 // pred_check
    _
  $region27: #{_forward_impl.4} parent=0 // pred_check_branch
    %25 = sbr.rel (0) target = $region29
  $region28: #{_forward_impl.4} parent=0 // pred_region
    _
  $region29: #{_forward_impl.4} parent=0 // pred_fallthru
    _
  %v26 = vld [vmem:[%s6] sm:$0xff]
  %v27 = vld [vmem:[%s0] sm:$0xff]
  %v28 = vld [vmem:[%s0 + $0x8] sm:$0xff]
  %v29 = vld [vmem:[%s0 + $0x10] sm:$0xff]
  %v30 = vld [vmem:[%s0 + $0x18] sm:$0xff]
  %v31 = vld [vmem:[%s0 + $0x20] sm:$0xff]
  %v32 = vld [vmem:[%s0 + $0x28] sm:$0xff]
  %v33 = vld [vmem:[%s0 + $0x30] sm:$0xff]
  %v34 = vld [vmem:[%s0 + $0x38] sm:$0xff]
  %v35 = vld [vmem:[%s0 + $0x40] sm:$0xff]
  %v36 = vld [vmem:[%s0 + $0x48] sm:$0xff]
  %v37 = vld [vmem:[%s0 + $0x50] sm:$0xff]
  %v38 = vld [vmem:[%s0 + $0x58] sm:$0xff]
  %v39 = vld [vmem:[%s0 + $0x60] sm:$0xff]
  %v40 = vld [vmem:[%s0 + $0x68] sm:$0xff]
  %v41 = vld [vmem:[%s0 + $0x70] sm:$0xff]
  %v42 = vld [vmem:[%s0 + $0x78] sm:$0xff]
  %v43 = vld [vmem:[%s0 + $0x80] sm:$0xff]
  %v44 = vld [vmem:[%s0 + $0x88] sm:$0xff]
  %v45 = vld [vmem:[%s0 + $0x90] sm:$0xff]
  %v46 = vld [vmem:[%s0 + $0x98] sm:$0xff]
  %v47 = vld [vmem:[%s0 + $0xa0] sm:$0xff]
  %v48 = vld [vmem:[%s0 + $0xa8] sm:$0xff]
  %v49 = vld [vmem:[%s0 + $0xb0] sm:$0xff]
  %v50 = vld [vmem:[%s0 + $0xb8] sm:$0xff]
  %v51 = vld [vmem:[%s0 + $0xc0] sm:$0xff]
  %v52 = vld [vmem:[%s0 + $0xc8] sm:$0xff]
  %v53 = vld [vmem:[%s0 + $0xd0] sm:$0xff]
  %v54 = vld [vmem:[%s0 + $0xd8] sm:$0xff]
  %v55 = vld [vmem:[%s0 + $0xe0] sm:$0xff]
  %v56 = vld [vmem:[%s0 + $0xe8] sm:$0xff]
  %v57 = vld [vmem:[%s0 + $0xf0] sm:$0xff]
  %v58 = vld [vmem:[%s0 + $0xf8] sm:$0xff]
  %v59 = vld [vmem:[%s0 + $0x100] sm:$0xff]
  %v60 = vld [vmem:[%s0 + $0x108] sm:$0xff]
  %v61 = vld [vmem:[%s0 + $0x110] sm:$0xff]
  %v62 = vld [vmem:[%s0 + $0x118] sm:$0xff]
  %v63 = vld [vmem:[%s0 + $0x120] sm:$0xff]
  %v64 = vld [vmem:[%s0 + $0x128] sm:$0xff]
  %v65 = vld [vmem:[%s0 + $0x130] sm:$0xff]
  %v66 = vld [vmem:[%s0 + $0x138] sm:$0xff]
  %v67 = vld [vmem:[%s0 + $0x140] sm:$0xff]
  %v68 = vld [vmem:[%s0 + $0x148] sm:$0xff]
  %v69 = vld [vmem:[%s0 + $0x150] sm:$0xff]
  %v70 = vld [vmem:[%s0 + $0x158] sm:$0xff]
  %v71 = vld [vmem:[%s0 + $0x160] sm:$0xff]
  %v72 = vld [vmem:[%s0 + $0x168] sm:$0xff]
  %v73 = vld [vmem:[%s0 + $0x170] sm:$0xff]
  %v74 = vld [vmem:[%s0 + $0x178] sm:$0xff]
  %v75 = vld [vmem:[%s0 + $0x180] sm:$0xff]
  %v76 = vld [vmem:[%s0 + $0x188] sm:$0xff]
  %v77 = vld [vmem:[%s0 + $0x190] sm:$0xff]
  %v78 = vld [vmem:[%s0 + $0x198] sm:$0xff]
  %v79 = vld [vmem:[%s0 + $0x1a0] sm:$0xff]
  %v80 = vld [vmem:[%s0 + $0x1a8] sm:$0xff]
  %v81 = vld [vmem:[%s0 + $0x1b0] sm:$0xff]
  %v82 = vld [vmem:[%s0 + $0x1b8] sm:$0xff]
  %v83 = vld [vmem:[%s3] sm:$0xff]
  %v84 = vld [vmem:[%s3 + $0x8] sm:$0xff]
  %v85 = vld [vmem:[%s3 + $0x10] sm:$0xff]
  %v86 = vld [vmem:[%s3 + $0x18] sm:$0xff]
  %v87 = vld [vmem:[%s1] sm:$0xff]
  %v88 = vld [vmem:[%s1 + $0x8] sm:$0xff]
  %v89 = vld [vmem:[%s1 + $0x10] sm:$0xff]
  %v90 = vld [vmem:[%s1 + $0x18] sm:$0xff]
  %v91 = vld [vmem:[%s1 + $0x20] sm:$0xff]
  %v92 = vld [vmem:[%s1 + $0x28] sm:$0xff]
  %v93 = vld [vmem:[%s1 + $0x30] sm:$0xff]
  %v94 = vld [vmem:[%s1 + $0x38] sm:$0xff]
  %v95 = vld [vmem:[%s1 + $0x40] sm:$0xff]
  %v96 = vld [vmem:[%s1 + $0x48] sm:$0xff]
  %v97 = vld [vmem:[%s1 + $0x50] sm:$0xff]
  %v98 = vld [vmem:[%s1 + $0x58] sm:$0xff]
  %v99 = vld [vmem:[%s1 + $0x60] sm:$0xff]
  %v100 = vld [vmem:[%s1 + $0x68] sm:$0xff]
  %v101 = vld [vmem:[%s1 + $0x70] sm:$0xff]
  %v102 = vld [vmem:[%s1 + $0x78] sm:$0xff]
  %v103 = vld [vmem:[%s1 + $0x80] sm:$0xff]
  %v104 = vld [vmem:[%s1 + $0x88] sm:$0xff]
  %v105 = vld [vmem:[%s1 + $0x90] sm:$0xff]
  %v106 = vld [vmem:[%s1 + $0x98] sm:$0xff]
  %v107 = vld [vmem:[%s1 + $0xa0] sm:$0xff]
  %v108 = vld [vmem:[%s1 + $0xa8] sm:$0xff]
  %v109 = vld [vmem:[%s1 + $0xb0] sm:$0xff]
  %v110 = vld [vmem:[%s1 + $0xb8] sm:$0xff]
  %v111 = vld [vmem:[%s1 + $0xc0] sm:$0xff]
  %v112 = vld [vmem:[%s1 + $0xc8] sm:$0xff]
  %v113 = vld [vmem:[%s1 + $0xd0] sm:$0xff]
  %v114 = vld [vmem:[%s1 + $0xd8] sm:$0xff]
  %v115 = vld [vmem:[%s1 + $0xe0] sm:$0xff]
  %v116 = vld [vmem:[%s1 + $0xe8] sm:$0xff]
  %v117 = vld [vmem:[%s1 + $0xf0] sm:$0xff]
  %v118 = vld [vmem:[%s1 + $0xf8] sm:$0xff]
  %v119 = vld [vmem:[%s1 + $0x100] sm:$0xff]
  %v120 = vld [vmem:[%s1 + $0x108] sm:$0xff]
  %v121 = vld [vmem:[%s1 + $0x110] sm:$0xff]
  %v122 = vld [vmem:[%s1 + $0x118] sm:$0xff]
  %v123 = vld [vmem:[%s1 + $0x120] sm:$0xff]
  %v124 = vld [vmem:[%s1 + $0x128] sm:$0xff]
  %v125 = vld [vmem:[%s1 + $0x130] sm:$0xff]
  %v126 = vld [vmem:[%s1 + $0x138] sm:$0xff]
  %v127 = vld [vmem:[%s1 + $0x140] sm:$0xff]
  %v128 = vld [vmem:[%s1 + $0x148] sm:$0xff]
  %v129 = vld [vmem:[%s1 + $0x150] sm:$0xff]
  %v130 = vld [vmem:[%s1 + $0x158] sm:$0xff]
  %v131 = vld [vmem:[%s1 + $0x160] sm:$0xff]
  %v132 = vld [vmem:[%s1 + $0x168] sm:$0xff]
  %v133 = vld [vmem:[%s1 + $0x170] sm:$0xff]
  %v134 = vld [vmem:[%s1 + $0x178] sm:$0xff]
  %v135 = vld [vmem:[%s1 + $0x180] sm:$0xff]
  %v136 = vld [vmem:[%s1 + $0x188] sm:$0xff]
  %v137 = vld [vmem:[%s1 + $0x190] sm:$0xff]
  %v138 = vld [vmem:[%s1 + $0x198] sm:$0xff]
  %v139 = vld [vmem:[%s1 + $0x1a0] sm:$0xff]
  %v140 = vld [vmem:[%s1 + $0x1a8] sm:$0xff]
  %v141 = vld [vmem:[%s1 + $0x1b0] sm:$0xff]
  %v142 = vld [vmem:[%s1 + $0x1b8] sm:$0xff]
  %v143 = vld [vmem:[%s3 + $0x20] sm:$0xff]
  %v144 = vld [vmem:[%s3 + $0x28] sm:$0xff]
  %v145 = vld [vmem:[%s3 + $0x30] sm:$0xff]
  %v146 = vld [vmem:[%s3 + $0x38] sm:$0xff]
  %vm147 = vcmask 261120
  %v149 = vsel %vm147, %v87, 0
  %v152 = vsel %vm147, %v88, 0
  %v155 = vsel %vm147, %v89, 0
  %v158 = vsel %vm147, %v90, 0
  %v161 = vsel %vm147, %v91, 0
  %v164 = vsel %vm147, %v92, 0
  %v167 = vsel %vm147, %v93, 0
  %v170 = vsel %vm147, %v94, 0
  %v173 = vsel %vm147, %v95, 0
  %v176 = vsel %vm147, %v96, 0
  %v179 = vsel %vm147, %v97, 0
  %v182 = vsel %vm147, %v98, 0
  %v185 = vsel %vm147, %v99, 0
  %v188 = vsel %vm147, %v100, 0
  %v191 = vsel %vm147, %v101, 0
  %v194 = vsel %vm147, %v102, 0
  %v197 = vsel %vm147, %v103, 0
  %v200 = vsel %vm147, %v104, 0
  %v203 = vsel %vm147, %v105, 0
  %v206 = vsel %vm147, %v106, 0
  %v209 = vsel %vm147, %v107, 0
  %v212 = vsel %vm147, %v108, 0
  %v215 = vsel %vm147, %v109, 0
  %v218 = vsel %vm147, %v110, 0
  %v221 = vsel %vm147, %v111, 0
  %v224 = vsel %vm147, %v112, 0
  %v227 = vsel %vm147, %v113, 0
  %v230 = vsel %vm147, %v114, 0
  %v233 = vsel %vm147, %v115, 0
  %v236 = vsel %vm147, %v116, 0
  %v239 = vsel %vm147, %v117, 0
  %v242 = vsel %vm147, %v118, 0
  %v245 = vsel %vm147, %v119, 0
  %v248 = vsel %vm147, %v120, 0
  %v251 = vsel %vm147, %v121, 0
  %v254 = vsel %vm147, %v122, 0
  %v257 = vsel %vm147, %v123, 0
  %v260 = vsel %vm147, %v124, 0
  %v263 = vsel %vm147, %v125, 0
  %v266 = vsel %vm147, %v126, 0
  %v269 = vsel %vm147, %v127, 0
  %v272 = vsel %vm147, %v128, 0
  %v275 = vsel %vm147, %v129, 0
  %v278 = vsel %vm147, %v130, 0
  %v281 = vsel %vm147, %v131, 0
  %v284 = vsel %vm147, %v132, 0
  %v287 = vsel %vm147, %v133, 0
  %v290 = vsel %vm147, %v134, 0
  %v293 = vsel %vm147, %v135, 0
  %v296 = vsel %vm147, %v136, 0
  %v299 = vsel %vm147, %v137, 0
  %v302 = vsel %vm147, %v138, 0
  %v305 = vsel %vm147, %v139, 0
  %v308 = vsel %vm147, %v140, 0
  %v311 = vsel %vm147, %v141, 0
  %v314 = vsel %vm147, %v142, 0
  %316 = vmatpush.msra.mxu0 0.0
  %317 = vmatpush.msra.mxu0 0.0
  %318 = vmatpush.msra.mxu0 0.0
  %319 = vmatpush.msra.mxu0 0.0
  %320 = vmatpush.msra.mxu0 0.0
  %321 = vmatpush.msra.mxu0 0.0
  %322 = vmatpush.msra.mxu0 0.0
  %323 = vmatpush.msra.mxu0 0.0
  %324 = vmatpush.msra.mxu0 0.0
  %325 = vmatpush.msra.mxu0 0.0
  %326 = vmatpush.msra.mxu0 0.0
  %327 = vmatpush.msra.mxu0 0.0
  %328 = vmatpush.msra.mxu0 %v146
  %329 = vmatpush.msra.mxu0 %v145
  %330 = vmatpush.msra.mxu0 %v144
  %331 = vmatpush.msra.mxu0 %v143
  %332 = vmatmul.f32.gmra.mxu0 %v149
  %v333 = vpop.f32.mrf.mxu0
  %v334 = vadd.f32 0.0, %v333
  %335 = vmatmul.f32.gmra.mxu0 %v152
  %v336 = vpop.f32.mrf.mxu0
  %v337 = vadd.f32 0.0, %v336
  %338 = vmatmul.f32.gmra.mxu0 %v155
  %v339 = vpop.f32.mrf.mxu0
  %v340 = vadd.f32 0.0, %v339
  %341 = vmatmul.f32.gmra.mxu0 %v158
  %v342 = vpop.f32.mrf.mxu0
  %v343 = vadd.f32 0.0, %v342
  %344 = vmatmul.f32.gmra.mxu0 %v161
  %v345 = vpop.f32.mrf.mxu0
  %v346 = vadd.f32 0.0, %v345
  %347 = vmatmul.f32.gmra.mxu0 %v164
  %v348 = vpop.f32.mrf.mxu0
  %v349 = vadd.f32 0.0, %v348
  %350 = vmatmul.f32.gmra.mxu0 %v167
  %v351 = vpop.f32.mrf.mxu0
  %v352 = vadd.f32 0.0, %v351
  %353 = vmatmul.f32.gmra.mxu0 %v170
  %v354 = vpop.f32.mrf.mxu0
  %v355 = vadd.f32 0.0, %v354
  %356 = vmatmul.f32.gmra.mxu0 %v173
  %v357 = vpop.f32.mrf.mxu0
  %v358 = vadd.f32 0.0, %v357
  %359 = vmatmul.f32.gmra.mxu0 %v176
  %v360 = vpop.f32.mrf.mxu0
  %v361 = vadd.f32 0.0, %v360
  %362 = vmatmul.f32.gmra.mxu0 %v179
  %v363 = vpop.f32.mrf.mxu0
  %v364 = vadd.f32 0.0, %v363
  %365 = vmatmul.f32.gmra.mxu0 %v182
  %v366 = vpop.f32.mrf.mxu0
  %v367 = vadd.f32 0.0, %v366
  %368 = vmatmul.f32.gmra.mxu0 %v185
  %v369 = vpop.f32.mrf.mxu0
  %v370 = vadd.f32 0.0, %v369
  %371 = vmatmul.f32.gmra.mxu0 %v188
  %v372 = vpop.f32.mrf.mxu0
  %v373 = vadd.f32 0.0, %v372
  %374 = vmatmul.f32.gmra.mxu0 %v191
  %v375 = vpop.f32.mrf.mxu0
  %v376 = vadd.f32 0.0, %v375
  %377 = vmatmul.f32.gmra.mxu0 %v194
  %v378 = vpop.f32.mrf.mxu0
  %v379 = vadd.f32 0.0, %v378
  %380 = vmatmul.f32.gmra.mxu0 %v197
  %v381 = vpop.f32.mrf.mxu0
  %v382 = vadd.f32 0.0, %v381
  %383 = vmatmul.f32.gmra.mxu0 %v200
  %v384 = vpop.f32.mrf.mxu0
  %v385 = vadd.f32 0.0, %v384
  %386 = vmatmul.f32.gmra.mxu0 %v203
  %v387 = vpop.f32.mrf.mxu0
  %v388 = vadd.f32 0.0, %v387
  %389 = vmatmul.f32.gmra.mxu0 %v206
  %v390 = vpop.f32.mrf.mxu0
  %v391 = vadd.f32 0.0, %v390
  %392 = vmatmul.f32.gmra.mxu0 %v209
  %v393 = vpop.f32.mrf.mxu0
  %v394 = vadd.f32 0.0, %v393
  %395 = vmatmul.f32.gmra.mxu0 %v212
  %v396 = vpop.f32.mrf.mxu0
  %v397 = vadd.f32 0.0, %v396
  %398 = vmatmul.f32.gmra.mxu0 %v215
  %v399 = vpop.f32.mrf.mxu0
  %v400 = vadd.f32 0.0, %v399
  %401 = vmatmul.f32.gmra.mxu0 %v218
  %v402 = vpop.f32.mrf.mxu0
  %v403 = vadd.f32 0.0, %v402
  %404 = vmatmul.f32.gmra.mxu0 %v221
  %v405 = vpop.f32.mrf.mxu0
  %v406 = vadd.f32 0.0, %v405
  %407 = vmatmul.f32.gmra.mxu0 %v224
  %v408 = vpop.f32.mrf.mxu0
  %v409 = vadd.f32 0.0, %v408
  %410 = vmatmul.f32.gmra.mxu0 %v227
  %v411 = vpop.f32.mrf.mxu0
  %v412 = vadd.f32 0.0, %v411
  %413 = vmatmul.f32.gmra.mxu0 %v230
  %v414 = vpop.f32.mrf.mxu0
  %v415 = vadd.f32 0.0, %v414
  %416 = vmatmul.f32.gmra.mxu0 %v233
  %v417 = vpop.f32.mrf.mxu0
  %v418 = vadd.f32 0.0, %v417
  %419 = vmatmul.f32.gmra.mxu0 %v236
  %v420 = vpop.f32.mrf.mxu0
  %v421 = vadd.f32 0.0, %v420
  %422 = vmatmul.f32.gmra.mxu0 %v239
  %v423 = vpop.f32.mrf.mxu0
  %v424 = vadd.f32 0.0, %v423
  %425 = vmatmul.f32.gmra.mxu0 %v242
  %v426 = vpop.f32.mrf.mxu0
  %v427 = vadd.f32 0.0, %v426
  %428 = vmatmul.f32.gmra.mxu0 %v245
  %v429 = vpop.f32.mrf.mxu0
  %v430 = vadd.f32 0.0, %v429
  %431 = vmatmul.f32.gmra.mxu0 %v248
  %v432 = vpop.f32.mrf.mxu0
  %v433 = vadd.f32 0.0, %v432
  %434 = vmatmul.f32.gmra.mxu0 %v251
  %v435 = vpop.f32.mrf.mxu0
  %v436 = vadd.f32 0.0, %v435
  %437 = vmatmul.f32.gmra.mxu0 %v254
  %v438 = vpop.f32.mrf.mxu0
  %v439 = vadd.f32 0.0, %v438
  %440 = vmatmul.f32.gmra.mxu0 %v257
  %v441 = vpop.f32.mrf.mxu0
  %v442 = vadd.f32 0.0, %v441
  %443 = vmatmul.f32.gmra.mxu0 %v260
  %v444 = vpop.f32.mrf.mxu0
  %v445 = vadd.f32 0.0, %v444
  %446 = vmatmul.f32.gmra.mxu0 %v263
  %v447 = vpop.f32.mrf.mxu0
  %v448 = vadd.f32 0.0, %v447
  %449 = vmatmul.f32.gmra.mxu0 %v266
  %v450 = vpop.f32.mrf.mxu0
  %v451 = vadd.f32 0.0, %v450
  %452 = vmatmul.f32.gmra.mxu0 %v269
  %v453 = vpop.f32.mrf.mxu0
  %v454 = vadd.f32 0.0, %v453
  %455 = vmatmul.f32.gmra.mxu0 %v272
  %v456 = vpop.f32.mrf.mxu0
  %v457 = vadd.f32 0.0, %v456
  %458 = vmatmul.f32.gmra.mxu0 %v275
  %v459 = vpop.f32.mrf.mxu0
  %v460 = vadd.f32 0.0, %v459
  %461 = vmatmul.f32.gmra.mxu0 %v278
  %v462 = vpop.f32.mrf.mxu0
  %v463 = vadd.f32 0.0, %v462
  %464 = vmatmul.f32.gmra.mxu0 %v281
  %v465 = vpop.f32.mrf.mxu0
  %v466 = vadd.f32 0.0, %v465
  %467 = vmatmul.f32.gmra.mxu0 %v284
  %v468 = vpop.f32.mrf.mxu0
  %v469 = vadd.f32 0.0, %v468
  %470 = vmatmul.f32.gmra.mxu0 %v287
  %v471 = vpop.f32.mrf.mxu0
  %v472 = vadd.f32 0.0, %v471
  %473 = vmatmul.f32.gmra.mxu0 %v290
  %v474 = vpop.f32.mrf.mxu0
  %v475 = vadd.f32 0.0, %v474
  %476 = vmatmul.f32.gmra.mxu0 %v293
  %v477 = vpop.f32.mrf.mxu0
  %v478 = vadd.f32 0.0, %v477
  %479 = vmatmul.f32.gmra.mxu0 %v296
  %v480 = vpop.f32.mrf.mxu0
  %v481 = vadd.f32 0.0, %v480
  %482 = vmatmul.f32.gmra.mxu0 %v299
  %v483 = vpop.f32.mrf.mxu0
  %v484 = vadd.f32 0.0, %v483
  %485 = vmatmul.f32.gmra.mxu0 %v302
  %v486 = vpop.f32.mrf.mxu0
  %v487 = vadd.f32 0.0, %v486
  %488 = vmatmul.f32.gmra.mxu0 %v305
  %v489 = vpop.f32.mrf.mxu0
  %v490 = vadd.f32 0.0, %v489
  %491 = vmatmul.f32.gmra.mxu0 %v308
  %v492 = vpop.f32.mrf.mxu0
  %v493 = vadd.f32 0.0, %v492
  %494 = vmatmul.f32.gmra.mxu0 %v311
  %v495 = vpop.f32.mrf.mxu0
  %v496 = vadd.f32 0.0, %v495
  %497 = vmatmul.f32.gmra.mxu0 %v314
  %v498 = vpop.f32.mrf.mxu0
  %v499 = vadd.f32 0.0, %v498
  %500 = vdwg.mxu0
  %v502 = vsel %vm147, %v27, 0
  %v505 = vsel %vm147, %v28, 0
  %v508 = vsel %vm147, %v29, 0
  %v511 = vsel %vm147, %v30, 0
  %v514 = vsel %vm147, %v31, 0
  %v517 = vsel %vm147, %v32, 0
  %v520 = vsel %vm147, %v33, 0
  %v523 = vsel %vm147, %v34, 0
  %v526 = vsel %vm147, %v35, 0
  %v529 = vsel %vm147, %v36, 0
  %v532 = vsel %vm147, %v37, 0
  %v535 = vsel %vm147, %v38, 0
  %v538 = vsel %vm147, %v39, 0
  %v541 = vsel %vm147, %v40, 0
  %v544 = vsel %vm147, %v41, 0
  %v547 = vsel %vm147, %v42, 0
  %v550 = vsel %vm147, %v43, 0
  %v553 = vsel %vm147, %v44, 0
  %v556 = vsel %vm147, %v45, 0
  %v559 = vsel %vm147, %v46, 0
  %v562 = vsel %vm147, %v47, 0
  %v565 = vsel %vm147, %v48, 0
  %v568 = vsel %vm147, %v49, 0
  %v571 = vsel %vm147, %v50, 0
  %v574 = vsel %vm147, %v51, 0
  %v577 = vsel %vm147, %v52, 0
  %v580 = vsel %vm147, %v53, 0
  %v583 = vsel %vm147, %v54, 0
  %v586 = vsel %vm147, %v55, 0
  %v589 = vsel %vm147, %v56, 0
  %v592 = vsel %vm147, %v57, 0
  %v595 = vsel %vm147, %v58, 0
  %v598 = vsel %vm147, %v59, 0
  %v601 = vsel %vm147, %v60, 0
  %v604 = vsel %vm147, %v61, 0
  %v607 = vsel %vm147, %v62, 0
  %v610 = vsel %vm147, %v63, 0
  %v613 = vsel %vm147, %v64, 0
  %v616 = vsel %vm147, %v65, 0
  %v619 = vsel %vm147, %v66, 0
  %v622 = vsel %vm147, %v67, 0
  %v625 = vsel %vm147, %v68, 0
  %v628 = vsel %vm147, %v69, 0
  %v631 = vsel %vm147, %v70, 0
  %v634 = vsel %vm147, %v71, 0
  %v637 = vsel %vm147, %v72, 0
  %v640 = vsel %vm147, %v73, 0
  %v643 = vsel %vm147, %v74, 0
  %v646 = vsel %vm147, %v75, 0
  %v649 = vsel %vm147, %v76, 0
  %v652 = vsel %vm147, %v77, 0
  %v655 = vsel %vm147, %v78, 0
  %v658 = vsel %vm147, %v79, 0
  %v661 = vsel %vm147, %v80, 0
  %v664 = vsel %vm147, %v81, 0
  %v667 = vsel %vm147, %v82, 0
  %669 = vmatpush.msra.mxu0 0.0
  %670 = vmatpush.msra.mxu0 0.0
  %671 = vmatpush.msra.mxu0 0.0
  %672 = vmatpush.msra.mxu0 0.0
  %673 = vmatpush.msra.mxu0 0.0
  %674 = vmatpush.msra.mxu0 0.0
  %675 = vmatpush.msra.mxu0 0.0
  %676 = vmatpush.msra.mxu0 0.0
  %677 = vmatpush.msra.mxu0 0.0
  %678 = vmatpush.msra.mxu0 0.0
  %679 = vmatpush.msra.mxu0 0.0
  %680 = vmatpush.msra.mxu0 0.0
  %681 = vmatpush.msra.mxu0 %v86
  %682 = vmatpush.msra.mxu0 %v85
  %683 = vmatpush.msra.mxu0 %v84
  %684 = vmatpush.msra.mxu0 %v83
  %685 = vmatmul.f32.gmra.mxu0 %v502
  %v686 = vpop.f32.mrf.mxu0
  %v687 = vadd.f32 %v334, %v686
  %688 = vmatmul.f32.gmra.mxu0 %v505
  %v689 = vpop.f32.mrf.mxu0
  %v690 = vadd.f32 %v337, %v689
  %691 = vmatmul.f32.gmra.mxu0 %v508
  %v692 = vpop.f32.mrf.mxu0
  %v693 = vadd.f32 %v340, %v692
  %694 = vmatmul.f32.gmra.mxu0 %v511
  %v695 = vpop.f32.mrf.mxu0
  %v696 = vadd.f32 %v343, %v695
  %697 = vmatmul.f32.gmra.mxu0 %v514
  %v698 = vpop.f32.mrf.mxu0
  %v699 = vadd.f32 %v346, %v698
  %700 = vmatmul.f32.gmra.mxu0 %v517
  %v701 = vpop.f32.mrf.mxu0
  %v702 = vadd.f32 %v349, %v701
  %703 = vmatmul.f32.gmra.mxu0 %v520
  %v704 = vpop.f32.mrf.mxu0
  %v705 = vadd.f32 %v352, %v704
  %706 = vmatmul.f32.gmra.mxu0 %v523
  %v707 = vpop.f32.mrf.mxu0
  %v708 = vadd.f32 %v355, %v707
  %709 = vmatmul.f32.gmra.mxu0 %v526
  %v710 = vpop.f32.mrf.mxu0
  %v711 = vadd.f32 %v358, %v710
  %712 = vmatmul.f32.gmra.mxu0 %v529
  %v713 = vpop.f32.mrf.mxu0
  %v714 = vadd.f32 %v361, %v713
  %715 = vmatmul.f32.gmra.mxu0 %v532
  %v716 = vpop.f32.mrf.mxu0
  %v717 = vadd.f32 %v364, %v716
  %718 = vmatmul.f32.gmra.mxu0 %v535
  %v719 = vpop.f32.mrf.mxu0
  %v720 = vadd.f32 %v367, %v719
  %721 = vmatmul.f32.gmra.mxu0 %v538
  %v722 = vpop.f32.mrf.mxu0
  %v723 = vadd.f32 %v370, %v722
  %724 = vmatmul.f32.gmra.mxu0 %v541
  %v725 = vpop.f32.mrf.mxu0
  %v726 = vadd.f32 %v373, %v725
  %727 = vmatmul.f32.gmra.mxu0 %v544
  %v728 = vpop.f32.mrf.mxu0
  %v729 = vadd.f32 %v376, %v728
  %730 = vmatmul.f32.gmra.mxu0 %v547
  %v731 = vpop.f32.mrf.mxu0
  %v732 = vadd.f32 %v379, %v731
  %733 = vmatmul.f32.gmra.mxu0 %v550
  %v734 = vpop.f32.mrf.mxu0
  %v735 = vadd.f32 %v382, %v734
  %736 = vmatmul.f32.gmra.mxu0 %v553
  %v737 = vpop.f32.mrf.mxu0
  %v738 = vadd.f32 %v385, %v737
  %739 = vmatmul.f32.gmra.mxu0 %v556
  %v740 = vpop.f32.mrf.mxu0
  %v741 = vadd.f32 %v388, %v740
  %742 = vmatmul.f32.gmra.mxu0 %v559
  %v743 = vpop.f32.mrf.mxu0
  %v744 = vadd.f32 %v391, %v743
  %745 = vmatmul.f32.gmra.mxu0 %v562
  %v746 = vpop.f32.mrf.mxu0
  %v747 = vadd.f32 %v394, %v746
  %748 = vmatmul.f32.gmra.mxu0 %v565
  %v749 = vpop.f32.mrf.mxu0
  %v750 = vadd.f32 %v397, %v749
  %751 = vmatmul.f32.gmra.mxu0 %v568
  %v752 = vpop.f32.mrf.mxu0
  %v753 = vadd.f32 %v400, %v752
  %754 = vmatmul.f32.gmra.mxu0 %v571
  %v755 = vpop.f32.mrf.mxu0
  %v756 = vadd.f32 %v403, %v755
  %757 = vmatmul.f32.gmra.mxu0 %v574
  %v758 = vpop.f32.mrf.mxu0
  %v759 = vadd.f32 %v406, %v758
  %760 = vmatmul.f32.gmra.mxu0 %v577
  %v761 = vpop.f32.mrf.mxu0
  %v762 = vadd.f32 %v409, %v761
  %763 = vmatmul.f32.gmra.mxu0 %v580
  %v764 = vpop.f32.mrf.mxu0
  %v765 = vadd.f32 %v412, %v764
  %766 = vmatmul.f32.gmra.mxu0 %v583
  %v767 = vpop.f32.mrf.mxu0
  %v768 = vadd.f32 %v415, %v767
  %769 = vmatmul.f32.gmra.mxu0 %v586
  %v770 = vpop.f32.mrf.mxu0
  %v771 = vadd.f32 %v418, %v770
  %772 = vmatmul.f32.gmra.mxu0 %v589
  %v773 = vpop.f32.mrf.mxu0
  %v774 = vadd.f32 %v421, %v773
  %775 = vmatmul.f32.gmra.mxu0 %v592
  %v776 = vpop.f32.mrf.mxu0
  %v777 = vadd.f32 %v424, %v776
  %778 = vmatmul.f32.gmra.mxu0 %v595
  %v779 = vpop.f32.mrf.mxu0
  %v780 = vadd.f32 %v427, %v779
  %781 = vmatmul.f32.gmra.mxu0 %v598
  %v782 = vpop.f32.mrf.mxu0
  %v783 = vadd.f32 %v430, %v782
  %784 = vmatmul.f32.gmra.mxu0 %v601
  %v785 = vpop.f32.mrf.mxu0
  %v786 = vadd.f32 %v433, %v785
  %787 = vmatmul.f32.gmra.mxu0 %v604
  %v788 = vpop.f32.mrf.mxu0
  %v789 = vadd.f32 %v436, %v788
  %790 = vmatmul.f32.gmra.mxu0 %v607
  %v791 = vpop.f32.mrf.mxu0
  %v792 = vadd.f32 %v439, %v791
  %793 = vmatmul.f32.gmra.mxu0 %v610
  %v794 = vpop.f32.mrf.mxu0
  %v795 = vadd.f32 %v442, %v794
  %796 = vmatmul.f32.gmra.mxu0 %v613
  %v797 = vpop.f32.mrf.mxu0
  %v798 = vadd.f32 %v445, %v797
  %799 = vmatmul.f32.gmra.mxu0 %v616
  %v800 = vpop.f32.mrf.mxu0
  %v801 = vadd.f32 %v448, %v800
  %802 = vmatmul.f32.gmra.mxu0 %v619
  %v803 = vpop.f32.mrf.mxu0
  %v804 = vadd.f32 %v451, %v803
  %805 = vmatmul.f32.gmra.mxu0 %v622
  %v806 = vpop.f32.mrf.mxu0
  %v807 = vadd.f32 %v454, %v806
  %808 = vmatmul.f32.gmra.mxu0 %v625
  %v809 = vpop.f32.mrf.mxu0
  %v810 = vadd.f32 %v457, %v809
  %811 = vmatmul.f32.gmra.mxu0 %v628
  %v812 = vpop.f32.mrf.mxu0
  %v813 = vadd.f32 %v460, %v812
  %814 = vmatmul.f32.gmra.mxu0 %v631
  %v815 = vpop.f32.mrf.mxu0
  %v816 = vadd.f32 %v463, %v815
  %817 = vmatmul.f32.gmra.mxu0 %v634
  %v818 = vpop.f32.mrf.mxu0
  %v819 = vadd.f32 %v466, %v818
  %820 = vmatmul.f32.gmra.mxu0 %v637
  %v821 = vpop.f32.mrf.mxu0
  %v822 = vadd.f32 %v469, %v821
  %823 = vmatmul.f32.gmra.mxu0 %v640
  %v824 = vpop.f32.mrf.mxu0
  %v825 = vadd.f32 %v472, %v824
  %826 = vmatmul.f32.gmra.mxu0 %v643
  %v827 = vpop.f32.mrf.mxu0
  %v828 = vadd.f32 %v475, %v827
  %829 = vmatmul.f32.gmra.mxu0 %v646
  %v830 = vpop.f32.mrf.mxu0
  %v831 = vadd.f32 %v478, %v830
  %832 = vmatmul.f32.gmra.mxu0 %v649
  %v833 = vpop.f32.mrf.mxu0
  %v834 = vadd.f32 %v481, %v833
  %835 = vmatmul.f32.gmra.mxu0 %v652
  %v836 = vpop.f32.mrf.mxu0
  %v837 = vadd.f32 %v484, %v836
  %838 = vmatmul.f32.gmra.mxu0 %v655
  %v839 = vpop.f32.mrf.mxu0
  %v840 = vadd.f32 %v487, %v839
  %841 = vmatmul.f32.gmra.mxu0 %v658
  %v842 = vpop.f32.mrf.mxu0
  %v843 = vadd.f32 %v490, %v842
  %844 = vmatmul.f32.gmra.mxu0 %v661
  %v845 = vpop.f32.mrf.mxu0
  %v846 = vadd.f32 %v493, %v845
  %847 = vmatmul.f32.gmra.mxu0 %v664
  %v848 = vpop.f32.mrf.mxu0
  %v849 = vadd.f32 %v496, %v848
  %850 = vmatmul.f32.gmra.mxu0 %v667
  %v851 = vpop.f32.mrf.mxu0
  %v852 = vadd.f32 %v499, %v851
  %853 = vdwg.mxu0
  %v854 = vld [vmem:[%s2] sm:$0xff]
  %v855 = vld [vmem:[%s2 + $0x8] sm:$0xff]
  %v856 = vld [vmem:[%s2 + $0x10] sm:$0xff]
  %v857 = vld [vmem:[%s2 + $0x18] sm:$0xff]
  %v858 = vld [vmem:[%s2 + $0x20] sm:$0xff]
  %v859 = vld [vmem:[%s2 + $0x28] sm:$0xff]
  %v860 = vld [vmem:[%s2 + $0x30] sm:$0xff]
  %v861 = vld [vmem:[%s2 + $0x38] sm:$0xff]
  %v862 = vld [vmem:[%s2 + $0x40] sm:$0xff]
  %v863 = vld [vmem:[%s2 + $0x48] sm:$0xff]
  %v864 = vld [vmem:[%s2 + $0x50] sm:$0xff]
  %v865 = vld [vmem:[%s2 + $0x58] sm:$0xff]
  %v866 = vld [vmem:[%s2 + $0x60] sm:$0xff]
  %v867 = vld [vmem:[%s2 + $0x68] sm:$0xff]
  %v868 = vld [vmem:[%s2 + $0x70] sm:$0xff]
  %v869 = vld [vmem:[%s2 + $0x78] sm:$0xff]
  %v870 = vld [vmem:[%s2 + $0x80] sm:$0xff]
  %v871 = vld [vmem:[%s2 + $0x88] sm:$0xff]
  %v872 = vld [vmem:[%s2 + $0x90] sm:$0xff]
  %v873 = vld [vmem:[%s2 + $0x98] sm:$0xff]
  %v874 = vld [vmem:[%s2 + $0xa0] sm:$0xff]
  %v875 = vld [vmem:[%s2 + $0xa8] sm:$0xff]
  %v876 = vld [vmem:[%s2 + $0xb0] sm:$0xff]
  %v877 = vld [vmem:[%s2 + $0xb8] sm:$0xff]
  %v878 = vld [vmem:[%s2 + $0xc0] sm:$0xff]
  %v879 = vld [vmem:[%s2 + $0xc8] sm:$0xff]
  %v880 = vld [vmem:[%s2 + $0xd0] sm:$0xff]
  %v881 = vld [vmem:[%s2 + $0xd8] sm:$0xff]
  %v882 = vld [vmem:[%s2 + $0xe0] sm:$0xff]
  %v883 = vld [vmem:[%s2 + $0xe8] sm:$0xff]
  %v884 = vld [vmem:[%s2 + $0xf0] sm:$0xff]
  %v885 = vld [vmem:[%s2 + $0xf8] sm:$0xff]
  %v886 = vld [vmem:[%s2 + $0x100] sm:$0xff]
  %v887 = vld [vmem:[%s2 + $0x108] sm:$0xff]
  %v888 = vld [vmem:[%s2 + $0x110] sm:$0xff]
  %v889 = vld [vmem:[%s2 + $0x118] sm:$0xff]
  %v890 = vld [vmem:[%s2 + $0x120] sm:$0xff]
  %v891 = vld [vmem:[%s2 + $0x128] sm:$0xff]
  %v892 = vld [vmem:[%s2 + $0x130] sm:$0xff]
  %v893 = vld [vmem:[%s2 + $0x138] sm:$0xff]
  %v894 = vld [vmem:[%s2 + $0x140] sm:$0xff]
  %v895 = vld [vmem:[%s2 + $0x148] sm:$0xff]
  %v896 = vld [vmem:[%s2 + $0x150] sm:$0xff]
  %v897 = vld [vmem:[%s2 + $0x158] sm:$0xff]
  %v898 = vld [vmem:[%s2 + $0x160] sm:$0xff]
  %v899 = vld [vmem:[%s2 + $0x168] sm:$0xff]
  %v900 = vld [vmem:[%s2 + $0x170] sm:$0xff]
  %v901 = vld [vmem:[%s2 + $0x178] sm:$0xff]
  %v902 = vld [vmem:[%s2 + $0x180] sm:$0xff]
  %v903 = vld [vmem:[%s2 + $0x188] sm:$0xff]
  %v904 = vld [vmem:[%s2 + $0x190] sm:$0xff]
  %v905 = vld [vmem:[%s2 + $0x198] sm:$0xff]
  %v906 = vld [vmem:[%s2 + $0x1a0] sm:$0xff]
  %v907 = vld [vmem:[%s2 + $0x1a8] sm:$0xff]
  %v908 = vld [vmem:[%s2 + $0x1b0] sm:$0xff]
  %v909 = vld [vmem:[%s2 + $0x1b8] sm:$0xff]
  %v910 = vld [vmem:[%s3 + $0x40] sm:$0xff]
  %v911 = vld [vmem:[%s3 + $0x48] sm:$0xff]
  %v912 = vld [vmem:[%s3 + $0x50] sm:$0xff]
  %v913 = vld [vmem:[%s3 + $0x58] sm:$0xff]
  %v915 = vsel %vm147, %v854, 0
  %v918 = vsel %vm147, %v855, 0
  %v921 = vsel %vm147, %v856, 0
  %v924 = vsel %vm147, %v857, 0
  %v927 = vsel %vm147, %v858, 0
  %v930 = vsel %vm147, %v859, 0
  %v933 = vsel %vm147, %v860, 0
  %v936 = vsel %vm147, %v861, 0
  %v939 = vsel %vm147, %v862, 0
  %v942 = vsel %vm147, %v863, 0
  %v945 = vsel %vm147, %v864, 0
  %v948 = vsel %vm147, %v865, 0
  %v951 = vsel %vm147, %v866, 0
  %v954 = vsel %vm147, %v867, 0
  %v957 = vsel %vm147, %v868, 0
  %v960 = vsel %vm147, %v869, 0
  %v963 = vsel %vm147, %v870, 0
  %v966 = vsel %vm147, %v871, 0
  %v969 = vsel %vm147, %v872, 0
  %v972 = vsel %vm147, %v873, 0
  %v975 = vsel %vm147, %v874, 0
  %v978 = vsel %vm147, %v875, 0
  %v981 = vsel %vm147, %v876, 0
  %v984 = vsel %vm147, %v877, 0
  %v987 = vsel %vm147, %v878, 0
  %v990 = vsel %vm147, %v879, 0
  %v993 = vsel %vm147, %v880, 0
  %v996 = vsel %vm147, %v881, 0
  %v999 = vsel %vm147, %v882, 0
  %v1002 = vsel %vm147, %v883, 0
  %v1005 = vsel %vm147, %v884, 0
  %v1008 = vsel %vm147, %v885, 0
  %v1011 = vsel %vm147, %v886, 0
  %v1014 = vsel %vm147, %v887, 0
  %v1017 = vsel %vm147, %v888, 0
  %v1020 = vsel %vm147, %v889, 0
  %v1023 = vsel %vm147, %v890, 0
  %v1026 = vsel %vm147, %v891, 0
  %v1029 = vsel %vm147, %v892, 0
  %v1032 = vsel %vm147, %v893, 0
  %v1035 = vsel %vm147, %v894, 0
  %v1038 = vsel %vm147, %v895, 0
  %v1041 = vsel %vm147, %v896, 0
  %v1044 = vsel %vm147, %v897, 0
  %v1047 = vsel %vm147, %v898, 0
  %v1050 = vsel %vm147, %v899, 0
  %v1053 = vsel %vm147, %v900, 0
  %v1056 = vsel %vm147, %v901, 0
  %v1059 = vsel %vm147, %v902, 0
  %v1062 = vsel %vm147, %v903, 0
  %v1065 = vsel %vm147, %v904, 0
  %v1068 = vsel %vm147, %v905, 0
  %v1071 = vsel %vm147, %v906, 0
  %v1074 = vsel %vm147, %v907, 0
  %v1077 = vsel %vm147, %v908, 0
  %v1080 = vsel %vm147, %v909, 0
  %1082 = vmatpush.msra.mxu0 0.0
  %1083 = vmatpush.msra.mxu0 0.0
  %1084 = vmatpush.msra.mxu0 0.0
  %1085 = vmatpush.msra.mxu0 0.0
  %1086 = vmatpush.msra.mxu0 0.0
  %1087 = vmatpush.msra.mxu0 0.0
  %1088 = vmatpush.msra.mxu0 0.0
  %1089 = vmatpush.msra.mxu0 0.0
  %1090 = vmatpush.msra.mxu0 0.0
  %1091 = vmatpush.msra.mxu0 0.0
  %1092 = vmatpush.msra.mxu0 0.0
  %1093 = vmatpush.msra.mxu0 0.0
  %1094 = vmatpush.msra.mxu0 %v913
  %1095 = vmatpush.msra.mxu0 %v912
  %1096 = vmatpush.msra.mxu0 %v911
  %1097 = vmatpush.msra.mxu0 %v910
  %1098 = vmatmul.f32.gmra.mxu0 %v915
  %v1099 = vpop.f32.mrf.mxu0
  %v1100 = vadd.f32 0.0, %v1099
  %1101 = vmatmul.f32.gmra.mxu0 %v918
  %v1102 = vpop.f32.mrf.mxu0
  %v1103 = vadd.f32 0.0, %v1102
  %1104 = vmatmul.f32.gmra.mxu0 %v921
  %v1105 = vpop.f32.mrf.mxu0
  %v1106 = vadd.f32 0.0, %v1105
  %1107 = vmatmul.f32.gmra.mxu0 %v924
  %v1108 = vpop.f32.mrf.mxu0
  %v1109 = vadd.f32 0.0, %v1108
  %1110 = vmatmul.f32.gmra.mxu0 %v927
  %v1111 = vpop.f32.mrf.mxu0
  %v1112 = vadd.f32 0.0, %v1111
  %1113 = vmatmul.f32.gmra.mxu0 %v930
  %v1114 = vpop.f32.mrf.mxu0
  %v1115 = vadd.f32 0.0, %v1114
  %1116 = vmatmul.f32.gmra.mxu0 %v933
  %v1117 = vpop.f32.mrf.mxu0
  %v1118 = vadd.f32 0.0, %v1117
  %1119 = vmatmul.f32.gmra.mxu0 %v936
  %v1120 = vpop.f32.mrf.mxu0
  %v1121 = vadd.f32 0.0, %v1120
  %1122 = vmatmul.f32.gmra.mxu0 %v939
  %v1123 = vpop.f32.mrf.mxu0
  %v1124 = vadd.f32 0.0, %v1123
  %1125 = vmatmul.f32.gmra.mxu0 %v942
  %v1126 = vpop.f32.mrf.mxu0
  %v1127 = vadd.f32 0.0, %v1126
  %1128 = vmatmul.f32.gmra.mxu0 %v945
  %v1129 = vpop.f32.mrf.mxu0
  %v1130 = vadd.f32 0.0, %v1129
  %1131 = vmatmul.f32.gmra.mxu0 %v948
  %v1132 = vpop.f32.mrf.mxu0
  %v1133 = vadd.f32 0.0, %v1132
  %1134 = vmatmul.f32.gmra.mxu0 %v951
  %v1135 = vpop.f32.mrf.mxu0
  %v1136 = vadd.f32 0.0, %v1135
  %1137 = vmatmul.f32.gmra.mxu0 %v954
  %v1138 = vpop.f32.mrf.mxu0
  %v1139 = vadd.f32 0.0, %v1138
  %1140 = vmatmul.f32.gmra.mxu0 %v957
  %v1141 = vpop.f32.mrf.mxu0
  %v1142 = vadd.f32 0.0, %v1141
  %1143 = vmatmul.f32.gmra.mxu0 %v960
  %v1144 = vpop.f32.mrf.mxu0
  %v1145 = vadd.f32 0.0, %v1144
  %1146 = vmatmul.f32.gmra.mxu0 %v963
  %v1147 = vpop.f32.mrf.mxu0
  %v1148 = vadd.f32 0.0, %v1147
  %1149 = vmatmul.f32.gmra.mxu0 %v966
  %v1150 = vpop.f32.mrf.mxu0
  %v1151 = vadd.f32 0.0, %v1150
  %1152 = vmatmul.f32.gmra.mxu0 %v969
  %v1153 = vpop.f32.mrf.mxu0
  %v1154 = vadd.f32 0.0, %v1153
  %1155 = vmatmul.f32.gmra.mxu0 %v972
  %v1156 = vpop.f32.mrf.mxu0
  %v1157 = vadd.f32 0.0, %v1156
  %1158 = vmatmul.f32.gmra.mxu0 %v975
  %v1159 = vpop.f32.mrf.mxu0
  %v1160 = vadd.f32 0.0, %v1159
  %1161 = vmatmul.f32.gmra.mxu0 %v978
  %v1162 = vpop.f32.mrf.mxu0
  %v1163 = vadd.f32 0.0, %v1162
  %1164 = vmatmul.f32.gmra.mxu0 %v981
  %v1165 = vpop.f32.mrf.mxu0
  %v1166 = vadd.f32 0.0, %v1165
  %1167 = vmatmul.f32.gmra.mxu0 %v984
  %v1168 = vpop.f32.mrf.mxu0
  %v1169 = vadd.f32 0.0, %v1168
  %1170 = vmatmul.f32.gmra.mxu0 %v987
  %v1171 = vpop.f32.mrf.mxu0
  %v1172 = vadd.f32 0.0, %v1171
  %1173 = vmatmul.f32.gmra.mxu0 %v990
  %v1174 = vpop.f32.mrf.mxu0
  %v1175 = vadd.f32 0.0, %v1174
  %1176 = vmatmul.f32.gmra.mxu0 %v993
  %v1177 = vpop.f32.mrf.mxu0
  %v1178 = vadd.f32 0.0, %v1177
  %1179 = vmatmul.f32.gmra.mxu0 %v996
  %v1180 = vpop.f32.mrf.mxu0
  %v1181 = vadd.f32 0.0, %v1180
  %1182 = vmatmul.f32.gmra.mxu0 %v999
  %v1183 = vpop.f32.mrf.mxu0
  %v1184 = vadd.f32 0.0, %v1183
  %1185 = vmatmul.f32.gmra.mxu0 %v1002
  %v1186 = vpop.f32.mrf.mxu0
  %v1187 = vadd.f32 0.0, %v1186
  %1188 = vmatmul.f32.gmra.mxu0 %v1005
  %v1189 = vpop.f32.mrf.mxu0
  %v1190 = vadd.f32 0.0, %v1189
  %1191 = vmatmul.f32.gmra.mxu0 %v1008
  %v1192 = vpop.f32.mrf.mxu0
  %v1193 = vadd.f32 0.0, %v1192
  %1194 = vmatmul.f32.gmra.mxu0 %v1011
  %v1195 = vpop.f32.mrf.mxu0
  %v1196 = vadd.f32 0.0, %v1195
  %1197 = vmatmul.f32.gmra.mxu0 %v1014
  %v1198 = vpop.f32.mrf.mxu0
  %v1199 = vadd.f32 0.0, %v1198
  %1200 = vmatmul.f32.gmra.mxu0 %v1017
  %v1201 = vpop.f32.mrf.mxu0
  %v1202 = vadd.f32 0.0, %v1201
  %1203 = vmatmul.f32.gmra.mxu0 %v1020
  %v1204 = vpop.f32.mrf.mxu0
  %v1205 = vadd.f32 0.0, %v1204
  %1206 = vmatmul.f32.gmra.mxu0 %v1023
  %v1207 = vpop.f32.mrf.mxu0
  %v1208 = vadd.f32 0.0, %v1207
  %1209 = vmatmul.f32.gmra.mxu0 %v1026
  %v1210 = vpop.f32.mrf.mxu0
  %v1211 = vadd.f32 0.0, %v1210
  %1212 = vmatmul.f32.gmra.mxu0 %v1029
  %v1213 = vpop.f32.mrf.mxu0
  %v1214 = vadd.f32 0.0, %v1213
  %1215 = vmatmul.f32.gmra.mxu0 %v1032
  %v1216 = vpop.f32.mrf.mxu0
  %v1217 = vadd.f32 0.0, %v1216
  %1218 = vmatmul.f32.gmra.mxu0 %v1035
  %v1219 = vpop.f32.mrf.mxu0
  %v1220 = vadd.f32 0.0, %v1219
  %1221 = vmatmul.f32.gmra.mxu0 %v1038
  %v1222 = vpop.f32.mrf.mxu0
  %v1223 = vadd.f32 0.0, %v1222
  %1224 = vmatmul.f32.gmra.mxu0 %v1041
  %v1225 = vpop.f32.mrf.mxu0
  %v1226 = vadd.f32 0.0, %v1225
  %1227 = vmatmul.f32.gmra.mxu0 %v1044
  %v1228 = vpop.f32.mrf.mxu0
  %v1229 = vadd.f32 0.0, %v1228
  %1230 = vmatmul.f32.gmra.mxu0 %v1047
  %v1231 = vpop.f32.mrf.mxu0
  %v1232 = vadd.f32 0.0, %v1231
  %1233 = vmatmul.f32.gmra.mxu0 %v1050
  %v1234 = vpop.f32.mrf.mxu0
  %v1235 = vadd.f32 0.0, %v1234
  %1236 = vmatmul.f32.gmra.mxu0 %v1053
  %v1237 = vpop.f32.mrf.mxu0
  %v1238 = vadd.f32 0.0, %v1237
  %1239 = vmatmul.f32.gmra.mxu0 %v1056
  %v1240 = vpop.f32.mrf.mxu0
  %v1241 = vadd.f32 0.0, %v1240
  %1242 = vmatmul.f32.gmra.mxu0 %v1059
  %v1243 = vpop.f32.mrf.mxu0
  %v1244 = vadd.f32 0.0, %v1243
  %1245 = vmatmul.f32.gmra.mxu0 %v1062
  %v1246 = vpop.f32.mrf.mxu0
  %v1247 = vadd.f32 0.0, %v1246
  %1248 = vmatmul.f32.gmra.mxu0 %v1065
  %v1249 = vpop.f32.mrf.mxu0
  %v1250 = vadd.f32 0.0, %v1249
  %1251 = vmatmul.f32.gmra.mxu0 %v1068
  %v1252 = vpop.f32.mrf.mxu0
  %v1253 = vadd.f32 0.0, %v1252
  %1254 = vmatmul.f32.gmra.mxu0 %v1071
  %v1255 = vpop.f32.mrf.mxu0
  %v1256 = vadd.f32 0.0, %v1255
  %1257 = vmatmul.f32.gmra.mxu0 %v1074
  %v1258 = vpop.f32.mrf.mxu0
  %v1259 = vadd.f32 0.0, %v1258
  %1260 = vmatmul.f32.gmra.mxu0 %v1077
  %v1261 = vpop.f32.mrf.mxu0
  %v1262 = vadd.f32 0.0, %v1261
  %1263 = vmatmul.f32.gmra.mxu0 %v1080
  %v1264 = vpop.f32.mrf.mxu0
  %v1265 = vadd.f32 0.0, %v1264
  %1266 = vdwg.mxu0
  %v1267 = vadd.f32 %v687, %v1100
  %v1268 = vadd.f32 %v690, %v1103
  %v1269 = vadd.f32 %v693, %v1106
  %v1270 = vadd.f32 %v696, %v1109
  %v1271 = vadd.f32 %v699, %v1112
  %v1272 = vadd.f32 %v702, %v1115
  %v1273 = vadd.f32 %v705, %v1118
  %v1274 = vadd.f32 %v708, %v1121
  %v1275 = vadd.f32 %v711, %v1124
  %v1276 = vadd.f32 %v714, %v1127
  %v1277 = vadd.f32 %v717, %v1130
  %v1278 = vadd.f32 %v720, %v1133
  %v1279 = vadd.f32 %v723, %v1136
  %v1280 = vadd.f32 %v726, %v1139
  %v1281 = vadd.f32 %v729, %v1142
  %v1282 = vadd.f32 %v732, %v1145
  %v1283 = vadd.f32 %v735, %v1148
  %v1284 = vadd.f32 %v738, %v1151
  %v1285 = vadd.f32 %v741, %v1154
  %v1286 = vadd.f32 %v744, %v1157
  %v1287 = vadd.f32 %v747, %v1160
  %v1288 = vadd.f32 %v750, %v1163
  %v1289 = vadd.f32 %v753, %v1166
  %v1290 = vadd.f32 %v756, %v1169
  %v1291 = vadd.f32 %v759, %v1172
  %v1292 = vadd.f32 %v762, %v1175
  %v1293 = vadd.f32 %v765, %v1178
  %v1294 = vadd.f32 %v768, %v1181
  %v1295 = vadd.f32 %v771, %v1184
  %v1296 = vadd.f32 %v774, %v1187
  %v1297 = vadd.f32 %v777, %v1190
  %v1298 = vadd.f32 %v780, %v1193
  %v1299 = vadd.f32 %v783, %v1196
  %v1300 = vadd.f32 %v786, %v1199
  %v1301 = vadd.f32 %v789, %v1202
  %v1302 = vadd.f32 %v792, %v1205
  %v1303 = vadd.f32 %v795, %v1208
  %v1304 = vadd.f32 %v798, %v1211
  %v1305 = vadd.f32 %v801, %v1214
  %v1306 = vadd.f32 %v804, %v1217
  %v1307 = vadd.f32 %v807, %v1220
  %v1308 = vadd.f32 %v810, %v1223
  %v1309 = vadd.f32 %v813, %v1226
  %v1310 = vadd.f32 %v816, %v1229
  %v1311 = vadd.f32 %v819, %v1232
  %v1312 = vadd.f32 %v822, %v1235
  %v1313 = vadd.f32 %v825, %v1238
  %v1314 = vadd.f32 %v828, %v1241
  %v1315 = vadd.f32 %v831, %v1244
  %v1316 = vadd.f32 %v834, %v1247
  %v1317 = vadd.f32 %v837, %v1250
  %v1318 = vadd.f32 %v840, %v1253
  %v1319 = vadd.f32 %v843, %v1256
  %v1320 = vadd.f32 %v846, %v1259
  %v1321 = vadd.f32 %v849, %v1262
  %v1322 = vadd.f32 %v852, %v1265
  %v1323 = vperm.slane %v26, 0
  %v1324 = vadd.f32 %v1267, %v1323
  %v1325 = vadd.f32 %v1268, %v1323
  %v1326 = vadd.f32 %v1269, %v1323
  %v1327 = vadd.f32 %v1270, %v1323
  %v1328 = vadd.f32 %v1271, %v1323
  %v1329 = vadd.f32 %v1272, %v1323
  %v1330 = vadd.f32 %v1273, %v1323
  %v1331 = vadd.f32 %v1274, %v1323
  %v1332 = vadd.f32 %v1275, %v1323
  %v1333 = vadd.f32 %v1276, %v1323
  %v1334 = vadd.f32 %v1277, %v1323
  %v1335 = vadd.f32 %v1278, %v1323
  %v1336 = vadd.f32 %v1279, %v1323
  %v1337 = vadd.f32 %v1280, %v1323
  %v1338 = vadd.f32 %v1281, %v1323
  %v1339 = vadd.f32 %v1282, %v1323
  %v1340 = vadd.f32 %v1283, %v1323
  %v1341 = vadd.f32 %v1284, %v1323
  %v1342 = vadd.f32 %v1285, %v1323
  %v1343 = vadd.f32 %v1286, %v1323
  %v1344 = vadd.f32 %v1287, %v1323
  %v1345 = vadd.f32 %v1288, %v1323
  %v1346 = vadd.f32 %v1289, %v1323
  %v1347 = vadd.f32 %v1290, %v1323
  %v1348 = vadd.f32 %v1291, %v1323
  %v1349 = vadd.f32 %v1292, %v1323
  %v1350 = vadd.f32 %v1293, %v1323
  %v1351 = vadd.f32 %v1294, %v1323
  %v1352 = vadd.f32 %v1295, %v1323
  %v1353 = vadd.f32 %v1296, %v1323
  %v1354 = vadd.f32 %v1297, %v1323
  %v1355 = vadd.f32 %v1298, %v1323
  %v1356 = vadd.f32 %v1299, %v1323
  %v1357 = vadd.f32 %v1300, %v1323
  %v1358 = vadd.f32 %v1301, %v1323
  %v1359 = vadd.f32 %v1302, %v1323
  %v1360 = vadd.f32 %v1303, %v1323
  %v1361 = vadd.f32 %v1304, %v1323
  %v1362 = vadd.f32 %v1305, %v1323
  %v1363 = vadd.f32 %v1306, %v1323
  %v1364 = vadd.f32 %v1307, %v1323
  %v1365 = vadd.f32 %v1308, %v1323
  %v1366 = vadd.f32 %v1309, %v1323
  %v1367 = vadd.f32 %v1310, %v1323
  %v1368 = vadd.f32 %v1311, %v1323
  %v1369 = vadd.f32 %v1312, %v1323
  %v1370 = vadd.f32 %v1313, %v1323
  %v1371 = vadd.f32 %v1314, %v1323
  %v1372 = vadd.f32 %v1315, %v1323
  %v1373 = vadd.f32 %v1316, %v1323
  %v1374 = vadd.f32 %v1317, %v1323
  %v1375 = vadd.f32 %v1318, %v1323
  %v1376 = vadd.f32 %v1319, %v1323
  %v1377 = vadd.f32 %v1320, %v1323
  %v1378 = vadd.f32 %v1321, %v1323
  %v1379 = vadd.f32 %v1322, %v1323
  %v1380 = vmax.f32 %v1324, 0.0
  %v1381 = vmax.f32 %v1325, 0.0
  %v1382 = vmax.f32 %v1326, 0.0
  %v1383 = vmax.f32 %v1327, 0.0
  %v1384 = vmax.f32 %v1328, 0.0
  %v1385 = vmax.f32 %v1329, 0.0
  %v1386 = vmax.f32 %v1330, 0.0
  %v1387 = vmax.f32 %v1331, 0.0
  %v1388 = vmax.f32 %v1332, 0.0
  %v1389 = vmax.f32 %v1333, 0.0
  %v1390 = vmax.f32 %v1334, 0.0
  %v1391 = vmax.f32 %v1335, 0.0
  %v1392 = vmax.f32 %v1336, 0.0
  %v1393 = vmax.f32 %v1337, 0.0
  %v1394 = vmax.f32 %v1338, 0.0
  %v1395 = vmax.f32 %v1339, 0.0
  %v1396 = vmax.f32 %v1340, 0.0
  %v1397 = vmax.f32 %v1341, 0.0
  %v1398 = vmax.f32 %v1342, 0.0
  %v1399 = vmax.f32 %v1343, 0.0
  %v1400 = vmax.f32 %v1344, 0.0
  %v1401 = vmax.f32 %v1345, 0.0
  %v1402 = vmax.f32 %v1346, 0.0
  %v1403 = vmax.f32 %v1347, 0.0
  %v1404 = vmax.f32 %v1348, 0.0
  %v1405 = vmax.f32 %v1349, 0.0
  %v1406 = vmax.f32 %v1350, 0.0
  %v1407 = vmax.f32 %v1351, 0.0
  %v1408 = vmax.f32 %v1352, 0.0
  %v1409 = vmax.f32 %v1353, 0.0
  %v1410 = vmax.f32 %v1354, 0.0
  %v1411 = vmax.f32 %v1355, 0.0
  %v1412 = vmax.f32 %v1356, 0.0
  %v1413 = vmax.f32 %v1357, 0.0
  %v1414 = vmax.f32 %v1358, 0.0
  %v1415 = vmax.f32 %v1359, 0.0
  %v1416 = vmax.f32 %v1360, 0.0
  %v1417 = vmax.f32 %v1361, 0.0
  %v1418 = vmax.f32 %v1362, 0.0
  %v1419 = vmax.f32 %v1363, 0.0
  %v1420 = vmax.f32 %v1364, 0.0
  %v1421 = vmax.f32 %v1365, 0.0
  %v1422 = vmax.f32 %v1366, 0.0
  %v1423 = vmax.f32 %v1367, 0.0
  %v1424 = vmax.f32 %v1368, 0.0
  %v1425 = vmax.f32 %v1369, 0.0
  %v1426 = vmax.f32 %v1370, 0.0
  %v1427 = vmax.f32 %v1371, 0.0
  %v1428 = vmax.f32 %v1372, 0.0
  %v1429 = vmax.f32 %v1373, 0.0
  %v1430 = vmax.f32 %v1374, 0.0
  %v1431 = vmax.f32 %v1375, 0.0
  %v1432 = vmax.f32 %v1376, 0.0
  %v1433 = vmax.f32 %v1377, 0.0
  %v1434 = vmax.f32 %v1378, 0.0
  %v1435 = vmax.f32 %v1379, 0.0
  %v1436 = vld [vmem:[%s4] sm:$0xff]
  %v1437 = vld [vmem:[%s4 + $0x8] sm:$0xff]
  %v1438 = vld [vmem:[%s4 + $0x10] sm:$0xff]
  %v1439 = vld [vmem:[%s4 + $0x18] sm:$0xff]
  %v1440 = vperm.slane %v26, 1
  %v1442 = vsel %vm147, %v1380, 0
  %v1445 = vsel %vm147, %v1381, 0
  %v1448 = vsel %vm147, %v1382, 0
  %v1451 = vsel %vm147, %v1383, 0
  %v1454 = vsel %vm147, %v1384, 0
  %v1457 = vsel %vm147, %v1385, 0
  %v1460 = vsel %vm147, %v1386, 0
  %v1463 = vsel %vm147, %v1387, 0
  %v1466 = vsel %vm147, %v1388, 0
  %v1469 = vsel %vm147, %v1389, 0
  %v1472 = vsel %vm147, %v1390, 0
  %v1475 = vsel %vm147, %v1391, 0
  %v1478 = vsel %vm147, %v1392, 0
  %v1481 = vsel %vm147, %v1393, 0
  %v1484 = vsel %vm147, %v1394, 0
  %v1487 = vsel %vm147, %v1395, 0
  %v1490 = vsel %vm147, %v1396, 0
  %v1493 = vsel %vm147, %v1397, 0
  %v1496 = vsel %vm147, %v1398, 0
  %v1499 = vsel %vm147, %v1399, 0
  %v1502 = vsel %vm147, %v1400, 0
  %v1505 = vsel %vm147, %v1401, 0
  %v1508 = vsel %vm147, %v1402, 0
  %v1511 = vsel %vm147, %v1403, 0
  %v1514 = vsel %vm147, %v1404, 0
  %v1517 = vsel %vm147, %v1405, 0
  %v1520 = vsel %vm147, %v1406, 0
  %v1523 = vsel %vm147, %v1407, 0
  %v1526 = vsel %vm147, %v1408, 0
  %v1529 = vsel %vm147, %v1409, 0
  %v1532 = vsel %vm147, %v1410, 0
  %v1535 = vsel %vm147, %v1411, 0
  %v1538 = vsel %vm147, %v1412, 0
  %v1541 = vsel %vm147, %v1413, 0
  %v1544 = vsel %vm147, %v1414, 0
  %v1547 = vsel %vm147, %v1415, 0
  %v1550 = vsel %vm147, %v1416, 0
  %v1553 = vsel %vm147, %v1417, 0
  %v1556 = vsel %vm147, %v1418, 0
  %v1559 = vsel %vm147, %v1419, 0
  %v1562 = vsel %vm147, %v1420, 0
  %v1565 = vsel %vm147, %v1421, 0
  %v1568 = vsel %vm147, %v1422, 0
  %v1571 = vsel %vm147, %v1423, 0
  %v1574 = vsel %vm147, %v1424, 0
  %v1577 = vsel %vm147, %v1425, 0
  %v1580 = vsel %vm147, %v1426, 0
  %v1583 = vsel %vm147, %v1427, 0
  %v1586 = vsel %vm147, %v1428, 0
  %v1589 = vsel %vm147, %v1429, 0
  %v1592 = vsel %vm147, %v1430, 0
  %v1595 = vsel %vm147, %v1431, 0
  %v1598 = vsel %vm147, %v1432, 0
  %v1601 = vsel %vm147, %v1433, 0
  %v1604 = vsel %vm147, %v1434, 0
  %v1607 = vsel %vm147, %v1435, 0
  %1609 = vmatpush.msra.mxu0 0.0
  %1610 = vmatpush.msra.mxu0 0.0
  %1611 = vmatpush.msra.mxu0 0.0
  %1612 = vmatpush.msra.mxu0 0.0
  %1613 = vmatpush.msra.mxu0 0.0
  %1614 = vmatpush.msra.mxu0 0.0
  %1615 = vmatpush.msra.mxu0 0.0
  %1616 = vmatpush.msra.mxu0 0.0
  %1617 = vmatpush.msra.mxu0 0.0
  %1618 = vmatpush.msra.mxu0 0.0
  %1619 = vmatpush.msra.mxu0 0.0
  %1620 = vmatpush.msra.mxu0 0.0
  %1621 = vmatpush.msra.mxu0 %v1439
  %1622 = vmatpush.msra.mxu0 %v1438
  %1623 = vmatpush.msra.mxu0 %v1437
  %1624 = vmatpush.msra.mxu0 %v1436
  %1625 = vmatmul.f32.gmra.mxu0 %v1442
  %v1626 = vpop.f32.mrf.mxu0
  %v1627 = vadd.f32 %v1440, %v1626
  %1628 = vmatmul.f32.gmra.mxu0 %v1445
  %v1629 = vpop.f32.mrf.mxu0
  %v1630 = vadd.f32 %v1440, %v1629
  %1631 = vmatmul.f32.gmra.mxu0 %v1448
  %v1632 = vpop.f32.mrf.mxu0
  %v1633 = vadd.f32 %v1440, %v1632
  %1634 = vmatmul.f32.gmra.mxu0 %v1451
  %v1635 = vpop.f32.mrf.mxu0
  %v1636 = vadd.f32 %v1440, %v1635
  %1637 = vmatmul.f32.gmra.mxu0 %v1454
  %v1638 = vpop.f32.mrf.mxu0
  %v1639 = vadd.f32 %v1440, %v1638
  %1640 = vmatmul.f32.gmra.mxu0 %v1457
  %v1641 = vpop.f32.mrf.mxu0
  %v1642 = vadd.f32 %v1440, %v1641
  %1643 = vmatmul.f32.gmra.mxu0 %v1460
  %v1644 = vpop.f32.mrf.mxu0
  %v1645 = vadd.f32 %v1440, %v1644
  %1646 = vmatmul.f32.gmra.mxu0 %v1463
  %v1647 = vpop.f32.mrf.mxu0
  %v1648 = vadd.f32 %v1440, %v1647
  %1649 = vmatmul.f32.gmra.mxu0 %v1466
  %v1650 = vpop.f32.mrf.mxu0
  %v1651 = vadd.f32 %v1440, %v1650
  %1652 = vmatmul.f32.gmra.mxu0 %v1469
  %v1653 = vpop.f32.mrf.mxu0
  %v1654 = vadd.f32 %v1440, %v1653
  %1655 = vmatmul.f32.gmra.mxu0 %v1472
  %v1656 = vpop.f32.mrf.mxu0
  %v1657 = vadd.f32 %v1440, %v1656
  %1658 = vmatmul.f32.gmra.mxu0 %v1475
  %v1659 = vpop.f32.mrf.mxu0
  %v1660 = vadd.f32 %v1440, %v1659
  %1661 = vmatmul.f32.gmra.mxu0 %v1478
  %v1662 = vpop.f32.mrf.mxu0
  %v1663 = vadd.f32 %v1440, %v1662
  %1664 = vmatmul.f32.gmra.mxu0 %v1481
  %v1665 = vpop.f32.mrf.mxu0
  %v1666 = vadd.f32 %v1440, %v1665
  %1667 = vmatmul.f32.gmra.mxu0 %v1484
  %v1668 = vpop.f32.mrf.mxu0
  %v1669 = vadd.f32 %v1440, %v1668
  %1670 = vmatmul.f32.gmra.mxu0 %v1487
  %v1671 = vpop.f32.mrf.mxu0
  %v1672 = vadd.f32 %v1440, %v1671
  %1673 = vmatmul.f32.gmra.mxu0 %v1490
  %v1674 = vpop.f32.mrf.mxu0
  %v1675 = vadd.f32 %v1440, %v1674
  %1676 = vmatmul.f32.gmra.mxu0 %v1493
  %v1677 = vpop.f32.mrf.mxu0
  %v1678 = vadd.f32 %v1440, %v1677
  %1679 = vmatmul.f32.gmra.mxu0 %v1496
  %v1680 = vpop.f32.mrf.mxu0
  %v1681 = vadd.f32 %v1440, %v1680
  %1682 = vmatmul.f32.gmra.mxu0 %v1499
  %v1683 = vpop.f32.mrf.mxu0
  %v1684 = vadd.f32 %v1440, %v1683
  %1685 = vmatmul.f32.gmra.mxu0 %v1502
  %v1686 = vpop.f32.mrf.mxu0
  %v1687 = vadd.f32 %v1440, %v1686
  %1688 = vmatmul.f32.gmra.mxu0 %v1505
  %v1689 = vpop.f32.mrf.mxu0
  %v1690 = vadd.f32 %v1440, %v1689
  %1691 = vmatmul.f32.gmra.mxu0 %v1508
  %v1692 = vpop.f32.mrf.mxu0
  %v1693 = vadd.f32 %v1440, %v1692
  %1694 = vmatmul.f32.gmra.mxu0 %v1511
  %v1695 = vpop.f32.mrf.mxu0
  %v1696 = vadd.f32 %v1440, %v1695
  %1697 = vmatmul.f32.gmra.mxu0 %v1514
  %v1698 = vpop.f32.mrf.mxu0
  %v1699 = vadd.f32 %v1440, %v1698
  %1700 = vmatmul.f32.gmra.mxu0 %v1517
  %v1701 = vpop.f32.mrf.mxu0
  %v1702 = vadd.f32 %v1440, %v1701
  %1703 = vmatmul.f32.gmra.mxu0 %v1520
  %v1704 = vpop.f32.mrf.mxu0
  %v1705 = vadd.f32 %v1440, %v1704
  %1706 = vmatmul.f32.gmra.mxu0 %v1523
  %v1707 = vpop.f32.mrf.mxu0
  %v1708 = vadd.f32 %v1440, %v1707
  %1709 = vmatmul.f32.gmra.mxu0 %v1526
  %v1710 = vpop.f32.mrf.mxu0
  %v1711 = vadd.f32 %v1440, %v1710
  %1712 = vmatmul.f32.gmra.mxu0 %v1529
  %v1713 = vpop.f32.mrf.mxu0
  %v1714 = vadd.f32 %v1440, %v1713
  %1715 = vmatmul.f32.gmra.mxu0 %v1532
  %v1716 = vpop.f32.mrf.mxu0
  %v1717 = vadd.f32 %v1440, %v1716
  %1718 = vmatmul.f32.gmra.mxu0 %v1535
  %v1719 = vpop.f32.mrf.mxu0
  %v1720 = vadd.f32 %v1440, %v1719
  %1721 = vmatmul.f32.gmra.mxu0 %v1538
  %v1722 = vpop.f32.mrf.mxu0
  %v1723 = vadd.f32 %v1440, %v1722
  %1724 = vmatmul.f32.gmra.mxu0 %v1541
  %v1725 = vpop.f32.mrf.mxu0
  %v1726 = vadd.f32 %v1440, %v1725
  %1727 = vmatmul.f32.gmra.mxu0 %v1544
  %v1728 = vpop.f32.mrf.mxu0
  %v1729 = vadd.f32 %v1440, %v1728
  %1730 = vmatmul.f32.gmra.mxu0 %v1547
  %v1731 = vpop.f32.mrf.mxu0
  %v1732 = vadd.f32 %v1440, %v1731
  %1733 = vmatmul.f32.gmra.mxu0 %v1550
  %v1734 = vpop.f32.mrf.mxu0
  %v1735 = vadd.f32 %v1440, %v1734
  %1736 = vmatmul.f32.gmra.mxu0 %v1553
  %v1737 = vpop.f32.mrf.mxu0
  %v1738 = vadd.f32 %v1440, %v1737
  %1739 = vmatmul.f32.gmra.mxu0 %v1556
  %v1740 = vpop.f32.mrf.mxu0
  %v1741 = vadd.f32 %v1440, %v1740
  %1742 = vmatmul.f32.gmra.mxu0 %v1559
  %v1743 = vpop.f32.mrf.mxu0
  %v1744 = vadd.f32 %v1440, %v1743
  %1745 = vmatmul.f32.gmra.mxu0 %v1562
  %v1746 = vpop.f32.mrf.mxu0
  %v1747 = vadd.f32 %v1440, %v1746
  %1748 = vmatmul.f32.gmra.mxu0 %v1565
  %v1749 = vpop.f32.mrf.mxu0
  %v1750 = vadd.f32 %v1440, %v1749
  %1751 = vmatmul.f32.gmra.mxu0 %v1568
  %v1752 = vpop.f32.mrf.mxu0
  %v1753 = vadd.f32 %v1440, %v1752
  %1754 = vmatmul.f32.gmra.mxu0 %v1571
  %v1755 = vpop.f32.mrf.mxu0
  %v1756 = vadd.f32 %v1440, %v1755
  %1757 = vmatmul.f32.gmra.mxu0 %v1574
  %v1758 = vpop.f32.mrf.mxu0
  %v1759 = vadd.f32 %v1440, %v1758
  %1760 = vmatmul.f32.gmra.mxu0 %v1577
  %v1761 = vpop.f32.mrf.mxu0
  %v1762 = vadd.f32 %v1440, %v1761
  %1763 = vmatmul.f32.gmra.mxu0 %v1580
  %v1764 = vpop.f32.mrf.mxu0
  %v1765 = vadd.f32 %v1440, %v1764
  %1766 = vmatmul.f32.gmra.mxu0 %v1583
  %v1767 = vpop.f32.mrf.mxu0
  %v1768 = vadd.f32 %v1440, %v1767
  %1769 = vmatmul.f32.gmra.mxu0 %v1586
  %v1770 = vpop.f32.mrf.mxu0
  %v1771 = vadd.f32 %v1440, %v1770
  %1772 = vmatmul.f32.gmra.mxu0 %v1589
  %v1773 = vpop.f32.mrf.mxu0
  %v1774 = vadd.f32 %v1440, %v1773
  %1775 = vmatmul.f32.gmra.mxu0 %v1592
  %v1776 = vpop.f32.mrf.mxu0
  %v1777 = vadd.f32 %v1440, %v1776
  %1778 = vmatmul.f32.gmra.mxu0 %v1595
  %v1779 = vpop.f32.mrf.mxu0
  %v1780 = vadd.f32 %v1440, %v1779
  %1781 = vmatmul.f32.gmra.mxu0 %v1598
  %v1782 = vpop.f32.mrf.mxu0
  %v1783 = vadd.f32 %v1440, %v1782
  %1784 = vmatmul.f32.gmra.mxu0 %v1601
  %v1785 = vpop.f32.mrf.mxu0
  %v1786 = vadd.f32 %v1440, %v1785
  %1787 = vmatmul.f32.gmra.mxu0 %v1604
  %v1788 = vpop.f32.mrf.mxu0
  %v1789 = vadd.f32 %v1440, %v1788
  %1790 = vmatmul.f32.gmra.mxu0 %v1607
  %v1791 = vpop.f32.mrf.mxu0
  %v1792 = vadd.f32 %v1440, %v1791
  %1793 = vdwg.mxu0
  %v1794 = vmax.f32 %v1627, 0.0
  %v1795 = vmax.f32 %v1630, 0.0
  %v1796 = vmax.f32 %v1633, 0.0
  %v1797 = vmax.f32 %v1636, 0.0
  %v1798 = vmax.f32 %v1639, 0.0
  %v1799 = vmax.f32 %v1642, 0.0
  %v1800 = vmax.f32 %v1645, 0.0
  %v1801 = vmax.f32 %v1648, 0.0
  %v1802 = vmax.f32 %v1651, 0.0
  %v1803 = vmax.f32 %v1654, 0.0
  %v1804 = vmax.f32 %v1657, 0.0
  %v1805 = vmax.f32 %v1660, 0.0
  %v1806 = vmax.f32 %v1663, 0.0
  %v1807 = vmax.f32 %v1666, 0.0
  %v1808 = vmax.f32 %v1669, 0.0
  %v1809 = vmax.f32 %v1672, 0.0
  %v1810 = vmax.f32 %v1675, 0.0
  %v1811 = vmax.f32 %v1678, 0.0
  %v1812 = vmax.f32 %v1681, 0.0
  %v1813 = vmax.f32 %v1684, 0.0
  %v1814 = vmax.f32 %v1687, 0.0
  %v1815 = vmax.f32 %v1690, 0.0
  %v1816 = vmax.f32 %v1693, 0.0
  %v1817 = vmax.f32 %v1696, 0.0
  %v1818 = vmax.f32 %v1699, 0.0
  %v1819 = vmax.f32 %v1702, 0.0
  %v1820 = vmax.f32 %v1705, 0.0
  %v1821 = vmax.f32 %v1708, 0.0
  %v1822 = vmax.f32 %v1711, 0.0
  %v1823 = vmax.f32 %v1714, 0.0
  %v1824 = vmax.f32 %v1717, 0.0
  %v1825 = vmax.f32 %v1720, 0.0
  %v1826 = vmax.f32 %v1723, 0.0
  %v1827 = vmax.f32 %v1726, 0.0
  %v1828 = vmax.f32 %v1729, 0.0
  %v1829 = vmax.f32 %v1732, 0.0
  %v1830 = vmax.f32 %v1735, 0.0
  %v1831 = vmax.f32 %v1738, 0.0
  %v1832 = vmax.f32 %v1741, 0.0
  %v1833 = vmax.f32 %v1744, 0.0
  %v1834 = vmax.f32 %v1747, 0.0
  %v1835 = vmax.f32 %v1750, 0.0
  %v1836 = vmax.f32 %v1753, 0.0
  %v1837 = vmax.f32 %v1756, 0.0
  %v1838 = vmax.f32 %v1759, 0.0
  %v1839 = vmax.f32 %v1762, 0.0
  %v1840 = vmax.f32 %v1765, 0.0
  %v1841 = vmax.f32 %v1768, 0.0
  %v1842 = vmax.f32 %v1771, 0.0
  %v1843 = vmax.f32 %v1774, 0.0
  %v1844 = vmax.f32 %v1777, 0.0
  %v1845 = vmax.f32 %v1780, 0.0
  %v1846 = vmax.f32 %v1783, 0.0
  %v1847 = vmax.f32 %v1786, 0.0
  %v1848 = vmax.f32 %v1789, 0.0
  %v1849 = vmax.f32 %v1792, 0.0
  %v1850 = vld [vmem:[%s5] sm:$0xff]
  %v1851 = vld [vmem:[%s5 + $0x8] sm:$0xff]
  %v1852 = vld [vmem:[%s5 + $0x10] sm:$0xff]
  %v1853 = vld [vmem:[%s5 + $0x18] sm:$0xff]
  %v1854 = vperm.slane %v26, 2
  %v1856 = vsel %vm147, %v1794, 0
  %v1859 = vsel %vm147, %v1795, 0
  %v1862 = vsel %vm147, %v1796, 0
  %v1865 = vsel %vm147, %v1797, 0
  %v1868 = vsel %vm147, %v1798, 0
  %v1871 = vsel %vm147, %v1799, 0
  %v1874 = vsel %vm147, %v1800, 0
  %v1877 = vsel %vm147, %v1801, 0
  %v1880 = vsel %vm147, %v1802, 0
  %v1883 = vsel %vm147, %v1803, 0
  %v1886 = vsel %vm147, %v1804, 0
  %v1889 = vsel %vm147, %v1805, 0
  %v1892 = vsel %vm147, %v1806, 0
  %v1895 = vsel %vm147, %v1807, 0
  %v1898 = vsel %vm147, %v1808, 0
  %v1901 = vsel %vm147, %v1809, 0
  %v1904 = vsel %vm147, %v1810, 0
  %v1907 = vsel %vm147, %v1811, 0
  %v1910 = vsel %vm147, %v1812, 0
  %v1913 = vsel %vm147, %v1813, 0
  %v1916 = vsel %vm147, %v1814, 0
  %v1919 = vsel %vm147, %v1815, 0
  %v1922 = vsel %vm147, %v1816, 0
  %v1925 = vsel %vm147, %v1817, 0
  %v1928 = vsel %vm147, %v1818, 0
  %v1931 = vsel %vm147, %v1819, 0
  %v1934 = vsel %vm147, %v1820, 0
  %v1937 = vsel %vm147, %v1821, 0
  %v1940 = vsel %vm147, %v1822, 0
  %v1943 = vsel %vm147, %v1823, 0
  %v1946 = vsel %vm147, %v1824, 0
  %v1949 = vsel %vm147, %v1825, 0
  %v1952 = vsel %vm147, %v1826, 0
  %v1955 = vsel %vm147, %v1827, 0
  %v1958 = vsel %vm147, %v1828, 0
  %v1961 = vsel %vm147, %v1829, 0
  %v1964 = vsel %vm147, %v1830, 0
  %v1967 = vsel %vm147, %v1831, 0
  %v1970 = vsel %vm147, %v1832, 0
  %v1973 = vsel %vm147, %v1833, 0
  %v1976 = vsel %vm147, %v1834, 0
  %v1979 = vsel %vm147, %v1835, 0
  %v1982 = vsel %vm147, %v1836, 0
  %v1985 = vsel %vm147, %v1837, 0
  %v1988 = vsel %vm147, %v1838, 0
  %v1991 = vsel %vm147, %v1839, 0
  %v1994 = vsel %vm147, %v1840, 0
  %v1997 = vsel %vm147, %v1841, 0
  %v2000 = vsel %vm147, %v1842, 0
  %v2003 = vsel %vm147, %v1843, 0
  %v2006 = vsel %vm147, %v1844, 0
  %v2009 = vsel %vm147, %v1845, 0
  %v2012 = vsel %vm147, %v1846, 0
  %v2015 = vsel %vm147, %v1847, 0
  %v2018 = vsel %vm147, %v1848, 0
  %v2021 = vsel %vm147, %v1849, 0
  %2023 = vmatpush.msra.mxu0 0.0
  %2024 = vmatpush.msra.mxu0 0.0
  %2025 = vmatpush.msra.mxu0 0.0
  %2026 = vmatpush.msra.mxu0 0.0
  %2027 = vmatpush.msra.mxu0 0.0
  %2028 = vmatpush.msra.mxu0 0.0
  %2029 = vmatpush.msra.mxu0 0.0
  %2030 = vmatpush.msra.mxu0 0.0
  %2031 = vmatpush.msra.mxu0 0.0
  %2032 = vmatpush.msra.mxu0 0.0
  %2033 = vmatpush.msra.mxu0 0.0
  %2034 = vmatpush.msra.mxu0 0.0
  %2035 = vmatpush.msra.mxu0 %v1853
  %2036 = vmatpush.msra.mxu0 %v1852
  %2037 = vmatpush.msra.mxu0 %v1851
  %2038 = vmatpush.msra.mxu0 %v1850
  %2039 = vmatmul.f32.gmra.mxu0 %v1856
  %v2040 = vpop.f32.mrf.mxu0
  %v2041 = vadd.f32 %v1854, %v2040
  %2042 = vmatmul.f32.gmra.mxu0 %v1859
  %v2043 = vpop.f32.mrf.mxu0
  %v2044 = vadd.f32 %v1854, %v2043
  %2045 = vmatmul.f32.gmra.mxu0 %v1862
  %v2046 = vpop.f32.mrf.mxu0
  %v2047 = vadd.f32 %v1854, %v2046
  %2048 = vmatmul.f32.gmra.mxu0 %v1865
  %v2049 = vpop.f32.mrf.mxu0
  %v2050 = vadd.f32 %v1854, %v2049
  %2051 = vmatmul.f32.gmra.mxu0 %v1868
  %v2052 = vpop.f32.mrf.mxu0
  %v2053 = vadd.f32 %v1854, %v2052
  %2054 = vmatmul.f32.gmra.mxu0 %v1871
  %v2055 = vpop.f32.mrf.mxu0
  %v2056 = vadd.f32 %v1854, %v2055
  %2057 = vmatmul.f32.gmra.mxu0 %v1874
  %v2058 = vpop.f32.mrf.mxu0
  %v2059 = vadd.f32 %v1854, %v2058
  %2060 = vmatmul.f32.gmra.mxu0 %v1877
  %v2061 = vpop.f32.mrf.mxu0
  %v2062 = vadd.f32 %v1854, %v2061
  %2063 = vmatmul.f32.gmra.mxu0 %v1880
  %v2064 = vpop.f32.mrf.mxu0
  %v2065 = vadd.f32 %v1854, %v2064
  %2066 = vmatmul.f32.gmra.mxu0 %v1883
  %v2067 = vpop.f32.mrf.mxu0
  %v2068 = vadd.f32 %v1854, %v2067
  %2069 = vmatmul.f32.gmra.mxu0 %v1886
  %v2070 = vpop.f32.mrf.mxu0
  %v2071 = vadd.f32 %v1854, %v2070
  %2072 = vmatmul.f32.gmra.mxu0 %v1889
  %v2073 = vpop.f32.mrf.mxu0
  %v2074 = vadd.f32 %v1854, %v2073
  %2075 = vmatmul.f32.gmra.mxu0 %v1892
  %v2076 = vpop.f32.mrf.mxu0
  %v2077 = vadd.f32 %v1854, %v2076
  %2078 = vmatmul.f32.gmra.mxu0 %v1895
  %v2079 = vpop.f32.mrf.mxu0
  %v2080 = vadd.f32 %v1854, %v2079
  %2081 = vmatmul.f32.gmra.mxu0 %v1898
  %v2082 = vpop.f32.mrf.mxu0
  %v2083 = vadd.f32 %v1854, %v2082
  %2084 = vmatmul.f32.gmra.mxu0 %v1901
  %v2085 = vpop.f32.mrf.mxu0
  %v2086 = vadd.f32 %v1854, %v2085
  %2087 = vmatmul.f32.gmra.mxu0 %v1904
  %v2088 = vpop.f32.mrf.mxu0
  %v2089 = vadd.f32 %v1854, %v2088
  %2090 = vmatmul.f32.gmra.mxu0 %v1907
  %v2091 = vpop.f32.mrf.mxu0
  %v2092 = vadd.f32 %v1854, %v2091
  %2093 = vmatmul.f32.gmra.mxu0 %v1910
  %v2094 = vpop.f32.mrf.mxu0
  %v2095 = vadd.f32 %v1854, %v2094
  %2096 = vmatmul.f32.gmra.mxu0 %v1913
  %v2097 = vpop.f32.mrf.mxu0
  %v2098 = vadd.f32 %v1854, %v2097
  %2099 = vmatmul.f32.gmra.mxu0 %v1916
  %v2100 = vpop.f32.mrf.mxu0
  %v2101 = vadd.f32 %v1854, %v2100
  %2102 = vmatmul.f32.gmra.mxu0 %v1919
  %v2103 = vpop.f32.mrf.mxu0
  %v2104 = vadd.f32 %v1854, %v2103
  %2105 = vmatmul.f32.gmra.mxu0 %v1922
  %v2106 = vpop.f32.mrf.mxu0
  %v2107 = vadd.f32 %v1854, %v2106
  %2108 = vmatmul.f32.gmra.mxu0 %v1925
  %v2109 = vpop.f32.mrf.mxu0
  %v2110 = vadd.f32 %v1854, %v2109
  %2111 = vmatmul.f32.gmra.mxu0 %v1928
  %v2112 = vpop.f32.mrf.mxu0
  %v2113 = vadd.f32 %v1854, %v2112
  %2114 = vmatmul.f32.gmra.mxu0 %v1931
  %v2115 = vpop.f32.mrf.mxu0
  %v2116 = vadd.f32 %v1854, %v2115
  %2117 = vmatmul.f32.gmra.mxu0 %v1934
  %v2118 = vpop.f32.mrf.mxu0
  %v2119 = vadd.f32 %v1854, %v2118
  %2120 = vmatmul.f32.gmra.mxu0 %v1937
  %v2121 = vpop.f32.mrf.mxu0
  %v2122 = vadd.f32 %v1854, %v2121
  %2123 = vmatmul.f32.gmra.mxu0 %v1940
  %v2124 = vpop.f32.mrf.mxu0
  %v2125 = vadd.f32 %v1854, %v2124
  %2126 = vmatmul.f32.gmra.mxu0 %v1943
  %v2127 = vpop.f32.mrf.mxu0
  %v2128 = vadd.f32 %v1854, %v2127
  %2129 = vmatmul.f32.gmra.mxu0 %v1946
  %v2130 = vpop.f32.mrf.mxu0
  %v2131 = vadd.f32 %v1854, %v2130
  %2132 = vmatmul.f32.gmra.mxu0 %v1949
  %v2133 = vpop.f32.mrf.mxu0
  %v2134 = vadd.f32 %v1854, %v2133
  %2135 = vmatmul.f32.gmra.mxu0 %v1952
  %v2136 = vpop.f32.mrf.mxu0
  %v2137 = vadd.f32 %v1854, %v2136
  %2138 = vmatmul.f32.gmra.mxu0 %v1955
  %v2139 = vpop.f32.mrf.mxu0
  %v2140 = vadd.f32 %v1854, %v2139
  %2141 = vmatmul.f32.gmra.mxu0 %v1958
  %v2142 = vpop.f32.mrf.mxu0
  %v2143 = vadd.f32 %v1854, %v2142
  %2144 = vmatmul.f32.gmra.mxu0 %v1961
  %v2145 = vpop.f32.mrf.mxu0
  %v2146 = vadd.f32 %v1854, %v2145
  %2147 = vmatmul.f32.gmra.mxu0 %v1964
  %v2148 = vpop.f32.mrf.mxu0
  %v2149 = vadd.f32 %v1854, %v2148
  %2150 = vmatmul.f32.gmra.mxu0 %v1967
  %v2151 = vpop.f32.mrf.mxu0
  %v2152 = vadd.f32 %v1854, %v2151
  %2153 = vmatmul.f32.gmra.mxu0 %v1970
  %v2154 = vpop.f32.mrf.mxu0
  %v2155 = vadd.f32 %v1854, %v2154
  %2156 = vmatmul.f32.gmra.mxu0 %v1973
  %v2157 = vpop.f32.mrf.mxu0
  %v2158 = vadd.f32 %v1854, %v2157
  %2159 = vmatmul.f32.gmra.mxu0 %v1976
  %v2160 = vpop.f32.mrf.mxu0
  %v2161 = vadd.f32 %v1854, %v2160
  %2162 = vmatmul.f32.gmra.mxu0 %v1979
  %v2163 = vpop.f32.mrf.mxu0
  %v2164 = vadd.f32 %v1854, %v2163
  %2165 = vmatmul.f32.gmra.mxu0 %v1982
  %v2166 = vpop.f32.mrf.mxu0
  %v2167 = vadd.f32 %v1854, %v2166
  %2168 = vmatmul.f32.gmra.mxu0 %v1985
  %v2169 = vpop.f32.mrf.mxu0
  %v2170 = vadd.f32 %v1854, %v2169
  %2171 = vmatmul.f32.gmra.mxu0 %v1988
  %v2172 = vpop.f32.mrf.mxu0
  %v2173 = vadd.f32 %v1854, %v2172
  %2174 = vmatmul.f32.gmra.mxu0 %v1991
  %v2175 = vpop.f32.mrf.mxu0
  %v2176 = vadd.f32 %v1854, %v2175
  %2177 = vmatmul.f32.gmra.mxu0 %v1994
  %v2178 = vpop.f32.mrf.mxu0
  %v2179 = vadd.f32 %v1854, %v2178
  %2180 = vmatmul.f32.gmra.mxu0 %v1997
  %v2181 = vpop.f32.mrf.mxu0
  %v2182 = vadd.f32 %v1854, %v2181
  %2183 = vmatmul.f32.gmra.mxu0 %v2000
  %v2184 = vpop.f32.mrf.mxu0
  %v2185 = vadd.f32 %v1854, %v2184
  %2186 = vmatmul.f32.gmra.mxu0 %v2003
  %v2187 = vpop.f32.mrf.mxu0
  %v2188 = vadd.f32 %v1854, %v2187
  %2189 = vmatmul.f32.gmra.mxu0 %v2006
  %v2190 = vpop.f32.mrf.mxu0
  %v2191 = vadd.f32 %v1854, %v2190
  %2192 = vmatmul.f32.gmra.mxu0 %v2009
  %v2193 = vpop.f32.mrf.mxu0
  %v2194 = vadd.f32 %v1854, %v2193
  %2195 = vmatmul.f32.gmra.mxu0 %v2012
  %v2196 = vpop.f32.mrf.mxu0
  %v2197 = vadd.f32 %v1854, %v2196
  %2198 = vmatmul.f32.gmra.mxu0 %v2015
  %v2199 = vpop.f32.mrf.mxu0
  %v2200 = vadd.f32 %v1854, %v2199
  %2201 = vmatmul.f32.gmra.mxu0 %v2018
  %v2202 = vpop.f32.mrf.mxu0
  %v2203 = vadd.f32 %v1854, %v2202
  %2204 = vmatmul.f32.gmra.mxu0 %v2021
  %v2205 = vpop.f32.mrf.mxu0
  %v2206 = vadd.f32 %v1854, %v2205
  %2207 = vdwg.mxu0
  %v2208 = vsel %vm147, %v2041, 0.0
  %2209 = vadd.xlane.f32.xlu0 %v2208
  %v2210 = vpop.xlane.xlu0 %2209
  %v2211 = vsel %vm147, %v2044, 0.0
  %2212 = vadd.xlane.f32.xlu0 %v2211
  %v2213 = vpop.xlane.xlu0 %2212
  %v2214 = vsel %vm147, %v2047, 0.0
  %2215 = vadd.xlane.f32.xlu0 %v2214
  %v2216 = vpop.xlane.xlu0 %2215
  %v2217 = vsel %vm147, %v2050, 0.0
  %2218 = vadd.xlane.f32.xlu0 %v2217
  %v2219 = vpop.xlane.xlu0 %2218
  %v2220 = vsel %vm147, %v2053, 0.0
  %2221 = vadd.xlane.f32.xlu0 %v2220
  %v2222 = vpop.xlane.xlu0 %2221
  %v2223 = vsel %vm147, %v2056, 0.0
  %2224 = vadd.xlane.f32.xlu0 %v2223
  %v2225 = vpop.xlane.xlu0 %2224
  %v2226 = vsel %vm147, %v2059, 0.0
  %2227 = vadd.xlane.f32.xlu0 %v2226
  %v2228 = vpop.xlane.xlu0 %2227
  %v2229 = vsel %vm147, %v2062, 0.0
  %2230 = vadd.xlane.f32.xlu0 %v2229
  %v2231 = vpop.xlane.xlu0 %2230
  %v2232 = vsel %vm147, %v2065, 0.0
  %2233 = vadd.xlane.f32.xlu0 %v2232
  %v2234 = vpop.xlane.xlu0 %2233
  %v2235 = vsel %vm147, %v2068, 0.0
  %2236 = vadd.xlane.f32.xlu0 %v2235
  %v2237 = vpop.xlane.xlu0 %2236
  %v2238 = vsel %vm147, %v2071, 0.0
  %2239 = vadd.xlane.f32.xlu0 %v2238
  %v2240 = vpop.xlane.xlu0 %2239
  %v2241 = vsel %vm147, %v2074, 0.0
  %2242 = vadd.xlane.f32.xlu0 %v2241
  %v2243 = vpop.xlane.xlu0 %2242
  %v2244 = vsel %vm147, %v2077, 0.0
  %2245 = vadd.xlane.f32.xlu0 %v2244
  %v2246 = vpop.xlane.xlu0 %2245
  %v2247 = vsel %vm147, %v2080, 0.0
  %2248 = vadd.xlane.f32.xlu0 %v2247
  %v2249 = vpop.xlane.xlu0 %2248
  %v2250 = vsel %vm147, %v2083, 0.0
  %2251 = vadd.xlane.f32.xlu0 %v2250
  %v2252 = vpop.xlane.xlu0 %2251
  %v2253 = vsel %vm147, %v2086, 0.0
  %2254 = vadd.xlane.f32.xlu0 %v2253
  %v2255 = vpop.xlane.xlu0 %2254
  %v2256 = vsel %vm147, %v2089, 0.0
  %2257 = vadd.xlane.f32.xlu0 %v2256
  %v2258 = vpop.xlane.xlu0 %2257
  %v2259 = vsel %vm147, %v2092, 0.0
  %2260 = vadd.xlane.f32.xlu0 %v2259
  %v2261 = vpop.xlane.xlu0 %2260
  %v2262 = vsel %vm147, %v2095, 0.0
  %2263 = vadd.xlane.f32.xlu0 %v2262
  %v2264 = vpop.xlane.xlu0 %2263
  %v2265 = vsel %vm147, %v2098, 0.0
  %2266 = vadd.xlane.f32.xlu0 %v2265
  %v2267 = vpop.xlane.xlu0 %2266
  %v2268 = vsel %vm147, %v2101, 0.0
  %2269 = vadd.xlane.f32.xlu0 %v2268
  %v2270 = vpop.xlane.xlu0 %2269
  %v2271 = vsel %vm147, %v2104, 0.0
  %2272 = vadd.xlane.f32.xlu0 %v2271
  %v2273 = vpop.xlane.xlu0 %2272
  %v2274 = vsel %vm147, %v2107, 0.0
  %2275 = vadd.xlane.f32.xlu0 %v2274
  %v2276 = vpop.xlane.xlu0 %2275
  %v2277 = vsel %vm147, %v2110, 0.0
  %2278 = vadd.xlane.f32.xlu0 %v2277
  %v2279 = vpop.xlane.xlu0 %2278
  %v2280 = vsel %vm147, %v2113, 0.0
  %2281 = vadd.xlane.f32.xlu0 %v2280
  %v2282 = vpop.xlane.xlu0 %2281
  %v2283 = vsel %vm147, %v2116, 0.0
  %2284 = vadd.xlane.f32.xlu0 %v2283
  %v2285 = vpop.xlane.xlu0 %2284
  %v2286 = vsel %vm147, %v2119, 0.0
  %2287 = vadd.xlane.f32.xlu0 %v2286
  %v2288 = vpop.xlane.xlu0 %2287
  %v2289 = vsel %vm147, %v2122, 0.0
  %2290 = vadd.xlane.f32.xlu0 %v2289
  %v2291 = vpop.xlane.xlu0 %2290
  %v2292 = vsel %vm147, %v2125, 0.0
  %2293 = vadd.xlane.f32.xlu0 %v2292
  %v2294 = vpop.xlane.xlu0 %2293
  %v2295 = vsel %vm147, %v2128, 0.0
  %2296 = vadd.xlane.f32.xlu0 %v2295
  %v2297 = vpop.xlane.xlu0 %2296
  %v2298 = vsel %vm147, %v2131, 0.0
  %2299 = vadd.xlane.f32.xlu0 %v2298
  %v2300 = vpop.xlane.xlu0 %2299
  %v2301 = vsel %vm147, %v2134, 0.0
  %2302 = vadd.xlane.f32.xlu0 %v2301
  %v2303 = vpop.xlane.xlu0 %2302
  %v2304 = vsel %vm147, %v2137, 0.0
  %2305 = vadd.xlane.f32.xlu0 %v2304
  %v2306 = vpop.xlane.xlu0 %2305
  %v2307 = vsel %vm147, %v2140, 0.0
  %2308 = vadd.xlane.f32.xlu0 %v2307
  %v2309 = vpop.xlane.xlu0 %2308
  %v2310 = vsel %vm147, %v2143, 0.0
  %2311 = vadd.xlane.f32.xlu0 %v2310
  %v2312 = vpop.xlane.xlu0 %2311
  %v2313 = vsel %vm147, %v2146, 0.0
  %2314 = vadd.xlane.f32.xlu0 %v2313
  %v2315 = vpop.xlane.xlu0 %2314
  %v2316 = vsel %vm147, %v2149, 0.0
  %2317 = vadd.xlane.f32.xlu0 %v2316
  %v2318 = vpop.xlane.xlu0 %2317
  %v2319 = vsel %vm147, %v2152, 0.0
  %2320 = vadd.xlane.f32.xlu0 %v2319
  %v2321 = vpop.xlane.xlu0 %2320
  %v2322 = vsel %vm147, %v2155, 0.0
  %2323 = vadd.xlane.f32.xlu0 %v2322
  %v2324 = vpop.xlane.xlu0 %2323
  %v2325 = vsel %vm147, %v2158, 0.0
  %2326 = vadd.xlane.f32.xlu0 %v2325
  %v2327 = vpop.xlane.xlu0 %2326
  %v2328 = vsel %vm147, %v2161, 0.0
  %2329 = vadd.xlane.f32.xlu0 %v2328
  %v2330 = vpop.xlane.xlu0 %2329
  %v2331 = vsel %vm147, %v2164, 0.0
  %2332 = vadd.xlane.f32.xlu0 %v2331
  %v2333 = vpop.xlane.xlu0 %2332
  %v2334 = vsel %vm147, %v2167, 0.0
  %2335 = vadd.xlane.f32.xlu0 %v2334
  %v2336 = vpop.xlane.xlu0 %2335
  %v2337 = vsel %vm147, %v2170, 0.0
  %2338 = vadd.xlane.f32.xlu0 %v2337
  %v2339 = vpop.xlane.xlu0 %2338
  %v2340 = vsel %vm147, %v2173, 0.0
  %2341 = vadd.xlane.f32.xlu0 %v2340
  %v2342 = vpop.xlane.xlu0 %2341
  %v2343 = vsel %vm147, %v2176, 0.0
  %2344 = vadd.xlane.f32.xlu0 %v2343
  %v2345 = vpop.xlane.xlu0 %2344
  %v2346 = vsel %vm147, %v2179, 0.0
  %2347 = vadd.xlane.f32.xlu0 %v2346
  %v2348 = vpop.xlane.xlu0 %2347
  %v2349 = vsel %vm147, %v2182, 0.0
  %2350 = vadd.xlane.f32.xlu0 %v2349
  %v2351 = vpop.xlane.xlu0 %2350
  %v2352 = vsel %vm147, %v2185, 0.0
  %2353 = vadd.xlane.f32.xlu0 %v2352
  %v2354 = vpop.xlane.xlu0 %2353
  %v2355 = vsel %vm147, %v2188, 0.0
  %2356 = vadd.xlane.f32.xlu0 %v2355
  %v2357 = vpop.xlane.xlu0 %2356
  %v2358 = vsel %vm147, %v2191, 0.0
  %2359 = vadd.xlane.f32.xlu0 %v2358
  %v2360 = vpop.xlane.xlu0 %2359
  %v2361 = vsel %vm147, %v2194, 0.0
  %2362 = vadd.xlane.f32.xlu0 %v2361
  %v2363 = vpop.xlane.xlu0 %2362
  %v2364 = vsel %vm147, %v2197, 0.0
  %2365 = vadd.xlane.f32.xlu0 %v2364
  %v2366 = vpop.xlane.xlu0 %2365
  %v2367 = vsel %vm147, %v2200, 0.0
  %2368 = vadd.xlane.f32.xlu0 %v2367
  %v2369 = vpop.xlane.xlu0 %2368
  %v2370 = vsel %vm147, %v2203, 0.0
  %2371 = vadd.xlane.f32.xlu0 %v2370
  %v2372 = vpop.xlane.xlu0 %2371
  %v2373 = vsel %vm147, %v2206, 0.0
  %2374 = vadd.xlane.f32.xlu0 %v2373
  %v2375 = vpop.xlane.xlu0 %2374
  %v2376 = vrcp.pop 32.0
  %v2377 = vmul.f32 32.0, %v2376
  %v2378 = vsub.f32 1.0, %v2377
  %v2379 = vmul.f32 %v2376, %v2378
  %v2380 = vadd.f32 %v2376, %v2379
  %vm2381 = vweird.f32 %v2376
  %v2382 = vsel %vm2381, %v2376, %v2380
  %v2383 = vmul.f32 %v2210, %v2382
  %v2384 = vmul.f32 %v2213, %v2382
  %v2385 = vmul.f32 %v2216, %v2382
  %v2386 = vmul.f32 %v2219, %v2382
  %v2387 = vmul.f32 %v2222, %v2382
  %v2388 = vmul.f32 %v2225, %v2382
  %v2389 = vmul.f32 %v2228, %v2382
  %v2390 = vmul.f32 %v2231, %v2382
  %v2391 = vmul.f32 %v2234, %v2382
  %v2392 = vmul.f32 %v2237, %v2382
  %v2393 = vmul.f32 %v2240, %v2382
  %v2394 = vmul.f32 %v2243, %v2382
  %v2395 = vmul.f32 %v2246, %v2382
  %v2396 = vmul.f32 %v2249, %v2382
  %v2397 = vmul.f32 %v2252, %v2382
  %v2398 = vmul.f32 %v2255, %v2382
  %v2399 = vmul.f32 %v2258, %v2382
  %v2400 = vmul.f32 %v2261, %v2382
  %v2401 = vmul.f32 %v2264, %v2382
  %v2402 = vmul.f32 %v2267, %v2382
  %v2403 = vmul.f32 %v2270, %v2382
  %v2404 = vmul.f32 %v2273, %v2382
  %v2405 = vmul.f32 %v2276, %v2382
  %v2406 = vmul.f32 %v2279, %v2382
  %v2407 = vmul.f32 %v2282, %v2382
  %v2408 = vmul.f32 %v2285, %v2382
  %v2409 = vmul.f32 %v2288, %v2382
  %v2410 = vmul.f32 %v2291, %v2382
  %v2411 = vmul.f32 %v2294, %v2382
  %v2412 = vmul.f32 %v2297, %v2382
  %v2413 = vmul.f32 %v2300, %v2382
  %v2414 = vmul.f32 %v2303, %v2382
  %v2415 = vmul.f32 %v2306, %v2382
  %v2416 = vmul.f32 %v2309, %v2382
  %v2417 = vmul.f32 %v2312, %v2382
  %v2418 = vmul.f32 %v2315, %v2382
  %v2419 = vmul.f32 %v2318, %v2382
  %v2420 = vmul.f32 %v2321, %v2382
  %v2421 = vmul.f32 %v2324, %v2382
  %v2422 = vmul.f32 %v2327, %v2382
  %v2423 = vmul.f32 %v2330, %v2382
  %v2424 = vmul.f32 %v2333, %v2382
  %v2425 = vmul.f32 %v2336, %v2382
  %v2426 = vmul.f32 %v2339, %v2382
  %v2427 = vmul.f32 %v2342, %v2382
  %v2428 = vmul.f32 %v2345, %v2382
  %v2429 = vmul.f32 %v2348, %v2382
  %v2430 = vmul.f32 %v2351, %v2382
  %v2431 = vmul.f32 %v2354, %v2382
  %v2432 = vmul.f32 %v2357, %v2382
  %v2433 = vmul.f32 %v2360, %v2382
  %v2434 = vmul.f32 %v2363, %v2382
  %v2435 = vmul.f32 %v2366, %v2382
  %v2436 = vmul.f32 %v2369, %v2382
  %v2437 = vmul.f32 %v2372, %v2382
  %v2438 = vmul.f32 %v2375, %v2382
  %v2439 = vsub.f32 %v2041, %v2383
  %v2440 = vsub.f32 %v2044, %v2384
  %v2441 = vsub.f32 %v2047, %v2385
  %v2442 = vsub.f32 %v2050, %v2386
  %v2443 = vsub.f32 %v2053, %v2387
  %v2444 = vsub.f32 %v2056, %v2388
  %v2445 = vsub.f32 %v2059, %v2389
  %v2446 = vsub.f32 %v2062, %v2390
  %v2447 = vsub.f32 %v2065, %v2391
  %v2448 = vsub.f32 %v2068, %v2392
  %v2449 = vsub.f32 %v2071, %v2393
  %v2450 = vsub.f32 %v2074, %v2394
  %v2451 = vsub.f32 %v2077, %v2395
  %v2452 = vsub.f32 %v2080, %v2396
  %v2453 = vsub.f32 %v2083, %v2397
  %v2454 = vsub.f32 %v2086, %v2398
  %v2455 = vsub.f32 %v2089, %v2399
  %v2456 = vsub.f32 %v2092, %v2400
  %v2457 = vsub.f32 %v2095, %v2401
  %v2458 = vsub.f32 %v2098, %v2402
  %v2459 = vsub.f32 %v2101, %v2403
  %v2460 = vsub.f32 %v2104, %v2404
  %v2461 = vsub.f32 %v2107, %v2405
  %v2462 = vsub.f32 %v2110, %v2406
  %v2463 = vsub.f32 %v2113, %v2407
  %v2464 = vsub.f32 %v2116, %v2408
  %v2465 = vsub.f32 %v2119, %v2409
  %v2466 = vsub.f32 %v2122, %v2410
  %v2467 = vsub.f32 %v2125, %v2411
  %v2468 = vsub.f32 %v2128, %v2412
  %v2469 = vsub.f32 %v2131, %v2413
  %v2470 = vsub.f32 %v2134, %v2414
  %v2471 = vsub.f32 %v2137, %v2415
  %v2472 = vsub.f32 %v2140, %v2416
  %v2473 = vsub.f32 %v2143, %v2417
  %v2474 = vsub.f32 %v2146, %v2418
  %v2475 = vsub.f32 %v2149, %v2419
  %v2476 = vsub.f32 %v2152, %v2420
  %v2477 = vsub.f32 %v2155, %v2421
  %v2478 = vsub.f32 %v2158, %v2422
  %v2479 = vsub.f32 %v2161, %v2423
  %v2480 = vsub.f32 %v2164, %v2424
  %v2481 = vsub.f32 %v2167, %v2425
  %v2482 = vsub.f32 %v2170, %v2426
  %v2483 = vsub.f32 %v2173, %v2427
  %v2484 = vsub.f32 %v2176, %v2428
  %v2485 = vsub.f32 %v2179, %v2429
  %v2486 = vsub.f32 %v2182, %v2430
  %v2487 = vsub.f32 %v2185, %v2431
  %v2488 = vsub.f32 %v2188, %v2432
  %v2489 = vsub.f32 %v2191, %v2433
  %v2490 = vsub.f32 %v2194, %v2434
  %v2491 = vsub.f32 %v2197, %v2435
  %v2492 = vsub.f32 %v2200, %v2436
  %v2493 = vsub.f32 %v2203, %v2437
  %v2494 = vsub.f32 %v2206, %v2438
  %v2495 = vmul.f32 %v2439, %v2439
  %v2496 = vmul.f32 %v2440, %v2440
  %v2497 = vmul.f32 %v2441, %v2441
  %v2498 = vmul.f32 %v2442, %v2442
  %v2499 = vmul.f32 %v2443, %v2443
  %v2500 = vmul.f32 %v2444, %v2444
  %v2501 = vmul.f32 %v2445, %v2445
  %v2502 = vmul.f32 %v2446, %v2446
  %v2503 = vmul.f32 %v2447, %v2447
  %v2504 = vmul.f32 %v2448, %v2448
  %v2505 = vmul.f32 %v2449, %v2449
  %v2506 = vmul.f32 %v2450, %v2450
  %v2507 = vmul.f32 %v2451, %v2451
  %v2508 = vmul.f32 %v2452, %v2452
  %v2509 = vmul.f32 %v2453, %v2453
  %v2510 = vmul.f32 %v2454, %v2454
  %v2511 = vmul.f32 %v2455, %v2455
  %v2512 = vmul.f32 %v2456, %v2456
  %v2513 = vmul.f32 %v2457, %v2457
  %v2514 = vmul.f32 %v2458, %v2458
  %v2515 = vmul.f32 %v2459, %v2459
  %v2516 = vmul.f32 %v2460, %v2460
  %v2517 = vmul.f32 %v2461, %v2461
  %v2518 = vmul.f32 %v2462, %v2462
  %v2519 = vmul.f32 %v2463, %v2463
  %v2520 = vmul.f32 %v2464, %v2464
  %v2521 = vmul.f32 %v2465, %v2465
  %v2522 = vmul.f32 %v2466, %v2466
  %v2523 = vmul.f32 %v2467, %v2467
  %v2524 = vmul.f32 %v2468, %v2468
  %v2525 = vmul.f32 %v2469, %v2469
  %v2526 = vmul.f32 %v2470, %v2470
  %v2527 = vmul.f32 %v2471, %v2471
  %v2528 = vmul.f32 %v2472, %v2472
  %v2529 = vmul.f32 %v2473, %v2473
  %v2530 = vmul.f32 %v2474, %v2474
  %v2531 = vmul.f32 %v2475, %v2475
  %v2532 = vmul.f32 %v2476, %v2476
  %v2533 = vmul.f32 %v2477, %v2477
  %v2534 = vmul.f32 %v2478, %v2478
  %v2535 = vmul.f32 %v2479, %v2479
  %v2536 = vmul.f32 %v2480, %v2480
  %v2537 = vmul.f32 %v2481, %v2481
  %v2538 = vmul.f32 %v2482, %v2482
  %v2539 = vmul.f32 %v2483, %v2483
  %v2540 = vmul.f32 %v2484, %v2484
  %v2541 = vmul.f32 %v2485, %v2485
  %v2542 = vmul.f32 %v2486, %v2486
  %v2543 = vmul.f32 %v2487, %v2487
  %v2544 = vmul.f32 %v2488, %v2488
  %v2545 = vmul.f32 %v2489, %v2489
  %v2546 = vmul.f32 %v2490, %v2490
  %v2547 = vmul.f32 %v2491, %v2491
  %v2548 = vmul.f32 %v2492, %v2492
  %v2549 = vmul.f32 %v2493, %v2493
  %v2550 = vmul.f32 %v2494, %v2494
  %v2551 = vsel %vm147, %v2495, 0.0
  %2552 = vadd.xlane.f32.xlu0 %v2551
  %v2553 = vpop.xlane.xlu0 %2552
  %v2554 = vsel %vm147, %v2496, 0.0
  %2555 = vadd.xlane.f32.xlu0 %v2554
  %v2556 = vpop.xlane.xlu0 %2555
  %v2557 = vsel %vm147, %v2497, 0.0
  %2558 = vadd.xlane.f32.xlu0 %v2557
  %v2559 = vpop.xlane.xlu0 %2558
  %v2560 = vsel %vm147, %v2498, 0.0
  %2561 = vadd.xlane.f32.xlu0 %v2560
  %v2562 = vpop.xlane.xlu0 %2561
  %v2563 = vsel %vm147, %v2499, 0.0
  %2564 = vadd.xlane.f32.xlu0 %v2563
  %v2565 = vpop.xlane.xlu0 %2564
  %v2566 = vsel %vm147, %v2500, 0.0
  %2567 = vadd.xlane.f32.xlu0 %v2566
  %v2568 = vpop.xlane.xlu0 %2567
  %v2569 = vsel %vm147, %v2501, 0.0
  %2570 = vadd.xlane.f32.xlu0 %v2569
  %v2571 = vpop.xlane.xlu0 %2570
  %v2572 = vsel %vm147, %v2502, 0.0
  %2573 = vadd.xlane.f32.xlu0 %v2572
  %v2574 = vpop.xlane.xlu0 %2573
  %v2575 = vsel %vm147, %v2503, 0.0
  %2576 = vadd.xlane.f32.xlu0 %v2575
  %v2577 = vpop.xlane.xlu0 %2576
  %v2578 = vsel %vm147, %v2504, 0.0
  %2579 = vadd.xlane.f32.xlu0 %v2578
  %v2580 = vpop.xlane.xlu0 %2579
  %v2581 = vsel %vm147, %v2505, 0.0
  %2582 = vadd.xlane.f32.xlu0 %v2581
  %v2583 = vpop.xlane.xlu0 %2582
  %v2584 = vsel %vm147, %v2506, 0.0
  %2585 = vadd.xlane.f32.xlu0 %v2584
  %v2586 = vpop.xlane.xlu0 %2585
  %v2587 = vsel %vm147, %v2507, 0.0
  %2588 = vadd.xlane.f32.xlu0 %v2587
  %v2589 = vpop.xlane.xlu0 %2588
  %v2590 = vsel %vm147, %v2508, 0.0
  %2591 = vadd.xlane.f32.xlu0 %v2590
  %v2592 = vpop.xlane.xlu0 %2591
  %v2593 = vsel %vm147, %v2509, 0.0
  %2594 = vadd.xlane.f32.xlu0 %v2593
  %v2595 = vpop.xlane.xlu0 %2594
  %v2596 = vsel %vm147, %v2510, 0.0
  %2597 = vadd.xlane.f32.xlu0 %v2596
  %v2598 = vpop.xlane.xlu0 %2597
  %v2599 = vsel %vm147, %v2511, 0.0
  %2600 = vadd.xlane.f32.xlu0 %v2599
  %v2601 = vpop.xlane.xlu0 %2600
  %v2602 = vsel %vm147, %v2512, 0.0
  %2603 = vadd.xlane.f32.xlu0 %v2602
  %v2604 = vpop.xlane.xlu0 %2603
  %v2605 = vsel %vm147, %v2513, 0.0
  %2606 = vadd.xlane.f32.xlu0 %v2605
  %v2607 = vpop.xlane.xlu0 %2606
  %v2608 = vsel %vm147, %v2514, 0.0
  %2609 = vadd.xlane.f32.xlu0 %v2608
  %v2610 = vpop.xlane.xlu0 %2609
  %v2611 = vsel %vm147, %v2515, 0.0
  %2612 = vadd.xlane.f32.xlu0 %v2611
  %v2613 = vpop.xlane.xlu0 %2612
  %v2614 = vsel %vm147, %v2516, 0.0
  %2615 = vadd.xlane.f32.xlu0 %v2614
  %v2616 = vpop.xlane.xlu0 %2615
  %v2617 = vsel %vm147, %v2517, 0.0
  %2618 = vadd.xlane.f32.xlu0 %v2617
  %v2619 = vpop.xlane.xlu0 %2618
  %v2620 = vsel %vm147, %v2518, 0.0
  %2621 = vadd.xlane.f32.xlu0 %v2620
  %v2622 = vpop.xlane.xlu0 %2621
  %v2623 = vsel %vm147, %v2519, 0.0
  %2624 = vadd.xlane.f32.xlu0 %v2623
  %v2625 = vpop.xlane.xlu0 %2624
  %v2626 = vsel %vm147, %v2520, 0.0
  %2627 = vadd.xlane.f32.xlu0 %v2626
  %v2628 = vpop.xlane.xlu0 %2627
  %v2629 = vsel %vm147, %v2521, 0.0
  %2630 = vadd.xlane.f32.xlu0 %v2629
  %v2631 = vpop.xlane.xlu0 %2630
  %v2632 = vsel %vm147, %v2522, 0.0
  %2633 = vadd.xlane.f32.xlu0 %v2632
  %v2634 = vpop.xlane.xlu0 %2633
  %v2635 = vsel %vm147, %v2523, 0.0
  %2636 = vadd.xlane.f32.xlu0 %v2635
  %v2637 = vpop.xlane.xlu0 %2636
  %v2638 = vsel %vm147, %v2524, 0.0
  %2639 = vadd.xlane.f32.xlu0 %v2638
  %v2640 = vpop.xlane.xlu0 %2639
  %v2641 = vsel %vm147, %v2525, 0.0
  %2642 = vadd.xlane.f32.xlu0 %v2641
  %v2643 = vpop.xlane.xlu0 %2642
  %v2644 = vsel %vm147, %v2526, 0.0
  %2645 = vadd.xlane.f32.xlu0 %v2644
  %v2646 = vpop.xlane.xlu0 %2645
  %v2647 = vsel %vm147, %v2527, 0.0
  %2648 = vadd.xlane.f32.xlu0 %v2647
  %v2649 = vpop.xlane.xlu0 %2648
  %v2650 = vsel %vm147, %v2528, 0.0
  %2651 = vadd.xlane.f32.xlu0 %v2650
  %v2652 = vpop.xlane.xlu0 %2651
  %v2653 = vsel %vm147, %v2529, 0.0
  %2654 = vadd.xlane.f32.xlu0 %v2653
  %v2655 = vpop.xlane.xlu0 %2654
  %v2656 = vsel %vm147, %v2530, 0.0
  %2657 = vadd.xlane.f32.xlu0 %v2656
  %v2658 = vpop.xlane.xlu0 %2657
  %v2659 = vsel %vm147, %v2531, 0.0
  %2660 = vadd.xlane.f32.xlu0 %v2659
  %v2661 = vpop.xlane.xlu0 %2660
  %v2662 = vsel %vm147, %v2532, 0.0
  %2663 = vadd.xlane.f32.xlu0 %v2662
  %v2664 = vpop.xlane.xlu0 %2663
  %v2665 = vsel %vm147, %v2533, 0.0
  %2666 = vadd.xlane.f32.xlu0 %v2665
  %v2667 = vpop.xlane.xlu0 %2666
  %v2668 = vsel %vm147, %v2534, 0.0
  %2669 = vadd.xlane.f32.xlu0 %v2668
  %v2670 = vpop.xlane.xlu0 %2669
  %v2671 = vsel %vm147, %v2535, 0.0
  %2672 = vadd.xlane.f32.xlu0 %v2671
  %v2673 = vpop.xlane.xlu0 %2672
  %v2674 = vsel %vm147, %v2536, 0.0
  %2675 = vadd.xlane.f32.xlu0 %v2674
  %v2676 = vpop.xlane.xlu0 %2675
  %v2677 = vsel %vm147, %v2537, 0.0
  %2678 = vadd.xlane.f32.xlu0 %v2677
  %v2679 = vpop.xlane.xlu0 %2678
  %v2680 = vsel %vm147, %v2538, 0.0
  %2681 = vadd.xlane.f32.xlu0 %v2680
  %v2682 = vpop.xlane.xlu0 %2681
  %v2683 = vsel %vm147, %v2539, 0.0
  %2684 = vadd.xlane.f32.xlu0 %v2683
  %v2685 = vpop.xlane.xlu0 %2684
  %v2686 = vsel %vm147, %v2540, 0.0
  %2687 = vadd.xlane.f32.xlu0 %v2686
  %v2688 = vpop.xlane.xlu0 %2687
  %v2689 = vsel %vm147, %v2541, 0.0
  %2690 = vadd.xlane.f32.xlu0 %v2689
  %v2691 = vpop.xlane.xlu0 %2690
  %v2692 = vsel %vm147, %v2542, 0.0
  %2693 = vadd.xlane.f32.xlu0 %v2692
  %v2694 = vpop.xlane.xlu0 %2693
  %v2695 = vsel %vm147, %v2543, 0.0
  %2696 = vadd.xlane.f32.xlu0 %v2695
  %v2697 = vpop.xlane.xlu0 %2696
  %v2698 = vsel %vm147, %v2544, 0.0
  %2699 = vadd.xlane.f32.xlu0 %v2698
  %v2700 = vpop.xlane.xlu0 %2699
  %v2701 = vsel %vm147, %v2545, 0.0
  %2702 = vadd.xlane.f32.xlu0 %v2701
  %v2703 = vpop.xlane.xlu0 %2702
  %v2704 = vsel %vm147, %v2546, 0.0
  %2705 = vadd.xlane.f32.xlu0 %v2704
  %v2706 = vpop.xlane.xlu0 %2705
  %v2707 = vsel %vm147, %v2547, 0.0
  %2708 = vadd.xlane.f32.xlu0 %v2707
  %v2709 = vpop.xlane.xlu0 %2708
  %v2710 = vsel %vm147, %v2548, 0.0
  %2711 = vadd.xlane.f32.xlu0 %v2710
  %v2712 = vpop.xlane.xlu0 %2711
  %v2713 = vsel %vm147, %v2549, 0.0
  %2714 = vadd.xlane.f32.xlu0 %v2713
  %v2715 = vpop.xlane.xlu0 %2714
  %v2716 = vsel %vm147, %v2550, 0.0
  %2717 = vadd.xlane.f32.xlu0 %v2716
  %v2718 = vpop.xlane.xlu0 %2717
  %v2719 = vmul.f32 %v2553, %v2382
  %v2720 = vmul.f32 %v2556, %v2382
  %v2721 = vmul.f32 %v2559, %v2382
  %v2722 = vmul.f32 %v2562, %v2382
  %v2723 = vmul.f32 %v2565, %v2382
  %v2724 = vmul.f32 %v2568, %v2382
  %v2725 = vmul.f32 %v2571, %v2382
  %v2726 = vmul.f32 %v2574, %v2382
  %v2727 = vmul.f32 %v2577, %v2382
  %v2728 = vmul.f32 %v2580, %v2382
  %v2729 = vmul.f32 %v2583, %v2382
  %v2730 = vmul.f32 %v2586, %v2382
  %v2731 = vmul.f32 %v2589, %v2382
  %v2732 = vmul.f32 %v2592, %v2382
  %v2733 = vmul.f32 %v2595, %v2382
  %v2734 = vmul.f32 %v2598, %v2382
  %v2735 = vmul.f32 %v2601, %v2382
  %v2736 = vmul.f32 %v2604, %v2382
  %v2737 = vmul.f32 %v2607, %v2382
  %v2738 = vmul.f32 %v2610, %v2382
  %v2739 = vmul.f32 %v2613, %v2382
  %v2740 = vmul.f32 %v2616, %v2382
  %v2741 = vmul.f32 %v2619, %v2382
  %v2742 = vmul.f32 %v2622, %v2382
  %v2743 = vmul.f32 %v2625, %v2382
  %v2744 = vmul.f32 %v2628, %v2382
  %v2745 = vmul.f32 %v2631, %v2382
  %v2746 = vmul.f32 %v2634, %v2382
  %v2747 = vmul.f32 %v2637, %v2382
  %v2748 = vmul.f32 %v2640, %v2382
  %v2749 = vmul.f32 %v2643, %v2382
  %v2750 = vmul.f32 %v2646, %v2382
  %v2751 = vmul.f32 %v2649, %v2382
  %v2752 = vmul.f32 %v2652, %v2382
  %v2753 = vmul.f32 %v2655, %v2382
  %v2754 = vmul.f32 %v2658, %v2382
  %v2755 = vmul.f32 %v2661, %v2382
  %v2756 = vmul.f32 %v2664, %v2382
  %v2757 = vmul.f32 %v2667, %v2382
  %v2758 = vmul.f32 %v2670, %v2382
  %v2759 = vmul.f32 %v2673, %v2382
  %v2760 = vmul.f32 %v2676, %v2382
  %v2761 = vmul.f32 %v2679, %v2382
  %v2762 = vmul.f32 %v2682, %v2382
  %v2763 = vmul.f32 %v2685, %v2382
  %v2764 = vmul.f32 %v2688, %v2382
  %v2765 = vmul.f32 %v2691, %v2382
  %v2766 = vmul.f32 %v2694, %v2382
  %v2767 = vmul.f32 %v2697, %v2382
  %v2768 = vmul.f32 %v2700, %v2382
  %v2769 = vmul.f32 %v2703, %v2382
  %v2770 = vmul.f32 %v2706, %v2382
  %v2771 = vmul.f32 %v2709, %v2382
  %v2772 = vmul.f32 %v2712, %v2382
  %v2773 = vmul.f32 %v2715, %v2382
  %v2774 = vmul.f32 %v2718, %v2382
  %v2775 = vadd.f32 %v2719, 1e-05
  %v2776 = vadd.f32 %v2720, 1e-05
  %v2777 = vadd.f32 %v2721, 1e-05
  %v2778 = vadd.f32 %v2722, 1e-05
  %v2779 = vadd.f32 %v2723, 1e-05
  %v2780 = vadd.f32 %v2724, 1e-05
  %v2781 = vadd.f32 %v2725, 1e-05
  %v2782 = vadd.f32 %v2726, 1e-05
  %v2783 = vadd.f32 %v2727, 1e-05
  %v2784 = vadd.f32 %v2728, 1e-05
  %v2785 = vadd.f32 %v2729, 1e-05
  %v2786 = vadd.f32 %v2730, 1e-05
  %v2787 = vadd.f32 %v2731, 1e-05
  %v2788 = vadd.f32 %v2732, 1e-05
  %v2789 = vadd.f32 %v2733, 1e-05
  %v2790 = vadd.f32 %v2734, 1e-05
  %v2791 = vadd.f32 %v2735, 1e-05
  %v2792 = vadd.f32 %v2736, 1e-05
  %v2793 = vadd.f32 %v2737, 1e-05
  %v2794 = vadd.f32 %v2738, 1e-05
  %v2795 = vadd.f32 %v2739, 1e-05
  %v2796 = vadd.f32 %v2740, 1e-05
  %v2797 = vadd.f32 %v2741, 1e-05
  %v2798 = vadd.f32 %v2742, 1e-05
  %v2799 = vadd.f32 %v2743, 1e-05
  %v2800 = vadd.f32 %v2744, 1e-05
  %v2801 = vadd.f32 %v2745, 1e-05
  %v2802 = vadd.f32 %v2746, 1e-05
  %v2803 = vadd.f32 %v2747, 1e-05
  %v2804 = vadd.f32 %v2748, 1e-05
  %v2805 = vadd.f32 %v2749, 1e-05
  %v2806 = vadd.f32 %v2750, 1e-05
  %v2807 = vadd.f32 %v2751, 1e-05
  %v2808 = vadd.f32 %v2752, 1e-05
  %v2809 = vadd.f32 %v2753, 1e-05
  %v2810 = vadd.f32 %v2754, 1e-05
  %v2811 = vadd.f32 %v2755, 1e-05
  %v2812 = vadd.f32 %v2756, 1e-05
  %v2813 = vadd.f32 %v2757, 1e-05
  %v2814 = vadd.f32 %v2758, 1e-05
  %v2815 = vadd.f32 %v2759, 1e-05
  %v2816 = vadd.f32 %v2760, 1e-05
  %v2817 = vadd.f32 %v2761, 1e-05
  %v2818 = vadd.f32 %v2762, 1e-05
  %v2819 = vadd.f32 %v2763, 1e-05
  %v2820 = vadd.f32 %v2764, 1e-05
  %v2821 = vadd.f32 %v2765, 1e-05
  %v2822 = vadd.f32 %v2766, 1e-05
  %v2823 = vadd.f32 %v2767, 1e-05
  %v2824 = vadd.f32 %v2768, 1e-05
  %v2825 = vadd.f32 %v2769, 1e-05
  %v2826 = vadd.f32 %v2770, 1e-05
  %v2827 = vadd.f32 %v2771, 1e-05
  %v2828 = vadd.f32 %v2772, 1e-05
  %v2829 = vadd.f32 %v2773, 1e-05
  %v2830 = vadd.f32 %v2774, 1e-05
  %v2831 = vrsqrt.pop %v2775
  %v2832 = vmul.f32 %v2831, %v2775
  %v2833 = vmul.f32 %v2832, %v2831
  %v2834 = vmul.f32 0.5, %v2833
  %v2835 = vsub.f32 1.5, %v2834
  %v2836 = vmul.f32 %v2831, %v2835
  %vm2837 = vweird.f32 %v2775
  %vm2838 = vweird.f32 %v2831
  %vm2839 = vmor %vm2837, %vm2838
  %v2840 = vsel %vm2839, %v2831, %v2836
  %v2841 = vrsqrt.pop %v2776
  %v2842 = vmul.f32 %v2841, %v2776
  %v2843 = vmul.f32 %v2842, %v2841
  %v2844 = vmul.f32 0.5, %v2843
  %v2845 = vsub.f32 1.5, %v2844
  %v2846 = vmul.f32 %v2841, %v2845
  %vm2847 = vweird.f32 %v2776
  %vm2848 = vweird.f32 %v2841
  %vm2849 = vmor %vm2847, %vm2848
  %v2850 = vsel %vm2849, %v2841, %v2846
  %v2851 = vrsqrt.pop %v2777
  %v2852 = vmul.f32 %v2851, %v2777
  %v2853 = vmul.f32 %v2852, %v2851
  %v2854 = vmul.f32 0.5, %v2853
  %v2855 = vsub.f32 1.5, %v2854
  %v2856 = vmul.f32 %v2851, %v2855
  %vm2857 = vweird.f32 %v2777
  %vm2858 = vweird.f32 %v2851
  %vm2859 = vmor %vm2857, %vm2858
  %v2860 = vsel %vm2859, %v2851, %v2856
  %v2861 = vrsqrt.pop %v2778
  %v2862 = vmul.f32 %v2861, %v2778
  %v2863 = vmul.f32 %v2862, %v2861
  %v2864 = vmul.f32 0.5, %v2863
  %v2865 = vsub.f32 1.5, %v2864
  %v2866 = vmul.f32 %v2861, %v2865
  %vm2867 = vweird.f32 %v2778
  %vm2868 = vweird.f32 %v2861
  %vm2869 = vmor %vm2867, %vm2868
  %v2870 = vsel %vm2869, %v2861, %v2866
  %v2871 = vrsqrt.pop %v2779
  %v2872 = vmul.f32 %v2871, %v2779
  %v2873 = vmul.f32 %v2872, %v2871
  %v2874 = vmul.f32 0.5, %v2873
  %v2875 = vsub.f32 1.5, %v2874
  %v2876 = vmul.f32 %v2871, %v2875
  %vm2877 = vweird.f32 %v2779
  %vm2878 = vweird.f32 %v2871
  %vm2879 = vmor %vm2877, %vm2878
  %v2880 = vsel %vm2879, %v2871, %v2876
  %v2881 = vrsqrt.pop %v2780
  %v2882 = vmul.f32 %v2881, %v2780
  %v2883 = vmul.f32 %v2882, %v2881
  %v2884 = vmul.f32 0.5, %v2883
  %v2885 = vsub.f32 1.5, %v2884
  %v2886 = vmul.f32 %v2881, %v2885
  %vm2887 = vweird.f32 %v2780
  %vm2888 = vweird.f32 %v2881
  %vm2889 = vmor %vm2887, %vm2888
  %v2890 = vsel %vm2889, %v2881, %v2886
  %v2891 = vrsqrt.pop %v2781
  %v2892 = vmul.f32 %v2891, %v2781
  %v2893 = vmul.f32 %v2892, %v2891
  %v2894 = vmul.f32 0.5, %v2893
  %v2895 = vsub.f32 1.5, %v2894
  %v2896 = vmul.f32 %v2891, %v2895
  %vm2897 = vweird.f32 %v2781
  %vm2898 = vweird.f32 %v2891
  %vm2899 = vmor %vm2897, %vm2898
  %v2900 = vsel %vm2899, %v2891, %v2896
  %v2901 = vrsqrt.pop %v2782
  %v2902 = vmul.f32 %v2901, %v2782
  %v2903 = vmul.f32 %v2902, %v2901
  %v2904 = vmul.f32 0.5, %v2903
  %v2905 = vsub.f32 1.5, %v2904
  %v2906 = vmul.f32 %v2901, %v2905
  %vm2907 = vweird.f32 %v2782
  %vm2908 = vweird.f32 %v2901
  %vm2909 = vmor %vm2907, %vm2908
  %v2910 = vsel %vm2909, %v2901, %v2906
  %v2911 = vrsqrt.pop %v2783
  %v2912 = vmul.f32 %v2911, %v2783
  %v2913 = vmul.f32 %v2912, %v2911
  %v2914 = vmul.f32 0.5, %v2913
  %v2915 = vsub.f32 1.5, %v2914
  %v2916 = vmul.f32 %v2911, %v2915
  %vm2917 = vweird.f32 %v2783
  %vm2918 = vweird.f32 %v2911
  %vm2919 = vmor %vm2917, %vm2918
  %v2920 = vsel %vm2919, %v2911, %v2916
  %v2921 = vrsqrt.pop %v2784
  %v2922 = vmul.f32 %v2921, %v2784
  %v2923 = vmul.f32 %v2922, %v2921
  %v2924 = vmul.f32 0.5, %v2923
  %v2925 = vsub.f32 1.5, %v2924
  %v2926 = vmul.f32 %v2921, %v2925
  %vm2927 = vweird.f32 %v2784
  %vm2928 = vweird.f32 %v2921
  %vm2929 = vmor %vm2927, %vm2928
  %v2930 = vsel %vm2929, %v2921, %v2926
  %v2931 = vrsqrt.pop %v2785
  %v2932 = vmul.f32 %v2931, %v2785
  %v2933 = vmul.f32 %v2932, %v2931
  %v2934 = vmul.f32 0.5, %v2933
  %v2935 = vsub.f32 1.5, %v2934
  %v2936 = vmul.f32 %v2931, %v2935
  %vm2937 = vweird.f32 %v2785
  %vm2938 = vweird.f32 %v2931
  %vm2939 = vmor %vm2937, %vm2938
  %v2940 = vsel %vm2939, %v2931, %v2936
  %v2941 = vrsqrt.pop %v2786
  %v2942 = vmul.f32 %v2941, %v2786
  %v2943 = vmul.f32 %v2942, %v2941
  %v2944 = vmul.f32 0.5, %v2943
  %v2945 = vsub.f32 1.5, %v2944
  %v2946 = vmul.f32 %v2941, %v2945
  %vm2947 = vweird.f32 %v2786
  %vm2948 = vweird.f32 %v2941
  %vm2949 = vmor %vm2947, %vm2948
  %v2950 = vsel %vm2949, %v2941, %v2946
  %v2951 = vrsqrt.pop %v2787
  %v2952 = vmul.f32 %v2951, %v2787
  %v2953 = vmul.f32 %v2952, %v2951
  %v2954 = vmul.f32 0.5, %v2953
  %v2955 = vsub.f32 1.5, %v2954
  %v2956 = vmul.f32 %v2951, %v2955
  %vm2957 = vweird.f32 %v2787
  %vm2958 = vweird.f32 %v2951
  %vm2959 = vmor %vm2957, %vm2958
  %v2960 = vsel %vm2959, %v2951, %v2956
  %v2961 = vrsqrt.pop %v2788
  %v2962 = vmul.f32 %v2961, %v2788
  %v2963 = vmul.f32 %v2962, %v2961
  %v2964 = vmul.f32 0.5, %v2963
  %v2965 = vsub.f32 1.5, %v2964
  %v2966 = vmul.f32 %v2961, %v2965
  %vm2967 = vweird.f32 %v2788
  %vm2968 = vweird.f32 %v2961
  %vm2969 = vmor %vm2967, %vm2968
  %v2970 = vsel %vm2969, %v2961, %v2966
  %v2971 = vrsqrt.pop %v2789
  %v2972 = vmul.f32 %v2971, %v2789
  %v2973 = vmul.f32 %v2972, %v2971
  %v2974 = vmul.f32 0.5, %v2973
  %v2975 = vsub.f32 1.5, %v2974
  %v2976 = vmul.f32 %v2971, %v2975
  %vm2977 = vweird.f32 %v2789
  %vm2978 = vweird.f32 %v2971
  %vm2979 = vmor %vm2977, %vm2978
  %v2980 = vsel %vm2979, %v2971, %v2976
  %v2981 = vrsqrt.pop %v2790
  %v2982 = vmul.f32 %v2981, %v2790
  %v2983 = vmul.f32 %v2982, %v2981
  %v2984 = vmul.f32 0.5, %v2983
  %v2985 = vsub.f32 1.5, %v2984
  %v2986 = vmul.f32 %v2981, %v2985
  %vm2987 = vweird.f32 %v2790
  %vm2988 = vweird.f32 %v2981
  %vm2989 = vmor %vm2987, %vm2988
  %v2990 = vsel %vm2989, %v2981, %v2986
  %v2991 = vrsqrt.pop %v2791
  %v2992 = vmul.f32 %v2991, %v2791
  %v2993 = vmul.f32 %v2992, %v2991
  %v2994 = vmul.f32 0.5, %v2993
  %v2995 = vsub.f32 1.5, %v2994
  %v2996 = vmul.f32 %v2991, %v2995
  %vm2997 = vweird.f32 %v2791
  %vm2998 = vweird.f32 %v2991
  %vm2999 = vmor %vm2997, %vm2998
  %v3000 = vsel %vm2999, %v2991, %v2996
  %v3001 = vrsqrt.pop %v2792
  %v3002 = vmul.f32 %v3001, %v2792
  %v3003 = vmul.f32 %v3002, %v3001
  %v3004 = vmul.f32 0.5, %v3003
  %v3005 = vsub.f32 1.5, %v3004
  %v3006 = vmul.f32 %v3001, %v3005
  %vm3007 = vweird.f32 %v2792
  %vm3008 = vweird.f32 %v3001
  %vm3009 = vmor %vm3007, %vm3008
  %v3010 = vsel %vm3009, %v3001, %v3006
  %v3011 = vrsqrt.pop %v2793
  %v3012 = vmul.f32 %v3011, %v2793
  %v3013 = vmul.f32 %v3012, %v3011
  %v3014 = vmul.f32 0.5, %v3013
  %v3015 = vsub.f32 1.5, %v3014
  %v3016 = vmul.f32 %v3011, %v3015
  %vm3017 = vweird.f32 %v2793
  %vm3018 = vweird.f32 %v3011
  %vm3019 = vmor %vm3017, %vm3018
  %v3020 = vsel %vm3019, %v3011, %v3016
  %v3021 = vrsqrt.pop %v2794
  %v3022 = vmul.f32 %v3021, %v2794
  %v3023 = vmul.f32 %v3022, %v3021
  %v3024 = vmul.f32 0.5, %v3023
  %v3025 = vsub.f32 1.5, %v3024
  %v3026 = vmul.f32 %v3021, %v3025
  %vm3027 = vweird.f32 %v2794
  %vm3028 = vweird.f32 %v3021
  %vm3029 = vmor %vm3027, %vm3028
  %v3030 = vsel %vm3029, %v3021, %v3026
  %v3031 = vrsqrt.pop %v2795
  %v3032 = vmul.f32 %v3031, %v2795
  %v3033 = vmul.f32 %v3032, %v3031
  %v3034 = vmul.f32 0.5, %v3033
  %v3035 = vsub.f32 1.5, %v3034
  %v3036 = vmul.f32 %v3031, %v3035
  %vm3037 = vweird.f32 %v2795
  %vm3038 = vweird.f32 %v3031
  %vm3039 = vmor %vm3037, %vm3038
  %v3040 = vsel %vm3039, %v3031, %v3036
  %v3041 = vrsqrt.pop %v2796
  %v3042 = vmul.f32 %v3041, %v2796
  %v3043 = vmul.f32 %v3042, %v3041
  %v3044 = vmul.f32 0.5, %v3043
  %v3045 = vsub.f32 1.5, %v3044
  %v3046 = vmul.f32 %v3041, %v3045
  %vm3047 = vweird.f32 %v2796
  %vm3048 = vweird.f32 %v3041
  %vm3049 = vmor %vm3047, %vm3048
  %v3050 = vsel %vm3049, %v3041, %v3046
  %v3051 = vrsqrt.pop %v2797
  %v3052 = vmul.f32 %v3051, %v2797
  %v3053 = vmul.f32 %v3052, %v3051
  %v3054 = vmul.f32 0.5, %v3053
  %v3055 = vsub.f32 1.5, %v3054
  %v3056 = vmul.f32 %v3051, %v3055
  %vm3057 = vweird.f32 %v2797
  %vm3058 = vweird.f32 %v3051
  %vm3059 = vmor %vm3057, %vm3058
  %v3060 = vsel %vm3059, %v3051, %v3056
  %v3061 = vrsqrt.pop %v2798
  %v3062 = vmul.f32 %v3061, %v2798
  %v3063 = vmul.f32 %v3062, %v3061
  %v3064 = vmul.f32 0.5, %v3063
  %v3065 = vsub.f32 1.5, %v3064
  %v3066 = vmul.f32 %v3061, %v3065
  %vm3067 = vweird.f32 %v2798
  %vm3068 = vweird.f32 %v3061
  %vm3069 = vmor %vm3067, %vm3068
  %v3070 = vsel %vm3069, %v3061, %v3066
  %v3071 = vrsqrt.pop %v2799
  %v3072 = vmul.f32 %v3071, %v2799
  %v3073 = vmul.f32 %v3072, %v3071
  %v3074 = vmul.f32 0.5, %v3073
  %v3075 = vsub.f32 1.5, %v3074
  %v3076 = vmul.f32 %v3071, %v3075
  %vm3077 = vweird.f32 %v2799
  %vm3078 = vweird.f32 %v3071
  %vm3079 = vmor %vm3077, %vm3078
  %v3080 = vsel %vm3079, %v3071, %v3076
  %v3081 = vrsqrt.pop %v2800
  %v3082 = vmul.f32 %v3081, %v2800
  %v3083 = vmul.f32 %v3082, %v3081
  %v3084 = vmul.f32 0.5, %v3083
  %v3085 = vsub.f32 1.5, %v3084
  %v3086 = vmul.f32 %v3081, %v3085
  %vm3087 = vweird.f32 %v2800
  %vm3088 = vweird.f32 %v3081
  %vm3089 = vmor %vm3087, %vm3088
  %v3090 = vsel %vm3089, %v3081, %v3086
  %v3091 = vrsqrt.pop %v2801
  %v3092 = vmul.f32 %v3091, %v2801
  %v3093 = vmul.f32 %v3092, %v3091
  %v3094 = vmul.f32 0.5, %v3093
  %v3095 = vsub.f32 1.5, %v3094
  %v3096 = vmul.f32 %v3091, %v3095
  %vm3097 = vweird.f32 %v2801
  %vm3098 = vweird.f32 %v3091
  %vm3099 = vmor %vm3097, %vm3098
  %v3100 = vsel %vm3099, %v3091, %v3096
  %v3101 = vrsqrt.pop %v2802
  %v3102 = vmul.f32 %v3101, %v2802
  %v3103 = vmul.f32 %v3102, %v3101
  %v3104 = vmul.f32 0.5, %v3103
  %v3105 = vsub.f32 1.5, %v3104
  %v3106 = vmul.f32 %v3101, %v3105
  %vm3107 = vweird.f32 %v2802
  %vm3108 = vweird.f32 %v3101
  %vm3109 = vmor %vm3107, %vm3108
  %v3110 = vsel %vm3109, %v3101, %v3106
  %v3111 = vrsqrt.pop %v2803
  %v3112 = vmul.f32 %v3111, %v2803
  %v3113 = vmul.f32 %v3112, %v3111
  %v3114 = vmul.f32 0.5, %v3113
  %v3115 = vsub.f32 1.5, %v3114
  %v3116 = vmul.f32 %v3111, %v3115
  %vm3117 = vweird.f32 %v2803
  %vm3118 = vweird.f32 %v3111
  %vm3119 = vmor %vm3117, %vm3118
  %v3120 = vsel %vm3119, %v3111, %v3116
  %v3121 = vrsqrt.pop %v2804
  %v3122 = vmul.f32 %v3121, %v2804
  %v3123 = vmul.f32 %v3122, %v3121
  %v3124 = vmul.f32 0.5, %v3123
  %v3125 = vsub.f32 1.5, %v3124
  %v3126 = vmul.f32 %v3121, %v3125
  %vm3127 = vweird.f32 %v2804
  %vm3128 = vweird.f32 %v3121
  %vm3129 = vmor %vm3127, %vm3128
  %v3130 = vsel %vm3129, %v3121, %v3126
  %v3131 = vrsqrt.pop %v2805
  %v3132 = vmul.f32 %v3131, %v2805
  %v3133 = vmul.f32 %v3132, %v3131
  %v3134 = vmul.f32 0.5, %v3133
  %v3135 = vsub.f32 1.5, %v3134
  %v3136 = vmul.f32 %v3131, %v3135
  %vm3137 = vweird.f32 %v2805
  %vm3138 = vweird.f32 %v3131
  %vm3139 = vmor %vm3137, %vm3138
  %v3140 = vsel %vm3139, %v3131, %v3136
  %v3141 = vrsqrt.pop %v2806
  %v3142 = vmul.f32 %v3141, %v2806
  %v3143 = vmul.f32 %v3142, %v3141
  %v3144 = vmul.f32 0.5, %v3143
  %v3145 = vsub.f32 1.5, %v3144
  %v3146 = vmul.f32 %v3141, %v3145
  %vm3147 = vweird.f32 %v2806
  %vm3148 = vweird.f32 %v3141
  %vm3149 = vmor %vm3147, %vm3148
  %v3150 = vsel %vm3149, %v3141, %v3146
  %v3151 = vrsqrt.pop %v2807
  %v3152 = vmul.f32 %v3151, %v2807
  %v3153 = vmul.f32 %v3152, %v3151
  %v3154 = vmul.f32 0.5, %v3153
  %v3155 = vsub.f32 1.5, %v3154
  %v3156 = vmul.f32 %v3151, %v3155
  %vm3157 = vweird.f32 %v2807
  %vm3158 = vweird.f32 %v3151
  %vm3159 = vmor %vm3157, %vm3158
  %v3160 = vsel %vm3159, %v3151, %v3156
  %v3161 = vrsqrt.pop %v2808
  %v3162 = vmul.f32 %v3161, %v2808
  %v3163 = vmul.f32 %v3162, %v3161
  %v3164 = vmul.f32 0.5, %v3163
  %v3165 = vsub.f32 1.5, %v3164
  %v3166 = vmul.f32 %v3161, %v3165
  %vm3167 = vweird.f32 %v2808
  %vm3168 = vweird.f32 %v3161
  %vm3169 = vmor %vm3167, %vm3168
  %v3170 = vsel %vm3169, %v3161, %v3166
  %v3171 = vrsqrt.pop %v2809
  %v3172 = vmul.f32 %v3171, %v2809
  %v3173 = vmul.f32 %v3172, %v3171
  %v3174 = vmul.f32 0.5, %v3173
  %v3175 = vsub.f32 1.5, %v3174
  %v3176 = vmul.f32 %v3171, %v3175
  %vm3177 = vweird.f32 %v2809
  %vm3178 = vweird.f32 %v3171
  %vm3179 = vmor %vm3177, %vm3178
  %v3180 = vsel %vm3179, %v3171, %v3176
  %v3181 = vrsqrt.pop %v2810
  %v3182 = vmul.f32 %v3181, %v2810
  %v3183 = vmul.f32 %v3182, %v3181
  %v3184 = vmul.f32 0.5, %v3183
  %v3185 = vsub.f32 1.5, %v3184
  %v3186 = vmul.f32 %v3181, %v3185
  %vm3187 = vweird.f32 %v2810
  %vm3188 = vweird.f32 %v3181
  %vm3189 = vmor %vm3187, %vm3188
  %v3190 = vsel %vm3189, %v3181, %v3186
  %v3191 = vrsqrt.pop %v2811
  %v3192 = vmul.f32 %v3191, %v2811
  %v3193 = vmul.f32 %v3192, %v3191
  %v3194 = vmul.f32 0.5, %v3193
  %v3195 = vsub.f32 1.5, %v3194
  %v3196 = vmul.f32 %v3191, %v3195
  %vm3197 = vweird.f32 %v2811
  %vm3198 = vweird.f32 %v3191
  %vm3199 = vmor %vm3197, %vm3198
  %v3200 = vsel %vm3199, %v3191, %v3196
  %v3201 = vrsqrt.pop %v2812
  %v3202 = vmul.f32 %v3201, %v2812
  %v3203 = vmul.f32 %v3202, %v3201
  %v3204 = vmul.f32 0.5, %v3203
  %v3205 = vsub.f32 1.5, %v3204
  %v3206 = vmul.f32 %v3201, %v3205
  %vm3207 = vweird.f32 %v2812
  %vm3208 = vweird.f32 %v3201
  %vm3209 = vmor %vm3207, %vm3208
  %v3210 = vsel %vm3209, %v3201, %v3206
  %v3211 = vrsqrt.pop %v2813
  %v3212 = vmul.f32 %v3211, %v2813
  %v3213 = vmul.f32 %v3212, %v3211
  %v3214 = vmul.f32 0.5, %v3213
  %v3215 = vsub.f32 1.5, %v3214
  %v3216 = vmul.f32 %v3211, %v3215
  %vm3217 = vweird.f32 %v2813
  %vm3218 = vweird.f32 %v3211
  %vm3219 = vmor %vm3217, %vm3218
  %v3220 = vsel %vm3219, %v3211, %v3216
  %v3221 = vrsqrt.pop %v2814
  %v3222 = vmul.f32 %v3221, %v2814
  %v3223 = vmul.f32 %v3222, %v3221
  %v3224 = vmul.f32 0.5, %v3223
  %v3225 = vsub.f32 1.5, %v3224
  %v3226 = vmul.f32 %v3221, %v3225
  %vm3227 = vweird.f32 %v2814
  %vm3228 = vweird.f32 %v3221
  %vm3229 = vmor %vm3227, %vm3228
  %v3230 = vsel %vm3229, %v3221, %v3226
  %v3231 = vrsqrt.pop %v2815
  %v3232 = vmul.f32 %v3231, %v2815
  %v3233 = vmul.f32 %v3232, %v3231
  %v3234 = vmul.f32 0.5, %v3233
  %v3235 = vsub.f32 1.5, %v3234
  %v3236 = vmul.f32 %v3231, %v3235
  %vm3237 = vweird.f32 %v2815
  %vm3238 = vweird.f32 %v3231
  %vm3239 = vmor %vm3237, %vm3238
  %v3240 = vsel %vm3239, %v3231, %v3236
  %v3241 = vrsqrt.pop %v2816
  %v3242 = vmul.f32 %v3241, %v2816
  %v3243 = vmul.f32 %v3242, %v3241
  %v3244 = vmul.f32 0.5, %v3243
  %v3245 = vsub.f32 1.5, %v3244
  %v3246 = vmul.f32 %v3241, %v3245
  %vm3247 = vweird.f32 %v2816
  %vm3248 = vweird.f32 %v3241
  %vm3249 = vmor %vm3247, %vm3248
  %v3250 = vsel %vm3249, %v3241, %v3246
  %v3251 = vrsqrt.pop %v2817
  %v3252 = vmul.f32 %v3251, %v2817
  %v3253 = vmul.f32 %v3252, %v3251
  %v3254 = vmul.f32 0.5, %v3253
  %v3255 = vsub.f32 1.5, %v3254
  %v3256 = vmul.f32 %v3251, %v3255
  %vm3257 = vweird.f32 %v2817
  %vm3258 = vweird.f32 %v3251
  %vm3259 = vmor %vm3257, %vm3258
  %v3260 = vsel %vm3259, %v3251, %v3256
  %v3261 = vrsqrt.pop %v2818
  %v3262 = vmul.f32 %v3261, %v2818
  %v3263 = vmul.f32 %v3262, %v3261
  %v3264 = vmul.f32 0.5, %v3263
  %v3265 = vsub.f32 1.5, %v3264
  %v3266 = vmul.f32 %v3261, %v3265
  %vm3267 = vweird.f32 %v2818
  %vm3268 = vweird.f32 %v3261
  %vm3269 = vmor %vm3267, %vm3268
  %v3270 = vsel %vm3269, %v3261, %v3266
  %v3271 = vrsqrt.pop %v2819
  %v3272 = vmul.f32 %v3271, %v2819
  %v3273 = vmul.f32 %v3272, %v3271
  %v3274 = vmul.f32 0.5, %v3273
  %v3275 = vsub.f32 1.5, %v3274
  %v3276 = vmul.f32 %v3271, %v3275
  %vm3277 = vweird.f32 %v2819
  %vm3278 = vweird.f32 %v3271
  %vm3279 = vmor %vm3277, %vm3278
  %v3280 = vsel %vm3279, %v3271, %v3276
  %v3281 = vrsqrt.pop %v2820
  %v3282 = vmul.f32 %v3281, %v2820
  %v3283 = vmul.f32 %v3282, %v3281
  %v3284 = vmul.f32 0.5, %v3283
  %v3285 = vsub.f32 1.5, %v3284
  %v3286 = vmul.f32 %v3281, %v3285
  %vm3287 = vweird.f32 %v2820
  %vm3288 = vweird.f32 %v3281
  %vm3289 = vmor %vm3287, %vm3288
  %v3290 = vsel %vm3289, %v3281, %v3286
  %v3291 = vrsqrt.pop %v2821
  %v3292 = vmul.f32 %v3291, %v2821
  %v3293 = vmul.f32 %v3292, %v3291
  %v3294 = vmul.f32 0.5, %v3293
  %v3295 = vsub.f32 1.5, %v3294
  %v3296 = vmul.f32 %v3291, %v3295
  %vm3297 = vweird.f32 %v2821
  %vm3298 = vweird.f32 %v3291
  %vm3299 = vmor %vm3297, %vm3298
  %v3300 = vsel %vm3299, %v3291, %v3296
  %v3301 = vrsqrt.pop %v2822
  %v3302 = vmul.f32 %v3301, %v2822
  %v3303 = vmul.f32 %v3302, %v3301
  %v3304 = vmul.f32 0.5, %v3303
  %v3305 = vsub.f32 1.5, %v3304
  %v3306 = vmul.f32 %v3301, %v3305
  %vm3307 = vweird.f32 %v2822
  %vm3308 = vweird.f32 %v3301
  %vm3309 = vmor %vm3307, %vm3308
  %v3310 = vsel %vm3309, %v3301, %v3306
  %v3311 = vrsqrt.pop %v2823
  %v3312 = vmul.f32 %v3311, %v2823
  %v3313 = vmul.f32 %v3312, %v3311
  %v3314 = vmul.f32 0.5, %v3313
  %v3315 = vsub.f32 1.5, %v3314
  %v3316 = vmul.f32 %v3311, %v3315
  %vm3317 = vweird.f32 %v2823
  %vm3318 = vweird.f32 %v3311
  %vm3319 = vmor %vm3317, %vm3318
  %v3320 = vsel %vm3319, %v3311, %v3316
  %v3321 = vrsqrt.pop %v2824
  %v3322 = vmul.f32 %v3321, %v2824
  %v3323 = vmul.f32 %v3322, %v3321
  %v3324 = vmul.f32 0.5, %v3323
  %v3325 = vsub.f32 1.5, %v3324
  %v3326 = vmul.f32 %v3321, %v3325
  %vm3327 = vweird.f32 %v2824
  %vm3328 = vweird.f32 %v3321
  %vm3329 = vmor %vm3327, %vm3328
  %v3330 = vsel %vm3329, %v3321, %v3326
  %v3331 = vrsqrt.pop %v2825
  %v3332 = vmul.f32 %v3331, %v2825
  %v3333 = vmul.f32 %v3332, %v3331
  %v3334 = vmul.f32 0.5, %v3333
  %v3335 = vsub.f32 1.5, %v3334
  %v3336 = vmul.f32 %v3331, %v3335
  %vm3337 = vweird.f32 %v2825
  %vm3338 = vweird.f32 %v3331
  %vm3339 = vmor %vm3337, %vm3338
  %v3340 = vsel %vm3339, %v3331, %v3336
  %v3341 = vrsqrt.pop %v2826
  %v3342 = vmul.f32 %v3341, %v2826
  %v3343 = vmul.f32 %v3342, %v3341
  %v3344 = vmul.f32 0.5, %v3343
  %v3345 = vsub.f32 1.5, %v3344
  %v3346 = vmul.f32 %v3341, %v3345
  %vm3347 = vweird.f32 %v2826
  %vm3348 = vweird.f32 %v3341
  %vm3349 = vmor %vm3347, %vm3348
  %v3350 = vsel %vm3349, %v3341, %v3346
  %v3351 = vrsqrt.pop %v2827
  %v3352 = vmul.f32 %v3351, %v2827
  %v3353 = vmul.f32 %v3352, %v3351
  %v3354 = vmul.f32 0.5, %v3353
  %v3355 = vsub.f32 1.5, %v3354
  %v3356 = vmul.f32 %v3351, %v3355
  %vm3357 = vweird.f32 %v2827
  %vm3358 = vweird.f32 %v3351
  %vm3359 = vmor %vm3357, %vm3358
  %v3360 = vsel %vm3359, %v3351, %v3356
  %v3361 = vrsqrt.pop %v2828
  %v3362 = vmul.f32 %v3361, %v2828
  %v3363 = vmul.f32 %v3362, %v3361
  %v3364 = vmul.f32 0.5, %v3363
  %v3365 = vsub.f32 1.5, %v3364
  %v3366 = vmul.f32 %v3361, %v3365
  %vm3367 = vweird.f32 %v2828
  %vm3368 = vweird.f32 %v3361
  %vm3369 = vmor %vm3367, %vm3368
  %v3370 = vsel %vm3369, %v3361, %v3366
  %v3371 = vrsqrt.pop %v2829
  %v3372 = vmul.f32 %v3371, %v2829
  %v3373 = vmul.f32 %v3372, %v3371
  %v3374 = vmul.f32 0.5, %v3373
  %v3375 = vsub.f32 1.5, %v3374
  %v3376 = vmul.f32 %v3371, %v3375
  %vm3377 = vweird.f32 %v2829
  %vm3378 = vweird.f32 %v3371
  %vm3379 = vmor %vm3377, %vm3378
  %v3380 = vsel %vm3379, %v3371, %v3376
  %v3381 = vrsqrt.pop %v2830
  %v3382 = vmul.f32 %v3381, %v2830
  %v3383 = vmul.f32 %v3382, %v3381
  %v3384 = vmul.f32 0.5, %v3383
  %v3385 = vsub.f32 1.5, %v3384
  %v3386 = vmul.f32 %v3381, %v3385
  %vm3387 = vweird.f32 %v2830
  %vm3388 = vweird.f32 %v3381
  %vm3389 = vmor %vm3387, %vm3388
  %v3390 = vsel %vm3389, %v3381, %v3386
  %v3391 = vmul.f32 %v2439, %v2840
  %v3392 = vmul.f32 %v2440, %v2850
  %v3393 = vmul.f32 %v2441, %v2860
  %v3394 = vmul.f32 %v2442, %v2870
  %v3395 = vmul.f32 %v2443, %v2880
  %v3396 = vmul.f32 %v2444, %v2890
  %v3397 = vmul.f32 %v2445, %v2900
  %v3398 = vmul.f32 %v2446, %v2910
  %v3399 = vmul.f32 %v2447, %v2920
  %v3400 = vmul.f32 %v2448, %v2930
  %v3401 = vmul.f32 %v2449, %v2940
  %v3402 = vmul.f32 %v2450, %v2950
  %v3403 = vmul.f32 %v2451, %v2960
  %v3404 = vmul.f32 %v2452, %v2970
  %v3405 = vmul.f32 %v2453, %v2980
  %v3406 = vmul.f32 %v2454, %v2990
  %v3407 = vmul.f32 %v2455, %v3000
  %v3408 = vmul.f32 %v2456, %v3010
  %v3409 = vmul.f32 %v2457, %v3020
  %v3410 = vmul.f32 %v2458, %v3030
  %v3411 = vmul.f32 %v2459, %v3040
  %v3412 = vmul.f32 %v2460, %v3050
  %v3413 = vmul.f32 %v2461, %v3060
  %v3414 = vmul.f32 %v2462, %v3070
  %v3415 = vmul.f32 %v2463, %v3080
  %v3416 = vmul.f32 %v2464, %v3090
  %v3417 = vmul.f32 %v2465, %v3100
  %v3418 = vmul.f32 %v2466, %v3110
  %v3419 = vmul.f32 %v2467, %v3120
  %v3420 = vmul.f32 %v2468, %v3130
  %v3421 = vmul.f32 %v2469, %v3140
  %v3422 = vmul.f32 %v2470, %v3150
  %v3423 = vmul.f32 %v2471, %v3160
  %v3424 = vmul.f32 %v2472, %v3170
  %v3425 = vmul.f32 %v2473, %v3180
  %v3426 = vmul.f32 %v2474, %v3190
  %v3427 = vmul.f32 %v2475, %v3200
  %v3428 = vmul.f32 %v2476, %v3210
  %v3429 = vmul.f32 %v2477, %v3220
  %v3430 = vmul.f32 %v2478, %v3230
  %v3431 = vmul.f32 %v2479, %v3240
  %v3432 = vmul.f32 %v2480, %v3250
  %v3433 = vmul.f32 %v2481, %v3260
  %v3434 = vmul.f32 %v2482, %v3270
  %v3435 = vmul.f32 %v2483, %v3280
  %v3436 = vmul.f32 %v2484, %v3290
  %v3437 = vmul.f32 %v2485, %v3300
  %v3438 = vmul.f32 %v2486, %v3310
  %v3439 = vmul.f32 %v2487, %v3320
  %v3440 = vmul.f32 %v2488, %v3330
  %v3441 = vmul.f32 %v2489, %v3340
  %v3442 = vmul.f32 %v2490, %v3350
  %v3443 = vmul.f32 %v2491, %v3360
  %v3444 = vmul.f32 %v2492, %v3370
  %v3445 = vmul.f32 %v2493, %v3380
  %v3446 = vmul.f32 %v2494, %v3390
  %v3447 = vperm.slane %v26, 3
  %v3448 = vmul.f32 %v3391, %v3447
  %v3449 = vmul.f32 %v3392, %v3447
  %v3450 = vmul.f32 %v3393, %v3447
  %v3451 = vmul.f32 %v3394, %v3447
  %v3452 = vmul.f32 %v3395, %v3447
  %v3453 = vmul.f32 %v3396, %v3447
  %v3454 = vmul.f32 %v3397, %v3447
  %v3455 = vmul.f32 %v3398, %v3447
  %v3456 = vmul.f32 %v3399, %v3447
  %v3457 = vmul.f32 %v3400, %v3447
  %v3458 = vmul.f32 %v3401, %v3447
  %v3459 = vmul.f32 %v3402, %v3447
  %v3460 = vmul.f32 %v3403, %v3447
  %v3461 = vmul.f32 %v3404, %v3447
  %v3462 = vmul.f32 %v3405, %v3447
  %v3463 = vmul.f32 %v3406, %v3447
  %v3464 = vmul.f32 %v3407, %v3447
  %v3465 = vmul.f32 %v3408, %v3447
  %v3466 = vmul.f32 %v3409, %v3447
  %v3467 = vmul.f32 %v3410, %v3447
  %v3468 = vmul.f32 %v3411, %v3447
  %v3469 = vmul.f32 %v3412, %v3447
  %v3470 = vmul.f32 %v3413, %v3447
  %v3471 = vmul.f32 %v3414, %v3447
  %v3472 = vmul.f32 %v3415, %v3447
  %v3473 = vmul.f32 %v3416, %v3447
  %v3474 = vmul.f32 %v3417, %v3447
  %v3475 = vmul.f32 %v3418, %v3447
  %v3476 = vmul.f32 %v3419, %v3447
  %v3477 = vmul.f32 %v3420, %v3447
  %v3478 = vmul.f32 %v3421, %v3447
  %v3479 = vmul.f32 %v3422, %v3447
  %v3480 = vmul.f32 %v3423, %v3447
  %v3481 = vmul.f32 %v3424, %v3447
  %v3482 = vmul.f32 %v3425, %v3447
  %v3483 = vmul.f32 %v3426, %v3447
  %v3484 = vmul.f32 %v3427, %v3447
  %v3485 = vmul.f32 %v3428, %v3447
  %v3486 = vmul.f32 %v3429, %v3447
  %v3487 = vmul.f32 %v3430, %v3447
  %v3488 = vmul.f32 %v3431, %v3447
  %v3489 = vmul.f32 %v3432, %v3447
  %v3490 = vmul.f32 %v3433, %v3447
  %v3491 = vmul.f32 %v3434, %v3447
  %v3492 = vmul.f32 %v3435, %v3447
  %v3493 = vmul.f32 %v3436, %v3447
  %v3494 = vmul.f32 %v3437, %v3447
  %v3495 = vmul.f32 %v3438, %v3447
  %v3496 = vmul.f32 %v3439, %v3447
  %v3497 = vmul.f32 %v3440, %v3447
  %v3498 = vmul.f32 %v3441, %v3447
  %v3499 = vmul.f32 %v3442, %v3447
  %v3500 = vmul.f32 %v3443, %v3447
  %v3501 = vmul.f32 %v3444, %v3447
  %v3502 = vmul.f32 %v3445, %v3447
  %v3503 = vmul.f32 %v3446, %v3447
  %v3504 = vperm.slane %v26, 4
  %v3505 = vadd.f32 %v3448, %v3504
  %v3506 = vadd.f32 %v3449, %v3504
  %v3507 = vadd.f32 %v3450, %v3504
  %v3508 = vadd.f32 %v3451, %v3504
  %v3509 = vadd.f32 %v3452, %v3504
  %v3510 = vadd.f32 %v3453, %v3504
  %v3511 = vadd.f32 %v3454, %v3504
  %v3512 = vadd.f32 %v3455, %v3504
  %v3513 = vadd.f32 %v3456, %v3504
  %v3514 = vadd.f32 %v3457, %v3504
  %v3515 = vadd.f32 %v3458, %v3504
  %v3516 = vadd.f32 %v3459, %v3504
  %v3517 = vadd.f32 %v3460, %v3504
  %v3518 = vadd.f32 %v3461, %v3504
  %v3519 = vadd.f32 %v3462, %v3504
  %v3520 = vadd.f32 %v3463, %v3504
  %v3521 = vadd.f32 %v3464, %v3504
  %v3522 = vadd.f32 %v3465, %v3504
  %v3523 = vadd.f32 %v3466, %v3504
  %v3524 = vadd.f32 %v3467, %v3504
  %v3525 = vadd.f32 %v3468, %v3504
  %v3526 = vadd.f32 %v3469, %v3504
  %v3527 = vadd.f32 %v3470, %v3504
  %v3528 = vadd.f32 %v3471, %v3504
  %v3529 = vadd.f32 %v3472, %v3504
  %v3530 = vadd.f32 %v3473, %v3504
  %v3531 = vadd.f32 %v3474, %v3504
  %v3532 = vadd.f32 %v3475, %v3504
  %v3533 = vadd.f32 %v3476, %v3504
  %v3534 = vadd.f32 %v3477, %v3504
  %v3535 = vadd.f32 %v3478, %v3504
  %v3536 = vadd.f32 %v3479, %v3504
  %v3537 = vadd.f32 %v3480, %v3504
  %v3538 = vadd.f32 %v3481, %v3504
  %v3539 = vadd.f32 %v3482, %v3504
  %v3540 = vadd.f32 %v3483, %v3504
  %v3541 = vadd.f32 %v3484, %v3504
  %v3542 = vadd.f32 %v3485, %v3504
  %v3543 = vadd.f32 %v3486, %v3504
  %v3544 = vadd.f32 %v3487, %v3504
  %v3545 = vadd.f32 %v3488, %v3504
  %v3546 = vadd.f32 %v3489, %v3504
  %v3547 = vadd.f32 %v3490, %v3504
  %v3548 = vadd.f32 %v3491, %v3504
  %v3549 = vadd.f32 %v3492, %v3504
  %v3550 = vadd.f32 %v3493, %v3504
  %v3551 = vadd.f32 %v3494, %v3504
  %v3552 = vadd.f32 %v3495, %v3504
  %v3553 = vadd.f32 %v3496, %v3504
  %v3554 = vadd.f32 %v3497, %v3504
  %v3555 = vadd.f32 %v3498, %v3504
  %v3556 = vadd.f32 %v3499, %v3504
  %v3557 = vadd.f32 %v3500, %v3504
  %v3558 = vadd.f32 %v3501, %v3504
  %v3559 = vadd.f32 %v3502, %v3504
  %v3560 = vadd.f32 %v3503, %v3504
  %3561 = vst.msk [vmem:[%s7] sm:$0xff] %vm147, %v3505
  %3562 = vst.msk [vmem:[%s7 + $0x8] sm:$0xff] %vm147, %v3506
  %3563 = vst.msk [vmem:[%s7 + $0x10] sm:$0xff] %vm147, %v3507
  %3564 = vst.msk [vmem:[%s7 + $0x18] sm:$0xff] %vm147, %v3508
  %3565 = vst.msk [vmem:[%s7 + $0x20] sm:$0xff] %vm147, %v3509
  %3566 = vst.msk [vmem:[%s7 + $0x28] sm:$0xff] %vm147, %v3510
  %3567 = vst.msk [vmem:[%s7 + $0x30] sm:$0xff] %vm147, %v3511
  %3568 = vst.msk [vmem:[%s7 + $0x38] sm:$0xff] %vm147, %v3512
  %3569 = vst.msk [vmem:[%s7 + $0x40] sm:$0xff] %vm147, %v3513
  %3570 = vst.msk [vmem:[%s7 + $0x48] sm:$0xff] %vm147, %v3514
  %3571 = vst.msk [vmem:[%s7 + $0x50] sm:$0xff] %vm147, %v3515
  %3572 = vst.msk [vmem:[%s7 + $0x58] sm:$0xff] %vm147, %v3516
  %3573 = vst.msk [vmem:[%s7 + $0x60] sm:$0xff] %vm147, %v3517
  %3574 = vst.msk [vmem:[%s7 + $0x68] sm:$0xff] %vm147, %v3518
  %3575 = vst.msk [vmem:[%s7 + $0x70] sm:$0xff] %vm147, %v3519
  %3576 = vst.msk [vmem:[%s7 + $0x78] sm:$0xff] %vm147, %v3520
  %3577 = vst.msk [vmem:[%s7 + $0x80] sm:$0xff] %vm147, %v3521
  %3578 = vst.msk [vmem:[%s7 + $0x88] sm:$0xff] %vm147, %v3522
  %3579 = vst.msk [vmem:[%s7 + $0x90] sm:$0xff] %vm147, %v3523
  %3580 = vst.msk [vmem:[%s7 + $0x98] sm:$0xff] %vm147, %v3524
  %3581 = vst.msk [vmem:[%s7 + $0xa0] sm:$0xff] %vm147, %v3525
  %3582 = vst.msk [vmem:[%s7 + $0xa8] sm:$0xff] %vm147, %v3526
  %3583 = vst.msk [vmem:[%s7 + $0xb0] sm:$0xff] %vm147, %v3527
  %3584 = vst.msk [vmem:[%s7 + $0xb8] sm:$0xff] %vm147, %v3528
  %3585 = vst.msk [vmem:[%s7 + $0xc0] sm:$0xff] %vm147, %v3529
  %3586 = vst.msk [vmem:[%s7 + $0xc8] sm:$0xff] %vm147, %v3530
  %3587 = vst.msk [vmem:[%s7 + $0xd0] sm:$0xff] %vm147, %v3531
  %3588 = vst.msk [vmem:[%s7 + $0xd8] sm:$0xff] %vm147, %v3532
  %3589 = vst.msk [vmem:[%s7 + $0xe0] sm:$0xff] %vm147, %v3533
  %3590 = vst.msk [vmem:[%s7 + $0xe8] sm:$0xff] %vm147, %v3534
  %3591 = vst.msk [vmem:[%s7 + $0xf0] sm:$0xff] %vm147, %v3535
  %3592 = vst.msk [vmem:[%s7 + $0xf8] sm:$0xff] %vm147, %v3536
  %3593 = vst.msk [vmem:[%s7 + $0x100] sm:$0xff] %vm147, %v3537
  %3594 = vst.msk [vmem:[%s7 + $0x108] sm:$0xff] %vm147, %v3538
  %3595 = vst.msk [vmem:[%s7 + $0x110] sm:$0xff] %vm147, %v3539
  %3596 = vst.msk [vmem:[%s7 + $0x118] sm:$0xff] %vm147, %v3540
  %3597 = vst.msk [vmem:[%s7 + $0x120] sm:$0xff] %vm147, %v3541
  %3598 = vst.msk [vmem:[%s7 + $0x128] sm:$0xff] %vm147, %v3542
  %3599 = vst.msk [vmem:[%s7 + $0x130] sm:$0xff] %vm147, %v3543
  %3600 = vst.msk [vmem:[%s7 + $0x138] sm:$0xff] %vm147, %v3544
  %3601 = vst.msk [vmem:[%s7 + $0x140] sm:$0xff] %vm147, %v3545
  %3602 = vst.msk [vmem:[%s7 + $0x148] sm:$0xff] %vm147, %v3546
  %3603 = vst.msk [vmem:[%s7 + $0x150] sm:$0xff] %vm147, %v3547
  %3604 = vst.msk [vmem:[%s7 + $0x158] sm:$0xff] %vm147, %v3548
  %3605 = vst.msk [vmem:[%s7 + $0x160] sm:$0xff] %vm147, %v3549
  %3606 = vst.msk [vmem:[%s7 + $0x168] sm:$0xff] %vm147, %v3550
  %3607 = vst.msk [vmem:[%s7 + $0x170] sm:$0xff] %vm147, %v3551
  %3608 = vst.msk [vmem:[%s7 + $0x178] sm:$0xff] %vm147, %v3552
  %3609 = vst.msk [vmem:[%s7 + $0x180] sm:$0xff] %vm147, %v3553
  %3610 = vst.msk [vmem:[%s7 + $0x188] sm:$0xff] %vm147, %v3554
  %3611 = vst.msk [vmem:[%s7 + $0x190] sm:$0xff] %vm147, %v3555
  %3612 = vst.msk [vmem:[%s7 + $0x198] sm:$0xff] %vm147, %v3556
  %3613 = vst.msk [vmem:[%s7 + $0x1a0] sm:$0xff] %vm147, %v3557
  %3614 = vst.msk [vmem:[%s7 + $0x1a8] sm:$0xff] %vm147, %v3558
  %3615 = vst.msk [vmem:[%s7 + $0x1b0] sm:$0xff] %vm147, %v3559
  %3616 = vst.msk [vmem:[%s7 + $0x1b8] sm:$0xff] %vm147, %v3560
  // Predicated region
  $region30: #{_forward_impl.4} parent=0 // pred_check
    _
  $region31: #{_forward_impl.4} parent=0 // pred_check_branch
    %3618 = sbr.rel (0) target = $region33
  $region32: #{_forward_impl.4} parent=0 // pred_region
    _
  $region33: #{_forward_impl.4} parent=0 // pred_fallthru
    _
  // Predicated region
  $region34: #{_forward_impl.4} parent=0 // pred_check
    _
  $region35: #{_forward_impl.4} parent=0 // pred_check_branch
    %3620 = sbr.rel (0) target = $region37
  $region36: #{_forward_impl.4} parent=0 // pred_region
    _
  $region37: #{_forward_impl.4} parent=0 // pred_fallthru
    _

</llo_original>
